<compile_context>
chip_gen: v5e
topology: v5e:2x2
jax: 0.10.0
libtpu: 0.0.40
codegen_flags: <defaults>
</compile_context>

<pallas_src>
import jax
import jax.numpy as jnp
from jax.experimental import pallas as pl
from jax.experimental.pallas import tpu as pltpu  # noqa: F401  (not needed at these sizes)


def _round_up(x, m):
    return ((x + m - 1) // m) * m


# ---------------------------------------------------------------------------
# Pallas kernels
# ---------------------------------------------------------------------------
def _matmul_bias_relu_kernel(x_ref, w_ref, b_ref, o_ref):
    # x: (Mp, Kp) f32, w: (Kp, Np) bf16, b: (1, Np) f32
    y = jnp.dot(x_ref[...].astype(jnp.bfloat16), w_ref[...],
                preferred_element_type=jnp.float32)
    o_ref[...] = jnp.maximum(y + b_ref[...], 0.0)


def _make_head_kernel(fold_conv3):
    """Fused kernel: [conv3] + action_reward_mlp + final_processing_mlp."""

    def _dot(a, w_ref):
        return jnp.dot(a.astype(jnp.bfloat16), w_ref[...],
                       preferred_element_type=jnp.float32)

    def _relu(y):
        return jnp.maximum(y, 0.0)

    if fold_conv3:
        def kernel(ximg_ref, xar_ref,
                   w3_ref, b3_ref,
                   m1_ref, bm1_ref, m2_ref, bm2_ref,
                   f1i_ref, f1a_ref, bf1_ref,
                   f2_ref, bf2_ref, f3_ref, bf3_ref, o_ref):
            # conv3 (1x1 output spatial) == linear on flattened conv2 output
            img = _relu(_dot(ximg_ref[...], w3_ref) + b3_ref[...])
            ar = _relu(_dot(xar_ref[...], m1_ref) + bm1_ref[...])
            ar = _relu(_dot(ar, m2_ref) + bm2_ref[...])
            # concat([img, ar]) @ F1 == img @ F1_img + ar @ F1_ar
            h = _relu(_dot(img, f1i_ref) + _dot(ar, f1a_ref) + bf1_ref[...])
            h = _relu(_dot(h, f2_ref) + bf2_ref[...])
            o_ref[...] = _dot(h, f3_ref) + bf3_ref[...]
    else:
        def kernel(ximg_ref, xar_ref,
                   m1_ref, bm1_ref, m2_ref, bm2_ref,
                   f1i_ref, f1a_ref, bf1_ref,
                   f2_ref, bf2_ref, f3_ref, bf3_ref, o_ref):
            img = ximg_ref[...]
            ar = _relu(_dot(xar_ref[...], m1_ref) + bm1_ref[...])
            ar = _relu(_dot(ar, m2_ref) + bm2_ref[...])
            h = _relu(_dot(img, f1i_ref) + _dot(ar, f1a_ref) + bf1_ref[...])
            h = _relu(_dot(h, f2_ref) + bf2_ref[...])
            o_ref[...] = _dot(h, f3_ref) + bf3_ref[...]
    return kernel


def _single_block_call(kernel, args, out_shape):
    # Every operand here fits comfortably in VMEM -> one full-array block.
    in_specs = [pl.BlockSpec(a.shape, lambda i: (0, 0)) for a in args]
    out_specs = pl.BlockSpec(out_shape.shape, lambda i: (0, 0))
    return pl.pallas_call(
        kernel,
        out_shape=out_shape,
        grid=(1,),
        in_specs=in_specs,
        out_specs=out_specs,
    )(*args)


# ---------------------------------------------------------------------------
# Padding helpers (weights padded ONCE in prepare_params; activations per step)
# ---------------------------------------------------------------------------
def _pad_w(w, dtype=jnp.bfloat16):
    K, N = w.shape
    Kp = _round_up(max(K, 128), 128)
    Np = _round_up(max(N, 128), 128)
    return jnp.zeros((Kp, Np), dtype).at[:K, :N].set(w.astype(dtype))


def _pad_b(b):
    N = b.shape[0]
    Np = _round_up(max(N, 128), 128)
    return jnp.zeros((1, Np), jnp.float32).at[0, :N].set(b.astype(jnp.float32))


def _pad_act(x, Mp, Kp):
    M, K = x.shape
    x = x.astype(jnp.float32)
    if (M, K) == (Mp, Kp):
        return x
    return jnp.zeros((Mp, Kp), jnp.float32).at[:M, :K].set(x)


# ---------------------------------------------------------------------------
# im2col (patch layout (C, kh, kw) flattened == torch weight.reshape(O, C*k*k))
# ---------------------------------------------------------------------------
def _im2col_k2s(x, k, s):
    # Fast exact path for k == 2*s (both convs of this net): view the image as
    # an (H/s, W/s) grid of (s, s) blocks; each conv window is a 2x2 block
    # neighbourhood -> 4 contiguous slices instead of k*k strided ones.
    N, C, H, W = x.shape
    P, Q = H // s, W // s
    Ho, Wo = P - 1, Q - 1
    xb = x.reshape(N, C, P, s, Q, s).transpose(0, 2, 4, 1, 3, 5)   # (N,P,Q,C,s,s)
    rows = []
    for a in (0, 1):
        cols = [xb[:, a:a + Ho, b:b + Wo] for b in (0, 1)]          # (N,Ho,Wo,C,s,s)
        rows.append(jnp.stack(cols, axis=5))                        # (N,Ho,Wo,C,s,2,s)
    p = jnp.stack(rows, axis=4)                                     # (N,Ho,Wo,C,2,s,2,s)
    # flatten order (C, a, m, b, n) == (C, ki=a*s+m, kj=b*s+n)
    return p.reshape(N * Ho * Wo, C * k * k), Ho, Wo


def _im2col_generic(x, k, s):
    N, C, H, W = x.shape
    Ho = (H - k) // s + 1
    Wo = (W - k) // s + 1
    cols = []
    for ki in range(k):
        for kj in range(k):
            cols.append(x[:, :, ki:ki + s * Ho:s, kj:kj + s * Wo:s])
    p = jnp.stack(cols, axis=2).reshape(N, C * k * k, Ho, Wo)
    p = p.transpose(0, 2, 3, 1).reshape(N * Ho * Wo, C * k * k)
    return p, Ho, Wo


def _conv_relu(x_nchw, w_pad, b_pad, cout, k, s):
    N, C, H, W = x_nchw.shape
    if k == 2 * s and H % s == 0 and W % s == 0:
        patches, Ho, Wo = _im2col_k2s(x_nchw, k, s)
    else:
        patches, Ho, Wo = _im2col_generic(x_nchw, k, s)
    M = patches.shape[0]
    Mp = _round_up(max(M, 8), 8)
    xp = _pad_act(patches, Mp, w_pad.shape[0])
    out = _single_block_call(
        _matmul_bias_relu_kernel, (xp, w_pad, b_pad),
        jax.ShapeDtypeStruct((Mp, w_pad.shape[1]), jnp.float32))
    return out[:M, :cout].reshape(N, Ho, Wo, cout).transpose(0, 3, 1, 2)  # NCHW


# ---------------------------------------------------------------------------
# Deterministic parameter construction (synthetic; not a checkpoint load)
# ---------------------------------------------------------------------------
def init_params(key, c, h, w, action_dim, n_stack, mlp_output_dim):
    cin = n_stack * c
    keys = jax.random.split(key, 16)

    def conv_w(k_, shape):
        fan_in = shape[1] * shape[2] * shape[3]
        return jax.random.normal(k_, shape, jnp.float32) * jnp.sqrt(2.0 / fan_in)

    def lin_w(k_, shape):  # (in, out)
        return jax.random.normal(k_, shape, jnp.float32) * jnp.sqrt(2.0 / shape[0])

    p = {}
    p["c1_w"] = conv_w(keys[0], (32, cin, 8, 8)); p["c1_b"] = jnp.zeros((32,), jnp.float32)
    p["c2_w"] = conv_w(keys[1], (64, 32, 4, 4));  p["c2_b"] = jnp.zeros((64,), jnp.float32)
    p["c3_w"] = conv_w(keys[2], (64, 64, 3, 3));  p["c3_b"] = jnp.zeros((64,), jnp.float32)

    h1, w1 = (h - 8) // 4 + 1, (w - 8) // 4 + 1
    h2, w2 = (h1 - 4) // 2 + 1, (w1 - 4) // 2 + 1
    h3, w3 = h2 - 2, w2 - 2
    cnn_out_dim = 64 * h3 * w3

    mlp_in = n_stack * (action_dim + 1)
    p["m1_w"] = lin_w(keys[3], (mlp_in, 512));         p["m1_b"] = jnp.zeros((512,), jnp.float32)
    p["m2_w"] = lin_w(keys[4], (512, mlp_output_dim)); p["m2_b"] = jnp.zeros((mlp_output_dim,), jnp.float32)

    concat_dim = cnn_out_dim + mlp_output_dim
    p["f1_w"] = lin_w(keys[5], (concat_dim, 512)); p["f1_b"] = jnp.zeros((512,), jnp.float32)
    p["f2_w"] = lin_w(keys[6], (512, 512));        p["f2_b"] = jnp.zeros((512,), jnp.float32)
    p["f3_w"] = lin_w(keys[7], (512, action_dim)); p["f3_b"] = jnp.zeros((action_dim,), jnp.float32)
    return p


def prepare_params(params, *, c, h, w, action_dim, n_stack, mlp_output_dim):
    """One-time: reshape conv weights to matmul layout, pad to (8,128) tiles,
    cast weights to bf16 (biases f32), and split F1 to avoid an in-kernel concat."""
    h1, w1 = (h - 8) // 4 + 1, (w - 8) // 4 + 1
    h2, w2 = (h1 - 4) // 2 + 1, (w1 - 4) // 2 + 1
    h3, w3 = h2 - 2, w2 - 2
    cnn_out_dim = 64 * h3 * w3

    pp = {}
    pp["c1_w"] = _pad_w(params["c1_w"].reshape(32, -1).T); pp["c1_b"] = _pad_b(params["c1_b"])
    pp["c2_w"] = _pad_w(params["c2_w"].reshape(64, -1).T); pp["c2_b"] = _pad_b(params["c2_b"])
    pp["c3_w"] = _pad_w(params["c3_w"].reshape(64, -1).T); pp["c3_b"] = _pad_b(params["c3_b"])
    pp["m1_w"] = _pad_w(params["m1_w"]); pp["m1_b"] = _pad_b(params["m1_b"])
    pp["m2_w"] = _pad_w(params["m2_w"]); pp["m2_b"] = _pad_b(params["m2_b"])
    f1 = params["f1_w"]
    pp["f1i_w"] = _pad_w(f1[:cnn_out_dim])   # rows consumed by image_output
    pp["f1a_w"] = _pad_w(f1[cnn_out_dim:])   # rows consumed by action_reward_output
    pp["f1_b"] = _pad_b(params["f1_b"])
    pp["f2_w"] = _pad_w(params["f2_w"]); pp["f2_b"] = _pad_b(params["f2_b"])
    pp["f3_w"] = _pad_w(params["f3_w"]); pp["f3_b"] = _pad_b(params["f3_b"])
    return pp


# ---------------------------------------------------------------------------
# Forward pass == MultiMod_ArmScan_Net.forward
# ---------------------------------------------------------------------------
def multimod_armscan_forward(pp, channeled_slice, action, reward,
                             *, c, h, w, action_dim, n_stack, mlp_output_dim,
                             state=None):
    cin = n_stack * c
    h1, w1 = (h - 8) // 4 + 1, (w - 8) // 4 + 1
    h2, w2 = (h1 - 4) // 2 + 1, (w1 - 4) // 2 + 1
    h3, w3 = h2 - 2, w2 - 2
    cnn_out_dim = 64 * h3 * w3
    fold_conv3 = (h3 == 1 and w3 == 1)   # conv3 output is 1x1 -> fold into head

    x = jnp.asarray(channeled_slice, jnp.float32).reshape(-1, cin, h, w)
    B = x.shape[0]
    Bp = _round_up(max(B, 8), 8)

    # CNN branch (conv1, conv2 as im2col + fused matmul/bias/ReLU kernels)
    x = _conv_relu(x, pp["c1_w"], pp["c1_b"], 32, k=8, s=4)
    x = _conv_relu(x, pp["c2_w"], pp["c2_b"], 64, k=4, s=2)

    if fold_conv3:
        # NCHW flatten of conv2 output == conv3's (C, kh, kw) patch layout
        ximg_p = _pad_act(x.reshape(B, 64 * h2 * w2), Bp, pp["c3_w"].shape[0])
    else:
        x = _conv_relu(x, pp["c3_w"], pp["c3_b"], 64, k=3, s=1)
        ximg_p = _pad_act(x.reshape(B, cnn_out_dim), Bp, pp["f1i_w"].shape[0])

    # action/reward branch input
    action_reward = jnp.concatenate(
        [jnp.asarray(action, jnp.float32), jnp.asarray(reward, jnp.float32)],
        axis=-1).reshape(-1, n_stack * (action_dim + 1))
    xar_p = _pad_act(action_reward, Bp, pp["m1_w"].shape[0])

    head_kernel = _make_head_kernel(fold_conv3)
    if fold_conv3:
        args = (ximg_p, xar_p, pp["c3_w"], pp["c3_b"],
                pp["m1_w"], pp["m1_b"], pp["m2_w"], pp["m2_b"],
                pp["f1i_w"], pp["f1a_w"], pp["f1_b"],
                pp["f2_w"], pp["f2_b"], pp["f3_w"], pp["f3_b"])
    else:
        args = (ximg_p, xar_p,
                pp["m1_w"], pp["m1_b"], pp["m2_w"], pp["m2_b"],
                pp["f1i_w"], pp["f1a_w"], pp["f1_b"],
                pp["f2_w"], pp["f2_b"], pp["f3_w"], pp["f3_b"])

    out = _single_block_call(
        head_kernel, args,
        jax.ShapeDtypeStruct((Bp, pp["f3_w"].shape[1]), jnp.float32))
    q = out[:B, :action_dim]
    return q, state


if __name__ == "__main__":
    # 36x36 images survive the 8/4 -> 4/2 -> 3/1 conv stack (8x8 -> 3x3 -> 1x1).
    B, c, h, w = 2, 2, 36, 36
    n_stack, action_dim = 2, 4
    mlp_output_dim = 64

    key = jax.random.PRNGKey(0)
    k_params, k_slice, k_act, k_rew = jax.random.split(key, 4)

    raw_params = init_params(k_params, c, h, w, action_dim, n_stack, mlp_output_dim)
    pp = prepare_params(raw_params, c=c, h=h, w=w, action_dim=action_dim,
                        n_stack=n_stack, mlp_output_dim=mlp_output_dim)

    channeled_slice = jax.random.normal(k_slice, (B, n_stack * c, h, w), jnp.float32)
    action = jax.random.normal(k_act, (B, n_stack, action_dim), jnp.float32)
    reward = jax.random.normal(k_rew, (B, n_stack, 1), jnp.float32)

    fwd = jax.jit(
        lambda p, s, a, r: multimod_armscan_forward(
            p, s, a, r, c=c, h=h, w=w, action_dim=action_dim,
            n_stack=n_stack, mlp_output_dim=mlp_output_dim)[0]
    )
    q = fwd(pp, channeled_slice, action, reward)
    q = jax.block_until_ready(q)

    assert q.shape == (B, action_dim), q.shape
    assert bool(jnp.all(jnp.isfinite(q)))
    print("KERNEL_OK")
</pallas_src>

<mosaic_0001>
module attributes {stable_mosaic.version = 11 : i64} {
  func.func @_matmul_bias_relu_kernel(%arg0: i32, %arg1: memref<128x256xf32, #tpu.memory_space<vmem>>, %arg2: memref<256x128xbf16, #tpu.memory_space<vmem>>, %arg3: memref<1x128xf32, #tpu.memory_space<vmem>>, %arg4: memref<128x128xf32, #tpu.memory_space<vmem>>) attributes {dimension_semantics = [#tpu.dimension_semantics<arbitrary>], iteration_bounds = array<i64: 1>, scalar_prefetch = 0 : i64, scratch_operands = 0 : i64, tpu.core_type = #tpu.core_type<tc>, window_params = [{pipeline_mode = #tpu.pipeline_mode<synchronous>, transform_indices = @transform_0, window_bounds = array<i64: 128, 256>}, {pipeline_mode = #tpu.pipeline_mode<synchronous>, transform_indices = @transform_1, window_bounds = array<i64: 256, 128>}, {pipeline_mode = #tpu.pipeline_mode<synchronous>, transform_indices = @transform_2, window_bounds = array<i64: 1, 128>}, {pipeline_mode = #tpu.pipeline_mode<synchronous>, transform_indices = @transform_3, window_bounds = array<i64: 128, 128>}]} {
    %c0 = arith.constant 0 : index
    %c0_0 = arith.constant 0 : index
    %0 = vector.load %arg1[%c0, %c0_0] : memref<128x256xf32, #tpu.memory_space<vmem>>, vector<128x256xf32>
    %1 = arith.truncf %0 : vector<128x256xf32> to vector<128x256xbf16>
    %c0_1 = arith.constant 0 : index
    %c0_2 = arith.constant 0 : index
    %2 = vector.load %arg2[%c0_1, %c0_2] : memref<256x128xbf16, #tpu.memory_space<vmem>>, vector<256x128xbf16>
    %cst = arith.constant dense<0.000000e+00> : vector<128x128xf32>
    %3 = tpu.matmul %1, %2, %cst {dimension_numbers = #tpu.dot_dimension_numbers<[1], [0], [0], [1], [0, 0, 1, 1], [], []>} : vector<128x256xbf16>, vector<256x128xbf16>, vector<128x128xf32> -> vector<128x128xf32>
    %c0_3 = arith.constant 0 : index
    %c0_4 = arith.constant 0 : index
    %4 = vector.load %arg3[%c0_3, %c0_4] : memref<1x128xf32, #tpu.memory_space<vmem>>, vector<1x128xf32>
    %5 = vector.broadcast %4 : vector<1x128xf32> to vector<128x128xf32>
    %6 = arith.addf %3, %5 : vector<128x128xf32>
    %cst_5 = arith.constant 0.000000e+00 : f32
    %7 = vector.broadcast %cst_5 : f32 to vector<128x128xf32>
    %8 = arith.maximumf %6, %7 : vector<128x128xf32>
    %c0_6 = arith.constant 0 : index
    %c0_7 = arith.constant 0 : index
    %9 = vector.load %arg4[%c0_6, %c0_7] : memref<128x128xf32, #tpu.memory_space<vmem>>, vector<128x128xf32>
    tpu.vector_store %arg4[%c0_6, %c0_7], %8 {strides = array<i32>} : memref<128x128xf32, #tpu.memory_space<vmem>>, vector<128x128xf32>,
    return
  }
  func.func @transform_0(%arg0: i32) -> (i32, i32) {
    %c0_i32 = arith.constant 0 : i32
    %c0_i32_0 = arith.constant 0 : i32
    %c0_i32_1 = arith.constant 0 : i32
    return %c0_i32, %c0_i32_0 : i32, i32
  }
  func.func @transform_1(%arg0: i32) -> (i32, i32) {
    %c0_i32 = arith.constant 0 : i32
    %c0_i32_0 = arith.constant 0 : i32
    %c0_i32_1 = arith.constant 0 : i32
    return %c0_i32, %c0_i32_0 : i32, i32
  }
  func.func @transform_2(%arg0: i32) -> (i32, i32) {
    %c0_i32 = arith.constant 0 : i32
    %c0_i32_0 = arith.constant 0 : i32
    %c0_i32_1 = arith.constant 0 : i32
    return %c0_i32, %c0_i32_0 : i32, i32
  }
  func.func @transform_3(%arg0: i32) -> (i32, i32) {
    %c0_i32 = arith.constant 0 : i32
    %c0_i32_0 = arith.constant 0 : i32
    %c0_i32_1 = arith.constant 0 : i32
    return %c0_i32, %c0_i32_0 : i32, i32
  }
}

module attributes {stable_mosaic.version = 11 : i64} {
  func.func @_matmul_bias_relu_kernel(%arg0: i32, %arg1: memref<24x512xf32, #tpu.memory_space<vmem>>, %arg2: memref<512x128xbf16, #tpu.memory_space<vmem>>, %arg3: memref<1x128xf32, #tpu.memory_space<vmem>>, %arg4: memref<24x128xf32, #tpu.memory_space<vmem>>) attributes {dimension_semantics = [#tpu.dimension_semantics<arbitrary>], iteration_bounds = array<i64: 1>, scalar_prefetch = 0 : i64, scratch_operands = 0 : i64, tpu.core_type = #tpu.core_type<tc>, window_params = [{pipeline_mode = #tpu.pipeline_mode<synchronous>, transform_indices = @transform_0, window_bounds = array<i64: 24, 512>}, {pipeline_mode = #tpu.pipeline_mode<synchronous>, transform_indices = @transform_1, window_bounds = array<i64: 512, 128>}, {pipeline_mode = #tpu.pipeline_mode<synchronous>, transform_indices = @transform_2, window_bounds = array<i64: 1, 128>}, {pipeline_mode = #tpu.pipeline_mode<synchronous>, transform_indices = @transform_3, window_bounds = array<i64: 24, 128>}]} {
    %c0 = arith.constant 0 : index
    %c0_0 = arith.constant 0 : index
    %0 = vector.load %arg1[%c0, %c0_0] : memref<24x512xf32, #tpu.memory_space<vmem>>, vector<24x512xf32>
    %1 = arith.truncf %0 : vector<24x512xf32> to vector<24x512xbf16>
    %c0_1 = arith.constant 0 : index
    %c0_2 = arith.constant 0 : index
    %2 = vector.load %arg2[%c0_1, %c0_2] : memref<512x128xbf16, #tpu.memory_space<vmem>>, vector<512x128xbf16>
    %cst = arith.constant dense<0.000000e+00> : vector<24x128xf32>
    %3 = tpu.matmul %1, %2, %cst {dimension_numbers = #tpu.dot_dimension_numbers<[1], [0], [0], [1], [0, 0, 1, 1], [], []>} : vector<24x512xbf16>, vector<512x128xbf16>, vector<24x128xf32> -> vector<24x128xf32>
    %c0_3 = arith.constant 0 : index
    %c0_4 = arith.constant 0 : index
    %4 = vector.load %arg3[%c0_3, %c0_4] : memref<1x128xf32, #tpu.memory_space<vmem>>, vector<1x128xf32>
    %5 = vector.broadcast %4 : vector<1x128xf32> to vector<24x128xf32>
    %6 = arith.addf %3, %5 : vector<24x128xf32>
    %cst_5 = arith.constant 0.000000e+00 : f32
    %7 = vector.broadcast %cst_5 : f32 to vector<24x128xf32>
    %8 = arith.maximumf %6, %7 : vector<24x128xf32>
    %c0_6 = arith.constant 0 : index
    %c0_7 = arith.constant 0 : index
    %9 = vector.load %arg4[%c0_6, %c0_7] : memref<24x128xf32, #tpu.memory_space<vmem>>, vector<24x128xf32>
    tpu.vector_store %arg4[%c0_6, %c0_7], %8 {strides = array<i32>} : memref<24x128xf32, #tpu.memory_space<vmem>>, vector<24x128xf32>,
    return
  }
  func.func @transform_0(%arg0: i32) -> (i32, i32) {
    %c0_i32 = arith.constant 0 : i32
    %c0_i32_0 = arith.constant 0 : i32
    %c0_i32_1 = arith.constant 0 : i32
    return %c0_i32, %c0_i32_0 : i32, i32
  }
  func.func @transform_1(%arg0: i32) -> (i32, i32) {
    %c0_i32 = arith.constant 0 : i32
    %c0_i32_0 = arith.constant 0 : i32
    %c0_i32_1 = arith.constant 0 : i32
    return %c0_i32, %c0_i32_0 : i32, i32
  }
  func.func @transform_2(%arg0: i32) -> (i32, i32) {
    %c0_i32 = arith.constant 0 : i32
    %c0_i32_0 = arith.constant 0 : i32
    %c0_i32_1 = arith.constant 0 : i32
    return %c0_i32, %c0_i32_0 : i32, i32
  }
  func.func @transform_3(%arg0: i32) -> (i32, i32) {
    %c0_i32 = arith.constant 0 : i32
    %c0_i32_0 = arith.constant 0 : i32
    %c0_i32_1 = arith.constant 0 : i32
    return %c0_i32, %c0_i32_0 : i32, i32
  }
}

module attributes {stable_mosaic.version = 11 : i64} {
  func.func @kernel(%arg0: i32, %arg1: memref<8x640xf32, #tpu.memory_space<vmem>>, %arg2: memref<8x128xf32, #tpu.memory_space<vmem>>, %arg3: memref<640x128xbf16, #tpu.memory_space<vmem>>, %arg4: memref<1x128xf32, #tpu.memory_space<vmem>>, %arg5: memref<128x512xbf16, #tpu.memory_space<vmem>>, %arg6: memref<1x512xf32, #tpu.memory_space<vmem>>, %arg7: memref<512x128xbf16, #tpu.memory_space<vmem>>, %arg8: memref<1x128xf32, #tpu.memory_space<vmem>>, %arg9: memref<128x512xbf16, #tpu.memory_space<vmem>>, %arg10: memref<128x512xbf16, #tpu.memory_space<vmem>>, %arg11: memref<1x512xf32, #tpu.memory_space<vmem>>, %arg12: memref<512x512xbf16, #tpu.memory_space<vmem>>, %arg13: memref<1x512xf32, #tpu.memory_space<vmem>>, %arg14: memref<512x128xbf16, #tpu.memory_space<vmem>>, %arg15: memref<1x128xf32, #tpu.memory_space<vmem>>, %arg16: memref<8x128xf32, #tpu.memory_space<vmem>>) attributes {dimension_semantics = [#tpu.dimension_semantics<arbitrary>], iteration_bounds = array<i64: 1>, scalar_prefetch = 0 : i64, scratch_operands = 0 : i64, tpu.core_type = #tpu.core_type<tc>, window_params = [{pipeline_mode = #tpu.pipeline_mode<synchronous>, transform_indices = @transform_0, window_bounds = array<i64: 8, 640>}, {pipeline_mode = #tpu.pipeline_mode<synchronous>, transform_indices = @transform_1, window_bounds = array<i64: 8, 128>}, {pipeline_mode = #tpu.pipeline_mode<synchronous>, transform_indices = @transform_2, window_bounds = array<i64: 640, 128>}, {pipeline_mode = #tpu.pipeline_mode<synchronous>, transform_indices = @transform_3, window_bounds = array<i64: 1, 128>}, {pipeline_mode = #tpu.pipeline_mode<synchronous>, transform_indices = @transform_4, window_bounds = array<i64: 128, 512>}, {pipeline_mode = #tpu.pipeline_mode<synchronous>, transform_indices = @transform_5, window_bounds = array<i64: 1, 512>}, {pipeline_mode = #tpu.pipeline_mode<synchronous>, transform_indices = @transform_6, window_bounds = array<i64: 512, 128>}, {pipeline_mode = #tpu.pipeline_mode<synchronous>, transform_indices = @transform_7, window_bounds = array<i64: 1, 128>}, {pipeline_mode = #tpu.pipeline_mode<synchronous>, transform_indices = @transform_8, window_bounds = array<i64: 128, 512>}, {pipeline_mode = #tpu.pipeline_mode<synchronous>, transform_indices = @transform_9, window_bounds = array<i64: 128, 512>}, {pipeline_mode = #tpu.pipeline_mode<synchronous>, transform_indices = @transform_10, window_bounds = array<i64: 1, 512>}, {pipeline_mode = #tpu.pipeline_mode<synchronous>, transform_indices = @transform_11, window_bounds = array<i64: 512, 512>}, {pipeline_mode = #tpu.pipeline_mode<synchronous>, transform_indices = @transform_12, window_bounds = array<i64: 1, 512>}, {pipeline_mode = #tpu.pipeline_mode<synchronous>, transform_indices = @transform_13, window_bounds = array<i64: 512, 128>}, {pipeline_mode = #tpu.pipeline_mode<synchronous>, transform_indices = @transform_14, window_bounds = array<i64: 1, 128>}, {pipeline_mode = #tpu.pipeline_mode<synchronous>, transform_indices = @transform_15, window_bounds = array<i64: 8, 128>}]} {
    %c0 = arith.constant 0 : index
    %c0_0 = arith.constant 0 : index
    %0 = vector.load %arg1[%c0, %c0_0] : memref<8x640xf32, #tpu.memory_space<vmem>>, vector<8x640xf32>
    %1 = arith.truncf %0 : vector<8x640xf32> to vector<8x640xbf16>
    %c0_1 = arith.constant 0 : index
    %c0_2 = arith.constant 0 : index
    %2 = vector.load %arg3[%c0_1, %c0_2] : memref<640x128xbf16, #tpu.memory_space<vmem>>, vector<640x128xbf16>
    %cst = arith.constant dense<0.000000e+00> : vector<8x128xf32>
    %3 = tpu.matmul %1, %2, %cst {dimension_numbers = #tpu.dot_dimension_numbers<[1], [0], [0], [1], [0, 0, 1, 1], [], []>} : vector<8x640xbf16>, vector<640x128xbf16>, vector<8x128xf32> -> vector<8x128xf32>
    %c0_3 = arith.constant 0 : index
    %c0_4 = arith.constant 0 : index
    %4 = vector.load %arg4[%c0_3, %c0_4] : memref<1x128xf32, #tpu.memory_space<vmem>>, vector<1x128xf32>
    %5 = vector.broadcast %4 : vector<1x128xf32> to vector<8x128xf32>
    %6 = arith.addf %3, %5 : vector<8x128xf32>
    %cst_5 = arith.constant 0.000000e+00 : f32
    %7 = vector.broadcast %cst_5 : f32 to vector<8x128xf32>
    %8 = arith.maximumf %6, %7 : vector<8x128xf32>
    %c0_6 = arith.constant 0 : index
    %c0_7 = arith.constant 0 : index
    %9 = vector.load %arg2[%c0_6, %c0_7] : memref<8x128xf32, #tpu.memory_space<vmem>>, vector<8x128xf32>
    %10 = arith.truncf %9 : vector<8x128xf32> to vector<8x128xbf16>
    %c0_8 = arith.constant 0 : index
    %c0_9 = arith.constant 0 : index
    %11 = vector.load %arg5[%c0_8, %c0_9] : memref<128x512xbf16, #tpu.memory_space<vmem>>, vector<128x512xbf16>
    %cst_10 = arith.constant dense<0.000000e+00> : vector<8x512xf32>
    %12 = tpu.matmul %10, %11, %cst_10 {dimension_numbers = #tpu.dot_dimension_numbers<[1], [0], [0], [1], [0, 0, 1, 1], [], []>} : vector<8x128xbf16>, vector<128x512xbf16>, vector<8x512xf32> -> vector<8x512xf32>
    %c0_11 = arith.constant 0 : index
    %c0_12 = arith.constant 0 : index
    %13 = vector.load %arg6[%c0_11, %c0_12] : memref<1x512xf32, #tpu.memory_space<vmem>>, vector<1x512xf32>
    %14 = vector.broadcast %13 : vector<1x512xf32> to vector<8x512xf32>
    %15 = arith.addf %12, %14 : vector<8x512xf32>
    %cst_13 = arith.constant 0.000000e+00 : f32
    %16 = vector.broadcast %cst_13 : f32 to vector<8x512xf32>
    %17 = arith.maximumf %15, %16 : vector<8x512xf32>
    %18 = arith.truncf %17 : vector<8x512xf32> to vector<8x512xbf16>
    %c0_14 = arith.constant 0 : index
    %c0_15 = arith.constant 0 : index
    %19 = vector.load %arg7[%c0_14, %c0_15] : memref<512x128xbf16, #tpu.memory_space<vmem>>, vector<512x128xbf16>
    %cst_16 = arith.constant dense<0.000000e+00> : vector<8x128xf32>
    %20 = tpu.matmul %18, %19, %cst_16 {dimension_numbers = #tpu.dot_dimension_numbers<[1], [0], [0], [1], [0, 0, 1, 1], [], []>} : vector<8x512xbf16>, vector<512x128xbf16>, vector<8x128xf32> -> vector<8x128xf32>
    %c0_17 = arith.constant 0 : index
    %c0_18 = arith.constant 0 : index
    %21 = vector.load %arg8[%c0_17, %c0_18] : memref<1x128xf32, #tpu.memory_space<vmem>>, vector<1x128xf32>
    %22 = vector.broadcast %21 : vector<1x128xf32> to vector<8x128xf32>
    %23 = arith.addf %20, %22 : vector<8x128xf32>
    %cst_19 = arith.constant 0.000000e+00 : f32
    %24 = vector.broadcast %cst_19 : f32 to vector<8x128xf32>
    %25 = arith.maximumf %23, %24 : vector<8x128xf32>
    %26 = arith.truncf %8 : vector<8x128xf32> to vector<8x128xbf16>
    %c0_20 = arith.constant 0 : index
    %c0_21 = arith.constant 0 : index
    %27 = vector.load %arg9[%c0_20, %c0_21] : memref<128x512xbf16, #tpu.memory_space<vmem>>, vector<128x512xbf16>
    %cst_22 = arith.constant dense<0.000000e+00> : vector<8x512xf32>
    %28 = tpu.matmul %26, %27, %cst_22 {dimension_numbers = #tpu.dot_dimension_numbers<[1], [0], [0], [1], [0, 0, 1, 1], [], []>} : vector<8x128xbf16>, vector<128x512xbf16>, vector<8x512xf32> -> vector<8x512xf32>
    %29 = arith.truncf %25 : vector<8x128xf32> to vector<8x128xbf16>
    %c0_23 = arith.constant 0 : index
    %c0_24 = arith.constant 0 : index
    %30 = vector.load %arg10[%c0_23, %c0_24] : memref<128x512xbf16, #tpu.memory_space<vmem>>, vector<128x512xbf16>
    %cst_25 = arith.constant dense<0.000000e+00> : vector<8x512xf32>
    %31 = tpu.matmul %29, %30, %cst_25 {dimension_numbers = #tpu.dot_dimension_numbers<[1], [0], [0], [1], [0, 0, 1, 1], [], []>} : vector<8x128xbf16>, vector<128x512xbf16>, vector<8x512xf32> -> vector<8x512xf32>
    %32 = arith.addf %28, %31 : vector<8x512xf32>
    %c0_26 = arith.constant 0 : index
    %c0_27 = arith.constant 0 : index
    %33 = vector.load %arg11[%c0_26, %c0_27] : memref<1x512xf32, #tpu.memory_space<vmem>>, vector<1x512xf32>
    %34 = vector.broadcast %33 : vector<1x512xf32> to vector<8x512xf32>
    %35 = arith.addf %32, %34 : vector<8x512xf32>
    %cst_28 = arith.constant 0.000000e+00 : f32
    %36 = vector.broadcast %cst_28 : f32 to vector<8x512xf32>
    %37 = arith.maximumf %35, %36 : vector<8x512xf32>
    %38 = arith.truncf %37 : vector<8x512xf32> to vector<8x512xbf16>
    %c0_29 = arith.constant 0 : index
    %c0_30 = arith.constant 0 : index
    %39 = vector.load %arg12[%c0_29, %c0_30] : memref<512x512xbf16, #tpu.memory_space<vmem>>, vector<512x512xbf16>
    %cst_31 = arith.constant dense<0.000000e+00> : vector<8x512xf32>
    %40 = tpu.matmul %38, %39, %cst_31 {dimension_numbers = #tpu.dot_dimension_numbers<[1], [0], [0], [1], [0, 0, 1, 1], [], []>} : vector<8x512xbf16>, vector<512x512xbf16>, vector<8x512xf32> -> vector<8x512xf32>
    %c0_32 = arith.constant 0 : index
    %c0_33 = arith.constant 0 : index
    %41 = vector.load %arg13[%c0_32, %c0_33] : memref<1x512xf32, #tpu.memory_space<vmem>>, vector<1x512xf32>
    %42 = vector.broadcast %41 : vector<1x512xf32> to vector<8x512xf32>
    %43 = arith.addf %40, %42 : vector<8x512xf32>
    %cst_34 = arith.constant 0.000000e+00 : f32
    %44 = vector.broadcast %cst_34 : f32 to vector<8x512xf32>
    %45 = arith.maximumf %43, %44 : vector<8x512xf32>
    %46 = arith.truncf %45 : vector<8x512xf32> to vector<8x512xbf16>
    %c0_35 = arith.constant 0 : index
    %c0_36 = arith.constant 0 : index
    %47 = vector.load %arg14[%c0_35, %c0_36] : memref<512x128xbf16, #tpu.memory_space<vmem>>, vector<512x128xbf16>
    %cst_37 = arith.constant dense<0.000000e+00> : vector<8x128xf32>
    %48 = tpu.matmul %46, %47, %cst_37 {dimension_numbers = #tpu.dot_dimension_numbers<[1], [0], [0], [1], [0, 0, 1, 1], [], []>} : vector<8x512xbf16>, vector<512x128xbf16>, vector<8x128xf32> -> vector<8x128xf32>
    %c0_38 = arith.constant 0 : index
    %c0_39 = arith.constant 0 : index
    %49 = vector.load %arg15[%c0_38, %c0_39] : memref<1x128xf32, #tpu.memory_space<vmem>>, vector<1x128xf32>
    %50 = vector.broadcast %49 : vector<1x128xf32> to vector<8x128xf32>
    %51 = arith.addf %48, %50 : vector<8x128xf32>
    %c0_40 = arith.constant 0 : index
    %c0_41 = arith.constant 0 : index
    %52 = vector.load %arg16[%c0_40, %c0_41] : memref<8x128xf32, #tpu.memory_space<vmem>>, vector<8x128xf32>
    tpu.vector_store %arg16[%c0_40, %c0_41], %51 {strides = array<i32>} : memref<8x128xf32, #tpu.memory_space<vmem>>, vector<8x128xf32>,
    return
  }
  func.func @transform_0(%arg0: i32) -> (i32, i32) {
    %c0_i32 = arith.constant 0 : i32
    %c0_i32_0 = arith.constant 0 : i32
    %c0_i32_1 = arith.constant 0 : i32
    return %c0_i32, %c0_i32_0 : i32, i32
  }
  func.func @transform_1(%arg0: i32) -> (i32, i32) {
    %c0_i32 = arith.constant 0 : i32
    %c0_i32_0 = arith.constant 0 : i32
    %c0_i32_1 = arith.constant 0 : i32
    return %c0_i32, %c0_i32_0 : i32, i32
  }
  func.func @transform_2(%arg0: i32) -> (i32, i32) {
    %c0_i32 = arith.constant 0 : i32
    %c0_i32_0 = arith.constant 0 : i32
    %c0_i32_1 = arith.constant 0 : i32
    return %c0_i32, %c0_i32_0 : i32, i32
  }
  func.func @transform_3(%arg0: i32) -> (i32, i32) {
    %c0_i32 = arith.constant 0 : i32
    %c0_i32_0 = arith.constant 0 : i32
    %c0_i32_1 = arith.constant 0 : i32
    return %c0_i32, %c0_i32_0 : i32, i32
  }
  func.func @transform_4(%arg0: i32) -> (i32, i32) {
    %c0_i32 = arith.constant 0 : i32
    %c0_i32_0 = arith.constant 0 : i32
    %c0_i32_1 = arith.constant 0 : i32
    return %c0_i32, %c0_i32_0 : i32, i32
  }
  func.func @transform_5(%arg0: i32) -> (i32, i32) {
    %c0_i32 = arith.constant 0 : i32
    %c0_i32_0 = arith.constant 0 : i32
    %c0_i32_1 = arith.constant 0 : i32
    return %c0_i32, %c0_i32_0 : i32, i32
  }
  func.func @transform_6(%arg0: i32) -> (i32, i32) {
    %c0_i32 = arith.constant 0 : i32
    %c0_i32_0 = arith.constant 0 : i32
    %c0_i32_1 = arith.constant 0 : i32
    return %c0_i32, %c0_i32_0 : i32, i32
  }
  func.func @transform_7(%arg0: i32) -> (i32, i32) {
    %c0_i32 = arith.constant 0 : i32
    %c0_i32_0 = arith.constant 0 : i32
    %c0_i32_1 = arith.constant 0 : i32
    return %c0_i32, %c0_i32_0 : i32, i32
  }
  func.func @transform_8(%arg0: i32) -> (i32, i32) {
    %c0_i32 = arith.constant 0 : i32
    %c0_i32_0 = arith.constant 0 : i32
    %c0_i32_1 = arith.constant 0 : i32
    return %c0_i32, %c0_i32_0 : i32, i32
  }
  func.func @transform_9(%arg0: i32) -> (i32, i32) {
    %c0_i32 = arith.constant 0 : i32
    %c0_i32_0 = arith.constant 0 : i32
    %c0_i32_1 = arith.constant 0 : i32
    return %c0_i32, %c0_i32_0 : i32, i32
  }
  func.func @transform_10(%arg0: i32) -> (i32, i32) {
    %c0_i32 = arith.constant 0 : i32
    %c0_i32_0 = arith.constant 0 : i32
    %c0_i32_1 = arith.constant 0 : i32
    return %c0_i32, %c0_i32_0 : i32, i32
  }
  func.func @transform_11(%arg0: i32) -> (i32, i32) {
    %c0_i32 = arith.constant 0 : i32
    %c0_i32_0 = arith.constant 0 : i32
    %c0_i32_1 = arith.constant 0 : i32
    return %c0_i32, %c0_i32_0 : i32, i32
  }
  func.func @transform_12(%arg0: i32) -> (i32, i32) {
    %c0_i32 = arith.constant 0 : i32
    %c0_i32_0 = arith.constant 0 : i32
    %c0_i32_1 = arith.constant 0 : i32
    return %c0_i32, %c0_i32_0 : i32, i32
  }
  func.func @transform_13(%arg0: i32) -> (i32, i32) {
    %c0_i32 = arith.constant 0 : i32
    %c0_i32_0 = arith.constant 0 : i32
    %c0_i32_1 = arith.constant 0 : i32
    return %c0_i32, %c0_i32_0 : i32, i32
  }
  func.func @transform_14(%arg0: i32) -> (i32, i32) {
    %c0_i32 = arith.constant 0 : i32
    %c0_i32_0 = arith.constant 0 : i32
    %c0_i32_1 = arith.constant 0 : i32
    return %c0_i32, %c0_i32_0 : i32, i32
  }
  func.func @transform_15(%arg0: i32) -> (i32, i32) {
    %c0_i32 = arith.constant 0 : i32
    %c0_i32_0 = arith.constant 0 : i32
    %c0_i32_1 = arith.constant 0 : i32
    return %c0_i32, %c0_i32_0 : i32, i32
  }
}

</mosaic_0001>

<llo_original>
// kernel: _lambda_.3
$region0: #{_lambda_.3}
  #allocation0 [shape = 'u32[]', space=smem, size = 0x4, offset = 0x4, fixed_abs, tag = 'smem constant byte address 0x4 - core index']
  #allocation1 [shape = 'u32[72,128]{1,0:T(1,128)}', space=vmem, size = 0x9000, scoped, tag = 'internal scratch']
  %s0 = inlined_call_operand.vmem [shape: f32[128,256], index: 0, kind: input, shape index: {}]
  %s1 = inlined_call_operand.vmem [shape: bf16[256,128], index: 1, kind: input, shape index: {}]
  %s2 = inlined_call_operand.vmem [shape: f32[1,128], index: 2, kind: input, shape index: {}]
  %s3 = inlined_call_operand.vmem [shape: f32[128,128], index: 3, kind: output, shape index: {}]
  %s4 = sld [smem:[#allocation0]]
  $region22: #{_lambda_.3} parent=0
    _
  %s6 = ssub.s32 1, %s4
  %s7 = scalar_select 0, %s6, %s4
  // Predicated region
  $region2: #{_lambda_.3} parent=0 // pred_check
    _
  $region3: #{_lambda_.3} parent=0 // pred_check_branch
    %9 = sbr.rel (0) target = $region5
  $region4: #{_lambda_.3} parent=0 // pred_region
    _
  $region5: #{_lambda_.3} parent=0 // pred_fallthru
    _
  // Predicated region
  $region6: #{_lambda_.3} parent=0 // pred_check
    _
  $region7: #{_lambda_.3} parent=0 // pred_check_branch
    %11 = sbr.rel (0) target = $region9
  $region8: #{_lambda_.3} parent=0 // pred_region
    _
  $region9: #{_lambda_.3} parent=0 // pred_fallthru
    _
  // Predicated region
  $region10: #{_lambda_.3} parent=0 // pred_check
    _
  $region11: #{_lambda_.3} parent=0 // pred_check_branch
    %13 = sbr.rel (0) target = $region13
  $region12: #{_lambda_.3} parent=0 // pred_region
    _
  $region13: #{_lambda_.3} parent=0 // pred_fallthru
    _
  %v14 = vld [vmem:[%s0] sm:$0xff]
  %v15 = vld [vmem:[%s0 + $0x8] sm:$0xff]
  %v16 = vld [vmem:[%s0 + $0x10] sm:$0xff]
  %v17 = vld [vmem:[%s0 + $0x18] sm:$0xff]
  %v18 = vld [vmem:[%s0 + $0x20] sm:$0xff]
  %v19 = vld [vmem:[%s0 + $0x28] sm:$0xff]
  %v20 = vld [vmem:[%s0 + $0x30] sm:$0xff]
  %v21 = vld [vmem:[%s0 + $0x38] sm:$0xff]
  %v22 = vld [vmem:[%s0 + $0x40] sm:$0xff]
  %v23 = vld [vmem:[%s0 + $0x48] sm:$0xff]
  %v24 = vld [vmem:[%s0 + $0x50] sm:$0xff]
  %v25 = vld [vmem:[%s0 + $0x58] sm:$0xff]
  %v26 = vld [vmem:[%s0 + $0x60] sm:$0xff]
  %v27 = vld [vmem:[%s0 + $0x68] sm:$0xff]
  %v28 = vld [vmem:[%s0 + $0x70] sm:$0xff]
  %v29 = vld [vmem:[%s0 + $0x78] sm:$0xff]
  %v30 = vld [vmem:[%s0 + $0x80] sm:$0xff]
  %v31 = vld [vmem:[%s0 + $0x88] sm:$0xff]
  %v32 = vld [vmem:[%s0 + $0x90] sm:$0xff]
  %v33 = vld [vmem:[%s0 + $0x98] sm:$0xff]
  %v34 = vld [vmem:[%s0 + $0xa0] sm:$0xff]
  %v35 = vld [vmem:[%s0 + $0xa8] sm:$0xff]
  %v36 = vld [vmem:[%s0 + $0xb0] sm:$0xff]
  %v37 = vld [vmem:[%s0 + $0xb8] sm:$0xff]
  %v38 = vld [vmem:[%s0 + $0xc0] sm:$0xff]
  %v39 = vld [vmem:[%s0 + $0xc8] sm:$0xff]
  %v40 = vld [vmem:[%s0 + $0xd0] sm:$0xff]
  %v41 = vld [vmem:[%s0 + $0xd8] sm:$0xff]
  %v42 = vld [vmem:[%s0 + $0xe0] sm:$0xff]
  %v43 = vld [vmem:[%s0 + $0xe8] sm:$0xff]
  %v44 = vld [vmem:[%s0 + $0xf0] sm:$0xff]
  %v45 = vld [vmem:[%s0 + $0xf8] sm:$0xff]
  %v46 = vpack.c.bf16 %v16, %v14
  %v47 = vpack.c.bf16 %v17, %v15
  %v48 = vpack.c.bf16 %v20, %v18
  %v49 = vpack.c.bf16 %v21, %v19
  %v50 = vpack.c.bf16 %v24, %v22
  %v51 = vpack.c.bf16 %v25, %v23
  %v52 = vpack.c.bf16 %v28, %v26
  %v53 = vpack.c.bf16 %v29, %v27
  %v54 = vpack.c.bf16 %v32, %v30
  %v55 = vpack.c.bf16 %v33, %v31
  %v56 = vpack.c.bf16 %v36, %v34
  %v57 = vpack.c.bf16 %v37, %v35
  %v58 = vpack.c.bf16 %v40, %v38
  %v59 = vpack.c.bf16 %v41, %v39
  %v60 = vpack.c.bf16 %v44, %v42
  %v61 = vpack.c.bf16 %v45, %v43
  %v62 = vld [vmem:[%s1] sm:$0xf]
  %v63 = vld [vmem:[%s1 + $0x4] sm:$0xf]
  %v64 = vld [vmem:[%s1 + $0x8] sm:$0xf]
  %v65 = vld [vmem:[%s1 + $0xc] sm:$0xf]
  %v66 = vld [vmem:[%s1 + $0x10] sm:$0xf]
  %v67 = vld [vmem:[%s1 + $0x14] sm:$0xf]
  %v68 = vld [vmem:[%s1 + $0x18] sm:$0xf]
  %v69 = vld [vmem:[%s1 + $0x1c] sm:$0xf]
  %v70 = vld [vmem:[%s1 + $0x20] sm:$0xf]
  %v71 = vld [vmem:[%s1 + $0x24] sm:$0xf]
  %v72 = vld [vmem:[%s1 + $0x28] sm:$0xf]
  %v73 = vld [vmem:[%s1 + $0x2c] sm:$0xf]
  %v74 = vld [vmem:[%s1 + $0x30] sm:$0xf]
  %v75 = vld [vmem:[%s1 + $0x34] sm:$0xf]
  %v76 = vld [vmem:[%s1 + $0x38] sm:$0xf]
  %v77 = vld [vmem:[%s1 + $0x3c] sm:$0xf]
  %v78 = vld [vmem:[%s1 + $0x40] sm:$0xf]
  %v79 = vld [vmem:[%s1 + $0x44] sm:$0xf]
  %v80 = vld [vmem:[%s1 + $0x48] sm:$0xf]
  %v81 = vld [vmem:[%s1 + $0x4c] sm:$0xf]
  %v82 = vld [vmem:[%s1 + $0x50] sm:$0xf]
  %v83 = vld [vmem:[%s1 + $0x54] sm:$0xf]
  %v84 = vld [vmem:[%s1 + $0x58] sm:$0xf]
  %v85 = vld [vmem:[%s1 + $0x5c] sm:$0xf]
  %v86 = vld [vmem:[%s1 + $0x60] sm:$0xf]
  %v87 = vld [vmem:[%s1 + $0x64] sm:$0xf]
  %v88 = vld [vmem:[%s1 + $0x68] sm:$0xf]
  %v89 = vld [vmem:[%s1 + $0x6c] sm:$0xf]
  %v90 = vld [vmem:[%s1 + $0x70] sm:$0xf]
  %v91 = vld [vmem:[%s1 + $0x74] sm:$0xf]
  %v92 = vld [vmem:[%s1 + $0x78] sm:$0xf]
  %v93 = vld [vmem:[%s1 + $0x7c] sm:$0xf]
  %v94 = vld [vmem:[%s2] sm:$0x1]
  %v96 = vperm.slane %v94, 0
  %v130 = vunpack.c.l.b16 %v62
  %v131 = vunpack.c.l.b16 %v63
  %v132 = vunpack.c.l.b16 %v64
  %v133 = vunpack.c.l.b16 %v65
  %v134 = vunpack.c.l.b16 %v66
  %v135 = vunpack.c.l.b16 %v67
  %v136 = vunpack.c.l.b16 %v68
  %v137 = vunpack.c.l.b16 %v69
  %v138 = vunpack.c.l.b16 %v70
  %v139 = vunpack.c.l.b16 %v71
  %v140 = vunpack.c.l.b16 %v72
  %v141 = vunpack.c.l.b16 %v73
  %v142 = vunpack.c.l.b16 %v74
  %v143 = vunpack.c.l.b16 %v75
  %v144 = vunpack.c.l.b16 %v76
  %v145 = vunpack.c.l.b16 %v77
  %v146 = vunpack.c.l.b16 %v78
  %v147 = vunpack.c.l.b16 %v79
  %v148 = vunpack.c.l.b16 %v80
  %v149 = vunpack.c.l.b16 %v81
  %v150 = vunpack.c.l.b16 %v82
  %v151 = vunpack.c.l.b16 %v83
  %v152 = vunpack.c.l.b16 %v84
  %v153 = vunpack.c.l.b16 %v85
  %v154 = vunpack.c.l.b16 %v86
  %v155 = vunpack.c.l.b16 %v87
  %v156 = vunpack.c.l.b16 %v88
  %v157 = vunpack.c.l.b16 %v89
  %v158 = vunpack.c.l.b16 %v90
  %v159 = vunpack.c.l.b16 %v91
  %v160 = vunpack.c.l.b16 %v92
  %v161 = vunpack.c.l.b16 %v93
  %v162 = vpack.c.b16 %v131, %v130
  %v163 = vpack.c.b16 %v133, %v132
  %v164 = vpack.c.b16 %v135, %v134
  %v165 = vpack.c.b16 %v137, %v136
  %v166 = vpack.c.b16 %v139, %v138
  %v167 = vpack.c.b16 %v141, %v140
  %v168 = vpack.c.b16 %v143, %v142
  %v169 = vpack.c.b16 %v145, %v144
  %v170 = vpack.c.b16 %v147, %v146
  %v171 = vpack.c.b16 %v149, %v148
  %v172 = vpack.c.b16 %v151, %v150
  %v173 = vpack.c.b16 %v153, %v152
  %v174 = vpack.c.b16 %v155, %v154
  %v175 = vpack.c.b16 %v157, %v156
  %v176 = vpack.c.b16 %v159, %v158
  %v177 = vpack.c.b16 %v161, %v160
  %194 = vmatpush.bf16.msra.mxu0 %v169
  %195 = vmatpush.bf16.msra.mxu0 %v168
  %196 = vmatpush.bf16.msra.mxu0 %v167
  %197 = vmatpush.bf16.msra.mxu0 %v166
  %198 = vmatpush.bf16.msra.mxu0 %v165
  %199 = vmatpush.bf16.msra.mxu0 %v164
  %200 = vmatpush.bf16.msra.mxu0 %v163
  %201 = vmatpush.bf16.msra.mxu0 %v162
  %202 = vmatmul.bf16.gmra.mxu0 %v46
  %v203 = vpop.f32.mrf.mxu0
  %v204 = vadd.f32 %v96, %v203
  %v205 = vpop.f32.mrf.mxu0
  %v206 = vadd.f32 %v96, %v205
  %207 = vmatmul.bf16.gmra.mxu0 %v48
  %v208 = vpop.f32.mrf.mxu0
  %v209 = vadd.f32 %v96, %v208
  %v210 = vpop.f32.mrf.mxu0
  %v211 = vadd.f32 %v96, %v210
  %212 = vmatmul.bf16.gmra.mxu0 %v50
  %v213 = vpop.f32.mrf.mxu0
  %v214 = vadd.f32 %v96, %v213
  %v215 = vpop.f32.mrf.mxu0
  %v216 = vadd.f32 %v96, %v215
  %217 = vmatmul.bf16.gmra.mxu0 %v52
  %v218 = vpop.f32.mrf.mxu0
  %v219 = vadd.f32 %v96, %v218
  %v220 = vpop.f32.mrf.mxu0
  %v221 = vadd.f32 %v96, %v220
  %222 = vmatmul.bf16.gmra.mxu0 %v54
  %v223 = vpop.f32.mrf.mxu0
  %v224 = vadd.f32 %v96, %v223
  %v225 = vpop.f32.mrf.mxu0
  %v226 = vadd.f32 %v96, %v225
  %227 = vmatmul.bf16.gmra.mxu0 %v56
  %v228 = vpop.f32.mrf.mxu0
  %v229 = vadd.f32 %v96, %v228
  %v230 = vpop.f32.mrf.mxu0
  %v231 = vadd.f32 %v96, %v230
  %232 = vmatmul.bf16.gmra.mxu0 %v58
  %v233 = vpop.f32.mrf.mxu0
  %v234 = vadd.f32 %v96, %v233
  %v235 = vpop.f32.mrf.mxu0
  %v236 = vadd.f32 %v96, %v235
  %237 = vmatmul.bf16.gmra.mxu0 %v60
  %v238 = vpop.f32.mrf.mxu0
  %v239 = vadd.f32 %v96, %v238
  %v240 = vpop.f32.mrf.mxu0
  %v241 = vadd.f32 %v96, %v240
  %242 = vdwg.mxu0
  %243 = vmatpush.bf16.msra.mxu0 %v177
  %244 = vmatpush.bf16.msra.mxu0 %v176
  %245 = vmatpush.bf16.msra.mxu0 %v175
  %246 = vmatpush.bf16.msra.mxu0 %v174
  %247 = vmatpush.bf16.msra.mxu0 %v173
  %248 = vmatpush.bf16.msra.mxu0 %v172
  %249 = vmatpush.bf16.msra.mxu0 %v171
  %250 = vmatpush.bf16.msra.mxu0 %v170
  %251 = vmatmul.bf16.gmra.mxu0 %v47
  %v252 = vpop.f32.mrf.mxu0
  %v253 = vadd.f32 %v204, %v252
  %v254 = vpop.f32.mrf.mxu0
  %v255 = vadd.f32 %v206, %v254
  %256 = vmatmul.bf16.gmra.mxu0 %v49
  %v257 = vpop.f32.mrf.mxu0
  %v258 = vadd.f32 %v209, %v257
  %v259 = vpop.f32.mrf.mxu0
  %v260 = vadd.f32 %v211, %v259
  %261 = vmatmul.bf16.gmra.mxu0 %v51
  %v262 = vpop.f32.mrf.mxu0
  %v263 = vadd.f32 %v214, %v262
  %v264 = vpop.f32.mrf.mxu0
  %v265 = vadd.f32 %v216, %v264
  %266 = vmatmul.bf16.gmra.mxu0 %v53
  %v267 = vpop.f32.mrf.mxu0
  %v268 = vadd.f32 %v219, %v267
  %v269 = vpop.f32.mrf.mxu0
  %v270 = vadd.f32 %v221, %v269
  %271 = vmatmul.bf16.gmra.mxu0 %v55
  %v272 = vpop.f32.mrf.mxu0
  %v273 = vadd.f32 %v224, %v272
  %v274 = vpop.f32.mrf.mxu0
  %v275 = vadd.f32 %v226, %v274
  %276 = vmatmul.bf16.gmra.mxu0 %v57
  %v277 = vpop.f32.mrf.mxu0
  %v278 = vadd.f32 %v229, %v277
  %v279 = vpop.f32.mrf.mxu0
  %v280 = vadd.f32 %v231, %v279
  %281 = vmatmul.bf16.gmra.mxu0 %v59
  %v282 = vpop.f32.mrf.mxu0
  %v283 = vadd.f32 %v234, %v282
  %v284 = vpop.f32.mrf.mxu0
  %v285 = vadd.f32 %v236, %v284
  %286 = vmatmul.bf16.gmra.mxu0 %v61
  %v287 = vpop.f32.mrf.mxu0
  %v288 = vadd.f32 %v239, %v287
  %v289 = vpop.f32.mrf.mxu0
  %v290 = vadd.f32 %v241, %v289
  %291 = vdwg.mxu0
  %v292 = vmax.f32 %v253, 0.0
  %v293 = vmax.f32 %v255, 0.0
  %v294 = vmax.f32 %v258, 0.0
  %v295 = vmax.f32 %v260, 0.0
  %v296 = vmax.f32 %v263, 0.0
  %v297 = vmax.f32 %v265, 0.0
  %v298 = vmax.f32 %v268, 0.0
  %v299 = vmax.f32 %v270, 0.0
  %v300 = vmax.f32 %v273, 0.0
  %v301 = vmax.f32 %v275, 0.0
  %v302 = vmax.f32 %v278, 0.0
  %v303 = vmax.f32 %v280, 0.0
  %v304 = vmax.f32 %v283, 0.0
  %v305 = vmax.f32 %v285, 0.0
  %v306 = vmax.f32 %v288, 0.0
  %v307 = vmax.f32 %v290, 0.0
  %308 = vst [vmem:[%s3] sm:$0xff] %v292
  %309 = vst [vmem:[%s3 + $0x8] sm:$0xff] %v293
  %310 = vst [vmem:[%s3 + $0x10] sm:$0xff] %v294
  %311 = vst [vmem:[%s3 + $0x18] sm:$0xff] %v295
  %312 = vst [vmem:[%s3 + $0x20] sm:$0xff] %v296
  %313 = vst [vmem:[%s3 + $0x28] sm:$0xff] %v297
  %314 = vst [vmem:[%s3 + $0x30] sm:$0xff] %v298
  %315 = vst [vmem:[%s3 + $0x38] sm:$0xff] %v299
  %316 = vst [vmem:[%s3 + $0x40] sm:$0xff] %v300
  %317 = vst [vmem:[%s3 + $0x48] sm:$0xff] %v301
  %318 = vst [vmem:[%s3 + $0x50] sm:$0xff] %v302
  %319 = vst [vmem:[%s3 + $0x58] sm:$0xff] %v303
  %320 = vst [vmem:[%s3 + $0x60] sm:$0xff] %v304
  %321 = vst [vmem:[%s3 + $0x68] sm:$0xff] %v305
  %322 = vst [vmem:[%s3 + $0x70] sm:$0xff] %v306
  %323 = vst [vmem:[%s3 + $0x78] sm:$0xff] %v307
  // Predicated region
  $region14: #{_lambda_.3} parent=0 // pred_check
    _
  $region15: #{_lambda_.3} parent=0 // pred_check_branch
    %325 = sbr.rel (0) target = $region17
  $region16: #{_lambda_.3} parent=0 // pred_region
    _
  $region17: #{_lambda_.3} parent=0 // pred_fallthru
    _
  // Predicated region
  $region18: #{_lambda_.3} parent=0 // pred_check
    _
  $region19: #{_lambda_.3} parent=0 // pred_check_branch
    %327 = sbr.rel (0) target = $region21
  $region20: #{_lambda_.3} parent=0 // pred_region
    _
  $region21: #{_lambda_.3} parent=0 // pred_fallthru
    _

// kernel: _lambda_.4
$region0: #{_lambda_.4}
  #allocation0 [shape = 'u32[]', space=smem, size = 0x4, offset = 0x4, fixed_abs, tag = 'smem constant byte address 0x4 - core index']
  #allocation1 [shape = 'u32[72,128]{1,0:T(1,128)}', space=vmem, size = 0x9000, scoped, tag = 'internal scratch']
  %s0 = inlined_call_operand.vmem [shape: f32[24,512], index: 0, kind: input, shape index: {}]
  %s1 = inlined_call_operand.vmem [shape: bf16[512,128], index: 1, kind: input, shape index: {}]
  %s2 = inlined_call_operand.vmem [shape: f32[1,128], index: 2, kind: input, shape index: {}]
  %s3 = inlined_call_operand.vmem [shape: f32[24,128], index: 3, kind: output, shape index: {}]
  %s4 = sld [smem:[#allocation0]]
  $region22: #{_lambda_.4} parent=0
    _
  %s6 = ssub.s32 1, %s4
  %s7 = scalar_select 0, %s6, %s4
  // Predicated region
  $region2: #{_lambda_.4} parent=0 // pred_check
    _
  $region3: #{_lambda_.4} parent=0 // pred_check_branch
    %9 = sbr.rel (0) target = $region5
  $region4: #{_lambda_.4} parent=0 // pred_region
    _
  $region5: #{_lambda_.4} parent=0 // pred_fallthru
    _
  // Predicated region
  $region6: #{_lambda_.4} parent=0 // pred_check
    _
  $region7: #{_lambda_.4} parent=0 // pred_check_branch
    %11 = sbr.rel (0) target = $region9
  $region8: #{_lambda_.4} parent=0 // pred_region
    _
  $region9: #{_lambda_.4} parent=0 // pred_fallthru
    _
  // Predicated region
  $region10: #{_lambda_.4} parent=0 // pred_check
    _
  $region11: #{_lambda_.4} parent=0 // pred_check_branch
    %13 = sbr.rel (0) target = $region13
  $region12: #{_lambda_.4} parent=0 // pred_region
    _
  $region13: #{_lambda_.4} parent=0 // pred_fallthru
    _
  %v14 = vld [vmem:[%s0] sm:$0xff]
  %v15 = vld [vmem:[%s0 + $0x8] sm:$0xff]
  %v16 = vld [vmem:[%s0 + $0x10] sm:$0xff]
  %v17 = vld [vmem:[%s0 + $0x18] sm:$0xff]
  %v18 = vld [vmem:[%s0 + $0x20] sm:$0xff]
  %v19 = vld [vmem:[%s0 + $0x28] sm:$0xff]
  %v20 = vld [vmem:[%s0 + $0x30] sm:$0xff]
  %v21 = vld [vmem:[%s0 + $0x38] sm:$0xff]
  %v22 = vld [vmem:[%s0 + $0x40] sm:$0xff]
  %v23 = vld [vmem:[%s0 + $0x48] sm:$0xff]
  %v24 = vld [vmem:[%s0 + $0x50] sm:$0xff]
  %v25 = vld [vmem:[%s0 + $0x58] sm:$0xff]
  %v26 = vpack.c.bf16 %v18, %v14
  %v27 = vpack.c.bf16 %v19, %v15
  %v28 = vpack.c.bf16 %v20, %v16
  %v29 = vpack.c.bf16 %v21, %v17
  %v30 = vpack.c.bf16 %v22, %v22
  %v31 = vpack.c.bf16 %v23, %v23
  %v32 = vpack.c.bf16 %v24, %v24
  %v33 = vpack.c.bf16 %v25, %v25
  %v34 = vld [vmem:[%s1] sm:$0xf]
  %v35 = vld [vmem:[%s1 + $0x4] sm:$0xf]
  %v36 = vld [vmem:[%s1 + $0x8] sm:$0xf]
  %v37 = vld [vmem:[%s1 + $0xc] sm:$0xf]
  %v38 = vld [vmem:[%s1 + $0x10] sm:$0xf]
  %v39 = vld [vmem:[%s1 + $0x14] sm:$0xf]
  %v40 = vld [vmem:[%s1 + $0x18] sm:$0xf]
  %v41 = vld [vmem:[%s1 + $0x1c] sm:$0xf]
  %v42 = vld [vmem:[%s1 + $0x20] sm:$0xf]
  %v43 = vld [vmem:[%s1 + $0x24] sm:$0xf]
  %v44 = vld [vmem:[%s1 + $0x28] sm:$0xf]
  %v45 = vld [vmem:[%s1 + $0x2c] sm:$0xf]
  %v46 = vld [vmem:[%s1 + $0x30] sm:$0xf]
  %v47 = vld [vmem:[%s1 + $0x34] sm:$0xf]
  %v48 = vld [vmem:[%s1 + $0x38] sm:$0xf]
  %v49 = vld [vmem:[%s1 + $0x3c] sm:$0xf]
  %v50 = vld [vmem:[%s1 + $0x40] sm:$0xf]
  %v51 = vld [vmem:[%s1 + $0x44] sm:$0xf]
  %v52 = vld [vmem:[%s1 + $0x48] sm:$0xf]
  %v53 = vld [vmem:[%s1 + $0x4c] sm:$0xf]
  %v54 = vld [vmem:[%s1 + $0x50] sm:$0xf]
  %v55 = vld [vmem:[%s1 + $0x54] sm:$0xf]
  %v56 = vld [vmem:[%s1 + $0x58] sm:$0xf]
  %v57 = vld [vmem:[%s1 + $0x5c] sm:$0xf]
  %v58 = vld [vmem:[%s1 + $0x60] sm:$0xf]
  %v59 = vld [vmem:[%s1 + $0x64] sm:$0xf]
  %v60 = vld [vmem:[%s1 + $0x68] sm:$0xf]
  %v61 = vld [vmem:[%s1 + $0x6c] sm:$0xf]
  %v62 = vld [vmem:[%s1 + $0x70] sm:$0xf]
  %v63 = vld [vmem:[%s1 + $0x74] sm:$0xf]
  %v64 = vld [vmem:[%s1 + $0x78] sm:$0xf]
  %v65 = vld [vmem:[%s1 + $0x7c] sm:$0xf]
  %v66 = vld [vmem:[%s1 + $0x80] sm:$0xf]
  %v67 = vld [vmem:[%s1 + $0x84] sm:$0xf]
  %v68 = vld [vmem:[%s1 + $0x88] sm:$0xf]
  %v69 = vld [vmem:[%s1 + $0x8c] sm:$0xf]
  %v70 = vld [vmem:[%s1 + $0x90] sm:$0xf]
  %v71 = vld [vmem:[%s1 + $0x94] sm:$0xf]
  %v72 = vld [vmem:[%s1 + $0x98] sm:$0xf]
  %v73 = vld [vmem:[%s1 + $0x9c] sm:$0xf]
  %v74 = vld [vmem:[%s1 + $0xa0] sm:$0xf]
  %v75 = vld [vmem:[%s1 + $0xa4] sm:$0xf]
  %v76 = vld [vmem:[%s1 + $0xa8] sm:$0xf]
  %v77 = vld [vmem:[%s1 + $0xac] sm:$0xf]
  %v78 = vld [vmem:[%s1 + $0xb0] sm:$0xf]
  %v79 = vld [vmem:[%s1 + $0xb4] sm:$0xf]
  %v80 = vld [vmem:[%s1 + $0xb8] sm:$0xf]
  %v81 = vld [vmem:[%s1 + $0xbc] sm:$0xf]
  %v82 = vld [vmem:[%s1 + $0xc0] sm:$0xf]
  %v83 = vld [vmem:[%s1 + $0xc4] sm:$0xf]
  %v84 = vld [vmem:[%s1 + $0xc8] sm:$0xf]
  %v85 = vld [vmem:[%s1 + $0xcc] sm:$0xf]
  %v86 = vld [vmem:[%s1 + $0xd0] sm:$0xf]
  %v87 = vld [vmem:[%s1 + $0xd4] sm:$0xf]
  %v88 = vld [vmem:[%s1 + $0xd8] sm:$0xf]
  %v89 = vld [vmem:[%s1 + $0xdc] sm:$0xf]
  %v90 = vld [vmem:[%s1 + $0xe0] sm:$0xf]
  %v91 = vld [vmem:[%s1 + $0xe4] sm:$0xf]
  %v92 = vld [vmem:[%s1 + $0xe8] sm:$0xf]
  %v93 = vld [vmem:[%s1 + $0xec] sm:$0xf]
  %v94 = vld [vmem:[%s1 + $0xf0] sm:$0xf]
  %v95 = vld [vmem:[%s1 + $0xf4] sm:$0xf]
  %v96 = vld [vmem:[%s1 + $0xf8] sm:$0xf]
  %v97 = vld [vmem:[%s1 + $0xfc] sm:$0xf]
  %v98 = vld [vmem:[%s2] sm:$0x1]
  %v100 = vperm.slane %v98, 0
  %v166 = vunpack.c.l.b16 %v34
  %v167 = vunpack.c.l.b16 %v35
  %v168 = vunpack.c.l.b16 %v36
  %v169 = vunpack.c.l.b16 %v37
  %v170 = vunpack.c.l.b16 %v38
  %v171 = vunpack.c.l.b16 %v39
  %v172 = vunpack.c.l.b16 %v40
  %v173 = vunpack.c.l.b16 %v41
  %v174 = vunpack.c.l.b16 %v42
  %v175 = vunpack.c.l.b16 %v43
  %v176 = vunpack.c.l.b16 %v44
  %v177 = vunpack.c.l.b16 %v45
  %v178 = vunpack.c.l.b16 %v46
  %v179 = vunpack.c.l.b16 %v47
  %v180 = vunpack.c.l.b16 %v48
  %v181 = vunpack.c.l.b16 %v49
  %v182 = vunpack.c.l.b16 %v50
  %v183 = vunpack.c.l.b16 %v51
  %v184 = vunpack.c.l.b16 %v52
  %v185 = vunpack.c.l.b16 %v53
  %v186 = vunpack.c.l.b16 %v54
  %v187 = vunpack.c.l.b16 %v55
  %v188 = vunpack.c.l.b16 %v56
  %v189 = vunpack.c.l.b16 %v57
  %v190 = vunpack.c.l.b16 %v58
  %v191 = vunpack.c.l.b16 %v59
  %v192 = vunpack.c.l.b16 %v60
  %v193 = vunpack.c.l.b16 %v61
  %v194 = vunpack.c.l.b16 %v62
  %v195 = vunpack.c.l.b16 %v63
  %v196 = vunpack.c.l.b16 %v64
  %v197 = vunpack.c.l.b16 %v65
  %v198 = vunpack.c.l.b16 %v66
  %v199 = vunpack.c.l.b16 %v67
  %v200 = vunpack.c.l.b16 %v68
  %v201 = vunpack.c.l.b16 %v69
  %v202 = vunpack.c.l.b16 %v70
  %v203 = vunpack.c.l.b16 %v71
  %v204 = vunpack.c.l.b16 %v72
  %v205 = vunpack.c.l.b16 %v73
  %v206 = vunpack.c.l.b16 %v74
  %v207 = vunpack.c.l.b16 %v75
  %v208 = vunpack.c.l.b16 %v76
  %v209 = vunpack.c.l.b16 %v77
  %v210 = vunpack.c.l.b16 %v78
  %v211 = vunpack.c.l.b16 %v79
  %v212 = vunpack.c.l.b16 %v80
  %v213 = vunpack.c.l.b16 %v81
  %v214 = vunpack.c.l.b16 %v82
  %v215 = vunpack.c.l.b16 %v83
  %v216 = vunpack.c.l.b16 %v84
  %v217 = vunpack.c.l.b16 %v85
  %v218 = vunpack.c.l.b16 %v86
  %v219 = vunpack.c.l.b16 %v87
  %v220 = vunpack.c.l.b16 %v88
  %v221 = vunpack.c.l.b16 %v89
  %v222 = vunpack.c.l.b16 %v90
  %v223 = vunpack.c.l.b16 %v91
  %v224 = vunpack.c.l.b16 %v92
  %v225 = vunpack.c.l.b16 %v93
  %v226 = vunpack.c.l.b16 %v94
  %v227 = vunpack.c.l.b16 %v95
  %v228 = vunpack.c.l.b16 %v96
  %v229 = vunpack.c.l.b16 %v97
  %v230 = vpack.c.b16 %v167, %v166
  %v231 = vpack.c.b16 %v169, %v168
  %v232 = vpack.c.b16 %v171, %v170
  %v233 = vpack.c.b16 %v173, %v172
  %v234 = vpack.c.b16 %v175, %v174
  %v235 = vpack.c.b16 %v177, %v176
  %v236 = vpack.c.b16 %v179, %v178
  %v237 = vpack.c.b16 %v181, %v180
  %v238 = vpack.c.b16 %v183, %v182
  %v239 = vpack.c.b16 %v185, %v184
  %v240 = vpack.c.b16 %v187, %v186
  %v241 = vpack.c.b16 %v189, %v188
  %v242 = vpack.c.b16 %v191, %v190
  %v243 = vpack.c.b16 %v193, %v192
  %v244 = vpack.c.b16 %v195, %v194
  %v245 = vpack.c.b16 %v197, %v196
  %v246 = vpack.c.b16 %v199, %v198
  %v247 = vpack.c.b16 %v201, %v200
  %v248 = vpack.c.b16 %v203, %v202
  %v249 = vpack.c.b16 %v205, %v204
  %v250 = vpack.c.b16 %v207, %v206
  %v251 = vpack.c.b16 %v209, %v208
  %v252 = vpack.c.b16 %v211, %v210
  %v253 = vpack.c.b16 %v213, %v212
  %v254 = vpack.c.b16 %v215, %v214
  %v255 = vpack.c.b16 %v217, %v216
  %v256 = vpack.c.b16 %v219, %v218
  %v257 = vpack.c.b16 %v221, %v220
  %v258 = vpack.c.b16 %v223, %v222
  %v259 = vpack.c.b16 %v225, %v224
  %v260 = vpack.c.b16 %v227, %v226
  %v261 = vpack.c.b16 %v229, %v228
  %294 = vmatpush.bf16.msra.mxu0 %v237
  %295 = vmatpush.bf16.msra.mxu0 %v236
  %296 = vmatpush.bf16.msra.mxu0 %v235
  %297 = vmatpush.bf16.msra.mxu0 %v234
  %298 = vmatpush.bf16.msra.mxu0 %v233
  %299 = vmatpush.bf16.msra.mxu0 %v232
  %300 = vmatpush.bf16.msra.mxu0 %v231
  %301 = vmatpush.bf16.msra.mxu0 %v230
  %302 = vmatmul.bf16.gmra.mxu0 %v26
  %v303 = vpop.f32.mrf.mxu0
  %v304 = vadd.f32 %v100, %v303
  %v305 = vpop.f32.mrf.mxu0
  %v306 = vadd.f32 %v100, %v305
  %307 = vmatmul.bf16.gmra.mxu0 %v30
  %v308 = vpop.f32.mrf.mxu0
  %v309 = vadd.f32 %v100, %v308
  %v310 = vpop.f32.mrf.mxu0
  %311 = vdwg.mxu0
  %312 = vmatpush.bf16.msra.mxu0 %v245
  %313 = vmatpush.bf16.msra.mxu0 %v244
  %314 = vmatpush.bf16.msra.mxu0 %v243
  %315 = vmatpush.bf16.msra.mxu0 %v242
  %316 = vmatpush.bf16.msra.mxu0 %v241
  %317 = vmatpush.bf16.msra.mxu0 %v240
  %318 = vmatpush.bf16.msra.mxu0 %v239
  %319 = vmatpush.bf16.msra.mxu0 %v238
  %320 = vmatmul.bf16.gmra.mxu0 %v27
  %v321 = vpop.f32.mrf.mxu0
  %v322 = vadd.f32 %v304, %v321
  %v323 = vpop.f32.mrf.mxu0
  %v324 = vadd.f32 %v306, %v323
  %325 = vmatmul.bf16.gmra.mxu0 %v31
  %v326 = vpop.f32.mrf.mxu0
  %v327 = vadd.f32 %v309, %v326
  %v328 = vpop.f32.mrf.mxu0
  %329 = vdwg.mxu0
  %330 = vmatpush.bf16.msra.mxu0 %v253
  %331 = vmatpush.bf16.msra.mxu0 %v252
  %332 = vmatpush.bf16.msra.mxu0 %v251
  %333 = vmatpush.bf16.msra.mxu0 %v250
  %334 = vmatpush.bf16.msra.mxu0 %v249
  %335 = vmatpush.bf16.msra.mxu0 %v248
  %336 = vmatpush.bf16.msra.mxu0 %v247
  %337 = vmatpush.bf16.msra.mxu0 %v246
  %338 = vmatmul.bf16.gmra.mxu0 %v28
  %v339 = vpop.f32.mrf.mxu0
  %v340 = vadd.f32 %v322, %v339
  %v341 = vpop.f32.mrf.mxu0
  %v342 = vadd.f32 %v324, %v341
  %343 = vmatmul.bf16.gmra.mxu0 %v32
  %v344 = vpop.f32.mrf.mxu0
  %v345 = vadd.f32 %v327, %v344
  %v346 = vpop.f32.mrf.mxu0
  %347 = vdwg.mxu0
  %348 = vmatpush.bf16.msra.mxu0 %v261
  %349 = vmatpush.bf16.msra.mxu0 %v260
  %350 = vmatpush.bf16.msra.mxu0 %v259
  %351 = vmatpush.bf16.msra.mxu0 %v258
  %352 = vmatpush.bf16.msra.mxu0 %v257
  %353 = vmatpush.bf16.msra.mxu0 %v256
  %354 = vmatpush.bf16.msra.mxu0 %v255
  %355 = vmatpush.bf16.msra.mxu0 %v254
  %356 = vmatmul.bf16.gmra.mxu0 %v29
  %v357 = vpop.f32.mrf.mxu0
  %v358 = vadd.f32 %v340, %v357
  %v359 = vpop.f32.mrf.mxu0
  %v360 = vadd.f32 %v342, %v359
  %361 = vmatmul.bf16.gmra.mxu0 %v33
  %v362 = vpop.f32.mrf.mxu0
  %v363 = vadd.f32 %v345, %v362
  %v364 = vpop.f32.mrf.mxu0
  %365 = vdwg.mxu0
  %v366 = vmax.f32 %v358, 0.0
  %v367 = vmax.f32 %v360, 0.0
  %v368 = vmax.f32 %v363, 0.0
  %369 = vst [vmem:[%s3] sm:$0xff] %v366
  %370 = vst [vmem:[%s3 + $0x8] sm:$0xff] %v367
  %371 = vst [vmem:[%s3 + $0x10] sm:$0xff] %v368
  // Predicated region
  $region14: #{_lambda_.4} parent=0 // pred_check
    _
  $region15: #{_lambda_.4} parent=0 // pred_check_branch
    %373 = sbr.rel (0) target = $region17
  $region16: #{_lambda_.4} parent=0 // pred_region
    _
  $region17: #{_lambda_.4} parent=0 // pred_fallthru
    _
  // Predicated region
  $region18: #{_lambda_.4} parent=0 // pred_check
    _
  $region19: #{_lambda_.4} parent=0 // pred_check_branch
    %375 = sbr.rel (0) target = $region21
  $region20: #{_lambda_.4} parent=0 // pred_region
    _
  $region21: #{_lambda_.4} parent=0 // pred_fallthru
    _

// kernel: _lambda_.5
$region0: #{_lambda_.5}
  #allocation0 [shape = 'u32[]', space=smem, size = 0x4, offset = 0x4, fixed_abs, tag = 'smem constant byte address 0x4 - core index']
  #allocation1 [shape = 'u32[72,128]{1,0:T(1,128)}', space=vmem, size = 0x9000, scoped, tag = 'internal scratch']
  %s0 = inlined_call_operand.vmem [shape: f32[8,640], index: 0, kind: input, shape index: {}]
  %s1 = inlined_call_operand.vmem [shape: f32[8,128], index: 1, kind: input, shape index: {}]
  %s2 = inlined_call_operand.vmem [shape: bf16[640,128], index: 2, kind: input, shape index: {}]
  %s3 = inlined_call_operand.vmem [shape: f32[1,128], index: 3, kind: input, shape index: {}]
  %s4 = inlined_call_operand.vmem [shape: bf16[128,512], index: 4, kind: input, shape index: {}]
  %s5 = inlined_call_operand.vmem [shape: f32[1,512], index: 5, kind: input, shape index: {}]
  %s6 = inlined_call_operand.vmem [shape: bf16[512,128], index: 6, kind: input, shape index: {}]
  %s7 = inlined_call_operand.vmem [shape: f32[1,128], index: 7, kind: input, shape index: {}]
  %s8 = inlined_call_operand.vmem [shape: bf16[128,512], index: 8, kind: input, shape index: {}]
  %s9 = inlined_call_operand.vmem [shape: bf16[128,512], index: 9, kind: input, shape index: {}]
  %s10 = inlined_call_operand.vmem [shape: f32[1,512], index: 10, kind: input, shape index: {}]
  %s11 = inlined_call_operand.vmem [shape: bf16[512,512], index: 11, kind: input, shape index: {}]
  %s12 = inlined_call_operand.vmem [shape: f32[1,512], index: 12, kind: input, shape index: {}]
  %s13 = inlined_call_operand.vmem [shape: bf16[512,128], index: 13, kind: input, shape index: {}]
  %s14 = inlined_call_operand.vmem [shape: f32[1,128], index: 14, kind: input, shape index: {}]
  %s15 = inlined_call_operand.vmem [shape: f32[8,128], index: 15, kind: output, shape index: {}]
  %s16 = sld [smem:[#allocation0]]
  $region70: #{_lambda_.5} parent=0
    _
  %s18 = ssub.s32 1, %s16
  %s19 = scalar_select 0, %s18, %s16
  // Predicated region
  $region2: #{_lambda_.5} parent=0 // pred_check
    _
  $region3: #{_lambda_.5} parent=0 // pred_check_branch
    %21 = sbr.rel (0) target = $region5
  $region4: #{_lambda_.5} parent=0 // pred_region
    _
  $region5: #{_lambda_.5} parent=0 // pred_fallthru
    _
  // Predicated region
  $region6: #{_lambda_.5} parent=0 // pred_check
    _
  $region7: #{_lambda_.5} parent=0 // pred_check_branch
    %23 = sbr.rel (0) target = $region9
  $region8: #{_lambda_.5} parent=0 // pred_region
    _
  $region9: #{_lambda_.5} parent=0 // pred_fallthru
    _
  // Predicated region
  $region10: #{_lambda_.5} parent=0 // pred_check
    _
  $region11: #{_lambda_.5} parent=0 // pred_check_branch
    %25 = sbr.rel (0) target = $region13
  $region12: #{_lambda_.5} parent=0 // pred_region
    _
  $region13: #{_lambda_.5} parent=0 // pred_fallthru
    _
  // Predicated region
  $region14: #{_lambda_.5} parent=0 // pred_check
    _
  $region15: #{_lambda_.5} parent=0 // pred_check_branch
    %27 = sbr.rel (0) target = $region17
  $region16: #{_lambda_.5} parent=0 // pred_region
    _
  $region17: #{_lambda_.5} parent=0 // pred_fallthru
    _
  // Predicated region
  $region18: #{_lambda_.5} parent=0 // pred_check
    _
  $region19: #{_lambda_.5} parent=0 // pred_check_branch
    %29 = sbr.rel (0) target = $region21
  $region20: #{_lambda_.5} parent=0 // pred_region
    _
  $region21: #{_lambda_.5} parent=0 // pred_fallthru
    _
  // Predicated region
  $region22: #{_lambda_.5} parent=0 // pred_check
    _
  $region23: #{_lambda_.5} parent=0 // pred_check_branch
    %31 = sbr.rel (0) target = $region25
  $region24: #{_lambda_.5} parent=0 // pred_region
    _
  $region25: #{_lambda_.5} parent=0 // pred_fallthru
    _
  // Predicated region
  $region26: #{_lambda_.5} parent=0 // pred_check
    _
  $region27: #{_lambda_.5} parent=0 // pred_check_branch
    %33 = sbr.rel (0) target = $region29
  $region28: #{_lambda_.5} parent=0 // pred_region
    _
  $region29: #{_lambda_.5} parent=0 // pred_fallthru
    _
  // Predicated region
  $region30: #{_lambda_.5} parent=0 // pred_check
    _
  $region31: #{_lambda_.5} parent=0 // pred_check_branch
    %35 = sbr.rel (0) target = $region33
  $region32: #{_lambda_.5} parent=0 // pred_region
    _
  $region33: #{_lambda_.5} parent=0 // pred_fallthru
    _
  // Predicated region
  $region34: #{_lambda_.5} parent=0 // pred_check
    _
  $region35: #{_lambda_.5} parent=0 // pred_check_branch
    %37 = sbr.rel (0) target = $region37
  $region36: #{_lambda_.5} parent=0 // pred_region
    _
  $region37: #{_lambda_.5} parent=0 // pred_fallthru
    _
  // Predicated region
  $region38: #{_lambda_.5} parent=0 // pred_check
    _
  $region39: #{_lambda_.5} parent=0 // pred_check_branch
    %39 = sbr.rel (0) target = $region41
  $region40: #{_lambda_.5} parent=0 // pred_region
    _
  $region41: #{_lambda_.5} parent=0 // pred_fallthru
    _
  // Predicated region
  $region42: #{_lambda_.5} parent=0 // pred_check
    _
  $region43: #{_lambda_.5} parent=0 // pred_check_branch
    %41 = sbr.rel (0) target = $region45
  $region44: #{_lambda_.5} parent=0 // pred_region
    _
  $region45: #{_lambda_.5} parent=0 // pred_fallthru
    _
  // Predicated region
  $region46: #{_lambda_.5} parent=0 // pred_check
    _
  $region47: #{_lambda_.5} parent=0 // pred_check_branch
    %43 = sbr.rel (0) target = $region49
  $region48: #{_lambda_.5} parent=0 // pred_region
    _
  $region49: #{_lambda_.5} parent=0 // pred_fallthru
    _
  // Predicated region
  $region50: #{_lambda_.5} parent=0 // pred_check
    _
  $region51: #{_lambda_.5} parent=0 // pred_check_branch
    %45 = sbr.rel (0) target = $region53
  $region52: #{_lambda_.5} parent=0 // pred_region
    _
  $region53: #{_lambda_.5} parent=0 // pred_fallthru
    _
  // Predicated region
  $region54: #{_lambda_.5} parent=0 // pred_check
    _
  $region55: #{_lambda_.5} parent=0 // pred_check_branch
    %47 = sbr.rel (0) target = $region57
  $region56: #{_lambda_.5} parent=0 // pred_region
    _
  $region57: #{_lambda_.5} parent=0 // pred_fallthru
    _
  // Predicated region
  $region58: #{_lambda_.5} parent=0 // pred_check
    _
  $region59: #{_lambda_.5} parent=0 // pred_check_branch
    %49 = sbr.rel (0) target = $region61
  $region60: #{_lambda_.5} parent=0 // pred_region
    _
  $region61: #{_lambda_.5} parent=0 // pred_fallthru
    _
  %v50 = vld [vmem:[%s0] sm:$0xff]
  %v51 = vld [vmem:[%s0 + $0x8] sm:$0xff]
  %v52 = vld [vmem:[%s0 + $0x10] sm:$0xff]
  %v53 = vld [vmem:[%s0 + $0x18] sm:$0xff]
  %v54 = vld [vmem:[%s0 + $0x20] sm:$0xff]
  %v55 = vpack.c.bf16 %v50, %v50
  %v56 = vpack.c.bf16 %v51, %v51
  %v57 = vpack.c.bf16 %v52, %v52
  %v58 = vpack.c.bf16 %v53, %v53
  %v59 = vpack.c.bf16 %v54, %v54
  %v60 = vld [vmem:[%s2] sm:$0xf]
  %v61 = vld [vmem:[%s2 + $0x4] sm:$0xf]
  %v62 = vld [vmem:[%s2 + $0x8] sm:$0xf]
  %v63 = vld [vmem:[%s2 + $0xc] sm:$0xf]
  %v64 = vld [vmem:[%s2 + $0x10] sm:$0xf]
  %v65 = vld [vmem:[%s2 + $0x14] sm:$0xf]
  %v66 = vld [vmem:[%s2 + $0x18] sm:$0xf]
  %v67 = vld [vmem:[%s2 + $0x1c] sm:$0xf]
  %v68 = vld [vmem:[%s2 + $0x20] sm:$0xf]
  %v69 = vld [vmem:[%s2 + $0x24] sm:$0xf]
  %v70 = vld [vmem:[%s2 + $0x28] sm:$0xf]
  %v71 = vld [vmem:[%s2 + $0x2c] sm:$0xf]
  %v72 = vld [vmem:[%s2 + $0x30] sm:$0xf]
  %v73 = vld [vmem:[%s2 + $0x34] sm:$0xf]
  %v74 = vld [vmem:[%s2 + $0x38] sm:$0xf]
  %v75 = vld [vmem:[%s2 + $0x3c] sm:$0xf]
  %v76 = vld [vmem:[%s2 + $0x40] sm:$0xf]
  %v77 = vld [vmem:[%s2 + $0x44] sm:$0xf]
  %v78 = vld [vmem:[%s2 + $0x48] sm:$0xf]
  %v79 = vld [vmem:[%s2 + $0x4c] sm:$0xf]
  %v80 = vld [vmem:[%s2 + $0x50] sm:$0xf]
  %v81 = vld [vmem:[%s2 + $0x54] sm:$0xf]
  %v82 = vld [vmem:[%s2 + $0x58] sm:$0xf]
  %v83 = vld [vmem:[%s2 + $0x5c] sm:$0xf]
  %v84 = vld [vmem:[%s2 + $0x60] sm:$0xf]
  %v85 = vld [vmem:[%s2 + $0x64] sm:$0xf]
  %v86 = vld [vmem:[%s2 + $0x68] sm:$0xf]
  %v87 = vld [vmem:[%s2 + $0x6c] sm:$0xf]
  %v88 = vld [vmem:[%s2 + $0x70] sm:$0xf]
  %v89 = vld [vmem:[%s2 + $0x74] sm:$0xf]
  %v90 = vld [vmem:[%s2 + $0x78] sm:$0xf]
  %v91 = vld [vmem:[%s2 + $0x7c] sm:$0xf]
  %v92 = vld [vmem:[%s2 + $0x80] sm:$0xf]
  %v93 = vld [vmem:[%s2 + $0x84] sm:$0xf]
  %v94 = vld [vmem:[%s2 + $0x88] sm:$0xf]
  %v95 = vld [vmem:[%s2 + $0x8c] sm:$0xf]
  %v96 = vld [vmem:[%s2 + $0x90] sm:$0xf]
  %v97 = vld [vmem:[%s2 + $0x94] sm:$0xf]
  %v98 = vld [vmem:[%s2 + $0x98] sm:$0xf]
  %v99 = vld [vmem:[%s2 + $0x9c] sm:$0xf]
  %v100 = vld [vmem:[%s2 + $0xa0] sm:$0xf]
  %v101 = vld [vmem:[%s2 + $0xa4] sm:$0xf]
  %v102 = vld [vmem:[%s2 + $0xa8] sm:$0xf]
  %v103 = vld [vmem:[%s2 + $0xac] sm:$0xf]
  %v104 = vld [vmem:[%s2 + $0xb0] sm:$0xf]
  %v105 = vld [vmem:[%s2 + $0xb4] sm:$0xf]
  %v106 = vld [vmem:[%s2 + $0xb8] sm:$0xf]
  %v107 = vld [vmem:[%s2 + $0xbc] sm:$0xf]
  %v108 = vld [vmem:[%s2 + $0xc0] sm:$0xf]
  %v109 = vld [vmem:[%s2 + $0xc4] sm:$0xf]
  %v110 = vld [vmem:[%s2 + $0xc8] sm:$0xf]
  %v111 = vld [vmem:[%s2 + $0xcc] sm:$0xf]
  %v112 = vld [vmem:[%s2 + $0xd0] sm:$0xf]
  %v113 = vld [vmem:[%s2 + $0xd4] sm:$0xf]
  %v114 = vld [vmem:[%s2 + $0xd8] sm:$0xf]
  %v115 = vld [vmem:[%s2 + $0xdc] sm:$0xf]
  %v116 = vld [vmem:[%s2 + $0xe0] sm:$0xf]
  %v117 = vld [vmem:[%s2 + $0xe4] sm:$0xf]
  %v118 = vld [vmem:[%s2 + $0xe8] sm:$0xf]
  %v119 = vld [vmem:[%s2 + $0xec] sm:$0xf]
  %v120 = vld [vmem:[%s2 + $0xf0] sm:$0xf]
  %v121 = vld [vmem:[%s2 + $0xf4] sm:$0xf]
  %v122 = vld [vmem:[%s2 + $0xf8] sm:$0xf]
  %v123 = vld [vmem:[%s2 + $0xfc] sm:$0xf]
  %v124 = vld [vmem:[%s2 + $0x100] sm:$0xf]
  %v125 = vld [vmem:[%s2 + $0x104] sm:$0xf]
  %v126 = vld [vmem:[%s2 + $0x108] sm:$0xf]
  %v127 = vld [vmem:[%s2 + $0x10c] sm:$0xf]
  %v128 = vld [vmem:[%s2 + $0x110] sm:$0xf]
  %v129 = vld [vmem:[%s2 + $0x114] sm:$0xf]
  %v130 = vld [vmem:[%s2 + $0x118] sm:$0xf]
  %v131 = vld [vmem:[%s2 + $0x11c] sm:$0xf]
  %v132 = vld [vmem:[%s2 + $0x120] sm:$0xf]
  %v133 = vld [vmem:[%s2 + $0x124] sm:$0xf]
  %v134 = vld [vmem:[%s2 + $0x128] sm:$0xf]
  %v135 = vld [vmem:[%s2 + $0x12c] sm:$0xf]
  %v136 = vld [vmem:[%s2 + $0x130] sm:$0xf]
  %v137 = vld [vmem:[%s2 + $0x134] sm:$0xf]
  %v138 = vld [vmem:[%s2 + $0x138] sm:$0xf]
  %v139 = vld [vmem:[%s2 + $0x13c] sm:$0xf]
  %v140 = vld [vmem:[%s3] sm:$0x1]
  %v142 = vperm.slane %v140, 0
  %v224 = vunpack.c.l.b16 %v60
  %v225 = vunpack.c.l.b16 %v61
  %v226 = vunpack.c.l.b16 %v62
  %v227 = vunpack.c.l.b16 %v63
  %v228 = vunpack.c.l.b16 %v64
  %v229 = vunpack.c.l.b16 %v65
  %v230 = vunpack.c.l.b16 %v66
  %v231 = vunpack.c.l.b16 %v67
  %v232 = vunpack.c.l.b16 %v68
  %v233 = vunpack.c.l.b16 %v69
  %v234 = vunpack.c.l.b16 %v70
  %v235 = vunpack.c.l.b16 %v71
  %v236 = vunpack.c.l.b16 %v72
  %v237 = vunpack.c.l.b16 %v73
  %v238 = vunpack.c.l.b16 %v74
  %v239 = vunpack.c.l.b16 %v75
  %v240 = vunpack.c.l.b16 %v76
  %v241 = vunpack.c.l.b16 %v77
  %v242 = vunpack.c.l.b16 %v78
  %v243 = vunpack.c.l.b16 %v79
  %v244 = vunpack.c.l.b16 %v80
  %v245 = vunpack.c.l.b16 %v81
  %v246 = vunpack.c.l.b16 %v82
  %v247 = vunpack.c.l.b16 %v83
  %v248 = vunpack.c.l.b16 %v84
  %v249 = vunpack.c.l.b16 %v85
  %v250 = vunpack.c.l.b16 %v86
  %v251 = vunpack.c.l.b16 %v87
  %v252 = vunpack.c.l.b16 %v88
  %v253 = vunpack.c.l.b16 %v89
  %v254 = vunpack.c.l.b16 %v90
  %v255 = vunpack.c.l.b16 %v91
  %v256 = vunpack.c.l.b16 %v92
  %v257 = vunpack.c.l.b16 %v93
  %v258 = vunpack.c.l.b16 %v94
  %v259 = vunpack.c.l.b16 %v95
  %v260 = vunpack.c.l.b16 %v96
  %v261 = vunpack.c.l.b16 %v97
  %v262 = vunpack.c.l.b16 %v98
  %v263 = vunpack.c.l.b16 %v99
  %v264 = vunpack.c.l.b16 %v100
  %v265 = vunpack.c.l.b16 %v101
  %v266 = vunpack.c.l.b16 %v102
  %v267 = vunpack.c.l.b16 %v103
  %v268 = vunpack.c.l.b16 %v104
  %v269 = vunpack.c.l.b16 %v105
  %v270 = vunpack.c.l.b16 %v106
  %v271 = vunpack.c.l.b16 %v107
  %v272 = vunpack.c.l.b16 %v108
  %v273 = vunpack.c.l.b16 %v109
  %v274 = vunpack.c.l.b16 %v110
  %v275 = vunpack.c.l.b16 %v111
  %v276 = vunpack.c.l.b16 %v112
  %v277 = vunpack.c.l.b16 %v113
  %v278 = vunpack.c.l.b16 %v114
  %v279 = vunpack.c.l.b16 %v115
  %v280 = vunpack.c.l.b16 %v116
  %v281 = vunpack.c.l.b16 %v117
  %v282 = vunpack.c.l.b16 %v118
  %v283 = vunpack.c.l.b16 %v119
  %v284 = vunpack.c.l.b16 %v120
  %v285 = vunpack.c.l.b16 %v121
  %v286 = vunpack.c.l.b16 %v122
  %v287 = vunpack.c.l.b16 %v123
  %v288 = vunpack.c.l.b16 %v124
  %v289 = vunpack.c.l.b16 %v125
  %v290 = vunpack.c.l.b16 %v126
  %v291 = vunpack.c.l.b16 %v127
  %v292 = vunpack.c.l.b16 %v128
  %v293 = vunpack.c.l.b16 %v129
  %v294 = vunpack.c.l.b16 %v130
  %v295 = vunpack.c.l.b16 %v131
  %v296 = vunpack.c.l.b16 %v132
  %v297 = vunpack.c.l.b16 %v133
  %v298 = vunpack.c.l.b16 %v134
  %v299 = vunpack.c.l.b16 %v135
  %v300 = vunpack.c.l.b16 %v136
  %v301 = vunpack.c.l.b16 %v137
  %v302 = vunpack.c.l.b16 %v138
  %v303 = vunpack.c.l.b16 %v139
  %v304 = vpack.c.b16 %v225, %v224
  %v305 = vpack.c.b16 %v227, %v226
  %v306 = vpack.c.b16 %v229, %v228
  %v307 = vpack.c.b16 %v231, %v230
  %v308 = vpack.c.b16 %v233, %v232
  %v309 = vpack.c.b16 %v235, %v234
  %v310 = vpack.c.b16 %v237, %v236
  %v311 = vpack.c.b16 %v239, %v238
  %v312 = vpack.c.b16 %v241, %v240
  %v313 = vpack.c.b16 %v243, %v242
  %v314 = vpack.c.b16 %v245, %v244
  %v315 = vpack.c.b16 %v247, %v246
  %v316 = vpack.c.b16 %v249, %v248
  %v317 = vpack.c.b16 %v251, %v250
  %v318 = vpack.c.b16 %v253, %v252
  %v319 = vpack.c.b16 %v255, %v254
  %v320 = vpack.c.b16 %v257, %v256
  %v321 = vpack.c.b16 %v259, %v258
  %v322 = vpack.c.b16 %v261, %v260
  %v323 = vpack.c.b16 %v263, %v262
  %v324 = vpack.c.b16 %v265, %v264
  %v325 = vpack.c.b16 %v267, %v266
  %v326 = vpack.c.b16 %v269, %v268
  %v327 = vpack.c.b16 %v271, %v270
  %v328 = vpack.c.b16 %v273, %v272
  %v329 = vpack.c.b16 %v275, %v274
  %v330 = vpack.c.b16 %v277, %v276
  %v331 = vpack.c.b16 %v279, %v278
  %v332 = vpack.c.b16 %v281, %v280
  %v333 = vpack.c.b16 %v283, %v282
  %v334 = vpack.c.b16 %v285, %v284
  %v335 = vpack.c.b16 %v287, %v286
  %v336 = vpack.c.b16 %v289, %v288
  %v337 = vpack.c.b16 %v291, %v290
  %v338 = vpack.c.b16 %v293, %v292
  %v339 = vpack.c.b16 %v295, %v294
  %v340 = vpack.c.b16 %v297, %v296
  %v341 = vpack.c.b16 %v299, %v298
  %v342 = vpack.c.b16 %v301, %v300
  %v343 = vpack.c.b16 %v303, %v302
  %384 = vmatpush.bf16.msra.mxu0 %v311
  %385 = vmatpush.bf16.msra.mxu0 %v310
  %386 = vmatpush.bf16.msra.mxu0 %v309
  %387 = vmatpush.bf16.msra.mxu0 %v308
  %388 = vmatpush.bf16.msra.mxu0 %v307
  %389 = vmatpush.bf16.msra.mxu0 %v306
  %390 = vmatpush.bf16.msra.mxu0 %v305
  %391 = vmatpush.bf16.msra.mxu0 %v304
  %392 = vmatmul.bf16.gmra.mxu0 %v55
  %v393 = vpop.f32.mrf.mxu0
  %v394 = vadd.f32 %v142, %v393
  %v395 = vpop.f32.mrf.mxu0
  %396 = vdwg.mxu0
  %397 = vmatpush.bf16.msra.mxu0 %v319
  %398 = vmatpush.bf16.msra.mxu0 %v318
  %399 = vmatpush.bf16.msra.mxu0 %v317
  %400 = vmatpush.bf16.msra.mxu0 %v316
  %401 = vmatpush.bf16.msra.mxu0 %v315
  %402 = vmatpush.bf16.msra.mxu0 %v314
  %403 = vmatpush.bf16.msra.mxu0 %v313
  %404 = vmatpush.bf16.msra.mxu0 %v312
  %405 = vmatmul.bf16.gmra.mxu0 %v56
  %v406 = vpop.f32.mrf.mxu0
  %v407 = vadd.f32 %v394, %v406
  %v408 = vpop.f32.mrf.mxu0
  %409 = vdwg.mxu0
  %410 = vmatpush.bf16.msra.mxu0 %v327
  %411 = vmatpush.bf16.msra.mxu0 %v326
  %412 = vmatpush.bf16.msra.mxu0 %v325
  %413 = vmatpush.bf16.msra.mxu0 %v324
  %414 = vmatpush.bf16.msra.mxu0 %v323
  %415 = vmatpush.bf16.msra.mxu0 %v322
  %416 = vmatpush.bf16.msra.mxu0 %v321
  %417 = vmatpush.bf16.msra.mxu0 %v320
  %418 = vmatmul.bf16.gmra.mxu0 %v57
  %v419 = vpop.f32.mrf.mxu0
  %v420 = vadd.f32 %v407, %v419
  %v421 = vpop.f32.mrf.mxu0
  %422 = vdwg.mxu0
  %423 = vmatpush.bf16.msra.mxu0 %v335
  %424 = vmatpush.bf16.msra.mxu0 %v334
  %425 = vmatpush.bf16.msra.mxu0 %v333
  %426 = vmatpush.bf16.msra.mxu0 %v332
  %427 = vmatpush.bf16.msra.mxu0 %v331
  %428 = vmatpush.bf16.msra.mxu0 %v330
  %429 = vmatpush.bf16.msra.mxu0 %v329
  %430 = vmatpush.bf16.msra.mxu0 %v328
  %431 = vmatmul.bf16.gmra.mxu0 %v58
  %v432 = vpop.f32.mrf.mxu0
  %v433 = vadd.f32 %v420, %v432
  %v434 = vpop.f32.mrf.mxu0
  %435 = vdwg.mxu0
  %436 = vmatpush.bf16.msra.mxu0 %v343
  %437 = vmatpush.bf16.msra.mxu0 %v342
  %438 = vmatpush.bf16.msra.mxu0 %v341
  %439 = vmatpush.bf16.msra.mxu0 %v340
  %440 = vmatpush.bf16.msra.mxu0 %v339
  %441 = vmatpush.bf16.msra.mxu0 %v338
  %442 = vmatpush.bf16.msra.mxu0 %v337
  %443 = vmatpush.bf16.msra.mxu0 %v336
  %444 = vmatmul.bf16.gmra.mxu0 %v59
  %v445 = vpop.f32.mrf.mxu0
  %v446 = vadd.f32 %v433, %v445
  %v447 = vpop.f32.mrf.mxu0
  %448 = vdwg.mxu0
  %v449 = vmax.f32 %v446, 0.0
  %v450 = vld [vmem:[%s1] sm:$0xff]
  %v451 = vpack.c.bf16 %v450, %v450
  %v452 = vld [vmem:[%s4] sm:$0xff]
  %v453 = vld [vmem:[%s4 + $0x8] sm:$0xff]
  %v454 = vld [vmem:[%s4 + $0x10] sm:$0xff]
  %v455 = vld [vmem:[%s4 + $0x18] sm:$0xff]
  %v456 = vld [vmem:[%s4 + $0x20] sm:$0xff]
  %v457 = vld [vmem:[%s4 + $0x28] sm:$0xff]
  %v458 = vld [vmem:[%s4 + $0x30] sm:$0xff]
  %v459 = vld [vmem:[%s4 + $0x38] sm:$0xff]
  %v460 = vld [vmem:[%s4 + $0x40] sm:$0xff]
  %v461 = vld [vmem:[%s4 + $0x48] sm:$0xff]
  %v462 = vld [vmem:[%s4 + $0x50] sm:$0xff]
  %v463 = vld [vmem:[%s4 + $0x58] sm:$0xff]
  %v464 = vld [vmem:[%s4 + $0x60] sm:$0xff]
  %v465 = vld [vmem:[%s4 + $0x68] sm:$0xff]
  %v466 = vld [vmem:[%s4 + $0x70] sm:$0xff]
  %v467 = vld [vmem:[%s4 + $0x78] sm:$0xff]
  %v468 = vld [vmem:[%s4 + $0x80] sm:$0xff]
  %v469 = vld [vmem:[%s4 + $0x88] sm:$0xff]
  %v470 = vld [vmem:[%s4 + $0x90] sm:$0xff]
  %v471 = vld [vmem:[%s4 + $0x98] sm:$0xff]
  %v472 = vld [vmem:[%s4 + $0xa0] sm:$0xff]
  %v473 = vld [vmem:[%s4 + $0xa8] sm:$0xff]
  %v474 = vld [vmem:[%s4 + $0xb0] sm:$0xff]
  %v475 = vld [vmem:[%s4 + $0xb8] sm:$0xff]
  %v476 = vld [vmem:[%s4 + $0xc0] sm:$0xff]
  %v477 = vld [vmem:[%s4 + $0xc8] sm:$0xff]
  %v478 = vld [vmem:[%s4 + $0xd0] sm:$0xff]
  %v479 = vld [vmem:[%s4 + $0xd8] sm:$0xff]
  %v480 = vld [vmem:[%s4 + $0xe0] sm:$0xff]
  %v481 = vld [vmem:[%s4 + $0xe8] sm:$0xff]
  %v482 = vld [vmem:[%s4 + $0xf0] sm:$0xff]
  %v483 = vld [vmem:[%s4 + $0xf8] sm:$0xff]
  %v484 = vld [vmem:[%s5] sm:$0xf]
  %v486 = vperm.slane %v484, 0
  %v487 = vperm.slane %v484, 1
  %v488 = vperm.slane %v484, 2
  %v489 = vperm.slane %v484, 3
  %v526 = vunpack.c.l.b16 %v452
  %v527 = vunpack.c.h.b16 %v452
  %v528 = vunpack.c.l.b16 %v453
  %v529 = vunpack.c.h.b16 %v453
  %v530 = vunpack.c.l.b16 %v454
  %v531 = vunpack.c.h.b16 %v454
  %v532 = vunpack.c.l.b16 %v455
  %v533 = vunpack.c.h.b16 %v455
  %v534 = vunpack.c.l.b16 %v456
  %v535 = vunpack.c.h.b16 %v456
  %v536 = vunpack.c.l.b16 %v457
  %v537 = vunpack.c.h.b16 %v457
  %v538 = vunpack.c.l.b16 %v458
  %v539 = vunpack.c.h.b16 %v458
  %v540 = vunpack.c.l.b16 %v459
  %v541 = vunpack.c.h.b16 %v459
  %v542 = vunpack.c.l.b16 %v460
  %v543 = vunpack.c.h.b16 %v460
  %v544 = vunpack.c.l.b16 %v461
  %v545 = vunpack.c.h.b16 %v461
  %v546 = vunpack.c.l.b16 %v462
  %v547 = vunpack.c.h.b16 %v462
  %v548 = vunpack.c.l.b16 %v463
  %v549 = vunpack.c.h.b16 %v463
  %v550 = vunpack.c.l.b16 %v464
  %v551 = vunpack.c.h.b16 %v464
  %v552 = vunpack.c.l.b16 %v465
  %v553 = vunpack.c.h.b16 %v465
  %v554 = vunpack.c.l.b16 %v466
  %v555 = vunpack.c.h.b16 %v466
  %v556 = vunpack.c.l.b16 %v467
  %v557 = vunpack.c.h.b16 %v467
  %v558 = vunpack.c.l.b16 %v468
  %v559 = vunpack.c.h.b16 %v468
  %v560 = vunpack.c.l.b16 %v469
  %v561 = vunpack.c.h.b16 %v469
  %v562 = vunpack.c.l.b16 %v470
  %v563 = vunpack.c.h.b16 %v470
  %v564 = vunpack.c.l.b16 %v471
  %v565 = vunpack.c.h.b16 %v471
  %v566 = vunpack.c.l.b16 %v472
  %v567 = vunpack.c.h.b16 %v472
  %v568 = vunpack.c.l.b16 %v473
  %v569 = vunpack.c.h.b16 %v473
  %v570 = vunpack.c.l.b16 %v474
  %v571 = vunpack.c.h.b16 %v474
  %v572 = vunpack.c.l.b16 %v475
  %v573 = vunpack.c.h.b16 %v475
  %v574 = vunpack.c.l.b16 %v476
  %v575 = vunpack.c.h.b16 %v476
  %v576 = vunpack.c.l.b16 %v477
  %v577 = vunpack.c.h.b16 %v477
  %v578 = vunpack.c.l.b16 %v478
  %v579 = vunpack.c.h.b16 %v478
  %v580 = vunpack.c.l.b16 %v479
  %v581 = vunpack.c.h.b16 %v479
  %v582 = vunpack.c.l.b16 %v480
  %v583 = vunpack.c.h.b16 %v480
  %v584 = vunpack.c.l.b16 %v481
  %v585 = vunpack.c.h.b16 %v481
  %v586 = vunpack.c.l.b16 %v482
  %v587 = vunpack.c.h.b16 %v482
  %v588 = vunpack.c.l.b16 %v483
  %v589 = vunpack.c.h.b16 %v483
  %v590 = vpack.c.b16 %v530, %v526
  %v591 = vpack.c.b16 %v531, %v527
  %v592 = vpack.c.b16 %v532, %v528
  %v593 = vpack.c.b16 %v533, %v529
  %v594 = vpack.c.b16 %v538, %v534
  %v595 = vpack.c.b16 %v539, %v535
  %v596 = vpack.c.b16 %v540, %v536
  %v597 = vpack.c.b16 %v541, %v537
  %v598 = vpack.c.b16 %v546, %v542
  %v599 = vpack.c.b16 %v547, %v543
  %v600 = vpack.c.b16 %v548, %v544
  %v601 = vpack.c.b16 %v549, %v545
  %v602 = vpack.c.b16 %v554, %v550
  %v603 = vpack.c.b16 %v555, %v551
  %v604 = vpack.c.b16 %v556, %v552
  %v605 = vpack.c.b16 %v557, %v553
  %v606 = vpack.c.b16 %v562, %v558
  %v607 = vpack.c.b16 %v563, %v559
  %v608 = vpack.c.b16 %v564, %v560
  %v609 = vpack.c.b16 %v565, %v561
  %v610 = vpack.c.b16 %v570, %v566
  %v611 = vpack.c.b16 %v571, %v567
  %v612 = vpack.c.b16 %v572, %v568
  %v613 = vpack.c.b16 %v573, %v569
  %v614 = vpack.c.b16 %v578, %v574
  %v615 = vpack.c.b16 %v579, %v575
  %v616 = vpack.c.b16 %v580, %v576
  %v617 = vpack.c.b16 %v581, %v577
  %v618 = vpack.c.b16 %v586, %v582
  %v619 = vpack.c.b16 %v587, %v583
  %v620 = vpack.c.b16 %v588, %v584
  %v621 = vpack.c.b16 %v589, %v585
  %654 = vmatpush.bf16.msra.mxu0 %v618
  %655 = vmatpush.bf16.msra.mxu0 %v614
  %656 = vmatpush.bf16.msra.mxu0 %v610
  %657 = vmatpush.bf16.msra.mxu0 %v606
  %658 = vmatpush.bf16.msra.mxu0 %v602
  %659 = vmatpush.bf16.msra.mxu0 %v598
  %660 = vmatpush.bf16.msra.mxu0 %v594
  %661 = vmatpush.bf16.msra.mxu0 %v590
  %662 = vmatmul.bf16.gmra.mxu0 %v451
  %v663 = vpop.f32.mrf.mxu0
  %v664 = vadd.f32 %v486, %v663
  %v665 = vpop.f32.mrf.mxu0
  %666 = vdwg.mxu0
  %667 = vmatpush.bf16.msra.mxu0 %v619
  %668 = vmatpush.bf16.msra.mxu0 %v615
  %669 = vmatpush.bf16.msra.mxu0 %v611
  %670 = vmatpush.bf16.msra.mxu0 %v607
  %671 = vmatpush.bf16.msra.mxu0 %v603
  %672 = vmatpush.bf16.msra.mxu0 %v599
  %673 = vmatpush.bf16.msra.mxu0 %v595
  %674 = vmatpush.bf16.msra.mxu0 %v591
  %675 = vmatmul.bf16.gmra.mxu0 %v451
  %v676 = vpop.f32.mrf.mxu0
  %v677 = vadd.f32 %v487, %v676
  %v678 = vpop.f32.mrf.mxu0
  %679 = vdwg.mxu0
  %680 = vmatpush.bf16.msra.mxu0 %v620
  %681 = vmatpush.bf16.msra.mxu0 %v616
  %682 = vmatpush.bf16.msra.mxu0 %v612
  %683 = vmatpush.bf16.msra.mxu0 %v608
  %684 = vmatpush.bf16.msra.mxu0 %v604
  %685 = vmatpush.bf16.msra.mxu0 %v600
  %686 = vmatpush.bf16.msra.mxu0 %v596
  %687 = vmatpush.bf16.msra.mxu0 %v592
  %688 = vmatmul.bf16.gmra.mxu0 %v451
  %v689 = vpop.f32.mrf.mxu0
  %v690 = vadd.f32 %v488, %v689
  %v691 = vpop.f32.mrf.mxu0
  %692 = vdwg.mxu0
  %693 = vmatpush.bf16.msra.mxu0 %v621
  %694 = vmatpush.bf16.msra.mxu0 %v617
  %695 = vmatpush.bf16.msra.mxu0 %v613
  %696 = vmatpush.bf16.msra.mxu0 %v609
  %697 = vmatpush.bf16.msra.mxu0 %v605
  %698 = vmatpush.bf16.msra.mxu0 %v601
  %699 = vmatpush.bf16.msra.mxu0 %v597
  %700 = vmatpush.bf16.msra.mxu0 %v593
  %701 = vmatmul.bf16.gmra.mxu0 %v451
  %v702 = vpop.f32.mrf.mxu0
  %v703 = vadd.f32 %v489, %v702
  %v704 = vpop.f32.mrf.mxu0
  %705 = vdwg.mxu0
  %v706 = vmax.f32 %v664, 0.0
  %v707 = vmax.f32 %v677, 0.0
  %v708 = vmax.f32 %v690, 0.0
  %v709 = vmax.f32 %v703, 0.0
  %v710 = vpack.c.bf16 %v706, %v706
  %v711 = vpack.c.bf16 %v707, %v707
  %v712 = vpack.c.bf16 %v708, %v708
  %v713 = vpack.c.bf16 %v709, %v709
  %v714 = vld [vmem:[%s6] sm:$0xf]
  %v715 = vld [vmem:[%s6 + $0x4] sm:$0xf]
  %v716 = vld [vmem:[%s6 + $0x8] sm:$0xf]
  %v717 = vld [vmem:[%s6 + $0xc] sm:$0xf]
  %v718 = vld [vmem:[%s6 + $0x10] sm:$0xf]
  %v719 = vld [vmem:[%s6 + $0x14] sm:$0xf]
  %v720 = vld [vmem:[%s6 + $0x18] sm:$0xf]
  %v721 = vld [vmem:[%s6 + $0x1c] sm:$0xf]
  %v722 = vld [vmem:[%s6 + $0x20] sm:$0xf]
  %v723 = vld [vmem:[%s6 + $0x24] sm:$0xf]
  %v724 = vld [vmem:[%s6 + $0x28] sm:$0xf]
  %v725 = vld [vmem:[%s6 + $0x2c] sm:$0xf]
  %v726 = vld [vmem:[%s6 + $0x30] sm:$0xf]
  %v727 = vld [vmem:[%s6 + $0x34] sm:$0xf]
  %v728 = vld [vmem:[%s6 + $0x38] sm:$0xf]
  %v729 = vld [vmem:[%s6 + $0x3c] sm:$0xf]
  %v730 = vld [vmem:[%s6 + $0x40] sm:$0xf]
  %v731 = vld [vmem:[%s6 + $0x44] sm:$0xf]
  %v732 = vld [vmem:[%s6 + $0x48] sm:$0xf]
  %v733 = vld [vmem:[%s6 + $0x4c] sm:$0xf]
  %v734 = vld [vmem:[%s6 + $0x50] sm:$0xf]
  %v735 = vld [vmem:[%s6 + $0x54] sm:$0xf]
  %v736 = vld [vmem:[%s6 + $0x58] sm:$0xf]
  %v737 = vld [vmem:[%s6 + $0x5c] sm:$0xf]
  %v738 = vld [vmem:[%s6 + $0x60] sm:$0xf]
  %v739 = vld [vmem:[%s6 + $0x64] sm:$0xf]
  %v740 = vld [vmem:[%s6 + $0x68] sm:$0xf]
  %v741 = vld [vmem:[%s6 + $0x6c] sm:$0xf]
  %v742 = vld [vmem:[%s6 + $0x70] sm:$0xf]
  %v743 = vld [vmem:[%s6 + $0x74] sm:$0xf]
  %v744 = vld [vmem:[%s6 + $0x78] sm:$0xf]
  %v745 = vld [vmem:[%s6 + $0x7c] sm:$0xf]
  %v746 = vld [vmem:[%s6 + $0x80] sm:$0xf]
  %v747 = vld [vmem:[%s6 + $0x84] sm:$0xf]
  %v748 = vld [vmem:[%s6 + $0x88] sm:$0xf]
  %v749 = vld [vmem:[%s6 + $0x8c] sm:$0xf]
  %v750 = vld [vmem:[%s6 + $0x90] sm:$0xf]
  %v751 = vld [vmem:[%s6 + $0x94] sm:$0xf]
  %v752 = vld [vmem:[%s6 + $0x98] sm:$0xf]
  %v753 = vld [vmem:[%s6 + $0x9c] sm:$0xf]
  %v754 = vld [vmem:[%s6 + $0xa0] sm:$0xf]
  %v755 = vld [vmem:[%s6 + $0xa4] sm:$0xf]
  %v756 = vld [vmem:[%s6 + $0xa8] sm:$0xf]
  %v757 = vld [vmem:[%s6 + $0xac] sm:$0xf]
  %v758 = vld [vmem:[%s6 + $0xb0] sm:$0xf]
  %v759 = vld [vmem:[%s6 + $0xb4] sm:$0xf]
  %v760 = vld [vmem:[%s6 + $0xb8] sm:$0xf]
  %v761 = vld [vmem:[%s6 + $0xbc] sm:$0xf]
  %v762 = vld [vmem:[%s6 + $0xc0] sm:$0xf]
  %v763 = vld [vmem:[%s6 + $0xc4] sm:$0xf]
  %v764 = vld [vmem:[%s6 + $0xc8] sm:$0xf]
  %v765 = vld [vmem:[%s6 + $0xcc] sm:$0xf]
  %v766 = vld [vmem:[%s6 + $0xd0] sm:$0xf]
  %v767 = vld [vmem:[%s6 + $0xd4] sm:$0xf]
  %v768 = vld [vmem:[%s6 + $0xd8] sm:$0xf]
  %v769 = vld [vmem:[%s6 + $0xdc] sm:$0xf]
  %v770 = vld [vmem:[%s6 + $0xe0] sm:$0xf]
  %v771 = vld [vmem:[%s6 + $0xe4] sm:$0xf]
  %v772 = vld [vmem:[%s6 + $0xe8] sm:$0xf]
  %v773 = vld [vmem:[%s6 + $0xec] sm:$0xf]
  %v774 = vld [vmem:[%s6 + $0xf0] sm:$0xf]
  %v775 = vld [vmem:[%s6 + $0xf4] sm:$0xf]
  %v776 = vld [vmem:[%s6 + $0xf8] sm:$0xf]
  %v777 = vld [vmem:[%s6 + $0xfc] sm:$0xf]
  %v778 = vld [vmem:[%s7] sm:$0x1]
  %v780 = vperm.slane %v778, 0
  %v846 = vunpack.c.l.b16 %v714
  %v847 = vunpack.c.l.b16 %v715
  %v848 = vunpack.c.l.b16 %v716
  %v849 = vunpack.c.l.b16 %v717
  %v850 = vunpack.c.l.b16 %v718
  %v851 = vunpack.c.l.b16 %v719
  %v852 = vunpack.c.l.b16 %v720
  %v853 = vunpack.c.l.b16 %v721
  %v854 = vunpack.c.l.b16 %v722
  %v855 = vunpack.c.l.b16 %v723
  %v856 = vunpack.c.l.b16 %v724
  %v857 = vunpack.c.l.b16 %v725
  %v858 = vunpack.c.l.b16 %v726
  %v859 = vunpack.c.l.b16 %v727
  %v860 = vunpack.c.l.b16 %v728
  %v861 = vunpack.c.l.b16 %v729
  %v862 = vunpack.c.l.b16 %v730
  %v863 = vunpack.c.l.b16 %v731
  %v864 = vunpack.c.l.b16 %v732
  %v865 = vunpack.c.l.b16 %v733
  %v866 = vunpack.c.l.b16 %v734
  %v867 = vunpack.c.l.b16 %v735
  %v868 = vunpack.c.l.b16 %v736
  %v869 = vunpack.c.l.b16 %v737
  %v870 = vunpack.c.l.b16 %v738
  %v871 = vunpack.c.l.b16 %v739
  %v872 = vunpack.c.l.b16 %v740
  %v873 = vunpack.c.l.b16 %v741
  %v874 = vunpack.c.l.b16 %v742
  %v875 = vunpack.c.l.b16 %v743
  %v876 = vunpack.c.l.b16 %v744
  %v877 = vunpack.c.l.b16 %v745
  %v878 = vunpack.c.l.b16 %v746
  %v879 = vunpack.c.l.b16 %v747
  %v880 = vunpack.c.l.b16 %v748
  %v881 = vunpack.c.l.b16 %v749
  %v882 = vunpack.c.l.b16 %v750
  %v883 = vunpack.c.l.b16 %v751
  %v884 = vunpack.c.l.b16 %v752
  %v885 = vunpack.c.l.b16 %v753
  %v886 = vunpack.c.l.b16 %v754
  %v887 = vunpack.c.l.b16 %v755
  %v888 = vunpack.c.l.b16 %v756
  %v889 = vunpack.c.l.b16 %v757
  %v890 = vunpack.c.l.b16 %v758
  %v891 = vunpack.c.l.b16 %v759
  %v892 = vunpack.c.l.b16 %v760
  %v893 = vunpack.c.l.b16 %v761
  %v894 = vunpack.c.l.b16 %v762
  %v895 = vunpack.c.l.b16 %v763
  %v896 = vunpack.c.l.b16 %v764
  %v897 = vunpack.c.l.b16 %v765
  %v898 = vunpack.c.l.b16 %v766
  %v899 = vunpack.c.l.b16 %v767
  %v900 = vunpack.c.l.b16 %v768
  %v901 = vunpack.c.l.b16 %v769
  %v902 = vunpack.c.l.b16 %v770
  %v903 = vunpack.c.l.b16 %v771
  %v904 = vunpack.c.l.b16 %v772
  %v905 = vunpack.c.l.b16 %v773
  %v906 = vunpack.c.l.b16 %v774
  %v907 = vunpack.c.l.b16 %v775
  %v908 = vunpack.c.l.b16 %v776
  %v909 = vunpack.c.l.b16 %v777
  %v910 = vpack.c.b16 %v847, %v846
  %v911 = vpack.c.b16 %v849, %v848
  %v912 = vpack.c.b16 %v851, %v850
  %v913 = vpack.c.b16 %v853, %v852
  %v914 = vpack.c.b16 %v855, %v854
  %v915 = vpack.c.b16 %v857, %v856
  %v916 = vpack.c.b16 %v859, %v858
  %v917 = vpack.c.b16 %v861, %v860
  %v918 = vpack.c.b16 %v863, %v862
  %v919 = vpack.c.b16 %v865, %v864
  %v920 = vpack.c.b16 %v867, %v866
  %v921 = vpack.c.b16 %v869, %v868
  %v922 = vpack.c.b16 %v871, %v870
  %v923 = vpack.c.b16 %v873, %v872
  %v924 = vpack.c.b16 %v875, %v874
  %v925 = vpack.c.b16 %v877, %v876
  %v926 = vpack.c.b16 %v879, %v878
  %v927 = vpack.c.b16 %v881, %v880
  %v928 = vpack.c.b16 %v883, %v882
  %v929 = vpack.c.b16 %v885, %v884
  %v930 = vpack.c.b16 %v887, %v886
  %v931 = vpack.c.b16 %v889, %v888
  %v932 = vpack.c.b16 %v891, %v890
  %v933 = vpack.c.b16 %v893, %v892
  %v934 = vpack.c.b16 %v895, %v894
  %v935 = vpack.c.b16 %v897, %v896
  %v936 = vpack.c.b16 %v899, %v898
  %v937 = vpack.c.b16 %v901, %v900
  %v938 = vpack.c.b16 %v903, %v902
  %v939 = vpack.c.b16 %v905, %v904
  %v940 = vpack.c.b16 %v907, %v906
  %v941 = vpack.c.b16 %v909, %v908
  %974 = vmatpush.bf16.msra.mxu0 %v917
  %975 = vmatpush.bf16.msra.mxu0 %v916
  %976 = vmatpush.bf16.msra.mxu0 %v915
  %977 = vmatpush.bf16.msra.mxu0 %v914
  %978 = vmatpush.bf16.msra.mxu0 %v913
  %979 = vmatpush.bf16.msra.mxu0 %v912
  %980 = vmatpush.bf16.msra.mxu0 %v911
  %981 = vmatpush.bf16.msra.mxu0 %v910
  %982 = vmatmul.bf16.gmra.mxu0 %v710
  %v983 = vpop.f32.mrf.mxu0
  %v984 = vadd.f32 %v780, %v983
  %v985 = vpop.f32.mrf.mxu0
  %986 = vdwg.mxu0
  %987 = vmatpush.bf16.msra.mxu0 %v925
  %988 = vmatpush.bf16.msra.mxu0 %v924
  %989 = vmatpush.bf16.msra.mxu0 %v923
  %990 = vmatpush.bf16.msra.mxu0 %v922
  %991 = vmatpush.bf16.msra.mxu0 %v921
  %992 = vmatpush.bf16.msra.mxu0 %v920
  %993 = vmatpush.bf16.msra.mxu0 %v919
  %994 = vmatpush.bf16.msra.mxu0 %v918
  %995 = vmatmul.bf16.gmra.mxu0 %v711
  %v996 = vpop.f32.mrf.mxu0
  %v997 = vadd.f32 %v984, %v996
  %v998 = vpop.f32.mrf.mxu0
  %999 = vdwg.mxu0
  %1000 = vmatpush.bf16.msra.mxu0 %v933
  %1001 = vmatpush.bf16.msra.mxu0 %v932
  %1002 = vmatpush.bf16.msra.mxu0 %v931
  %1003 = vmatpush.bf16.msra.mxu0 %v930
  %1004 = vmatpush.bf16.msra.mxu0 %v929
  %1005 = vmatpush.bf16.msra.mxu0 %v928
  %1006 = vmatpush.bf16.msra.mxu0 %v927
  %1007 = vmatpush.bf16.msra.mxu0 %v926
  %1008 = vmatmul.bf16.gmra.mxu0 %v712
  %v1009 = vpop.f32.mrf.mxu0
  %v1010 = vadd.f32 %v997, %v1009
  %v1011 = vpop.f32.mrf.mxu0
  %1012 = vdwg.mxu0
  %1013 = vmatpush.bf16.msra.mxu0 %v941
  %1014 = vmatpush.bf16.msra.mxu0 %v940
  %1015 = vmatpush.bf16.msra.mxu0 %v939
  %1016 = vmatpush.bf16.msra.mxu0 %v938
  %1017 = vmatpush.bf16.msra.mxu0 %v937
  %1018 = vmatpush.bf16.msra.mxu0 %v936
  %1019 = vmatpush.bf16.msra.mxu0 %v935
  %1020 = vmatpush.bf16.msra.mxu0 %v934
  %1021 = vmatmul.bf16.gmra.mxu0 %v713
  %v1022 = vpop.f32.mrf.mxu0
  %v1023 = vadd.f32 %v1010, %v1022
  %v1024 = vpop.f32.mrf.mxu0
  %1025 = vdwg.mxu0
  %v1026 = vmax.f32 %v1023, 0.0
  %v1027 = vpack.c.bf16 %v449, %v449
  %v1028 = vld [vmem:[%s8] sm:$0xff]
  %v1029 = vld [vmem:[%s8 + $0x8] sm:$0xff]
  %v1030 = vld [vmem:[%s8 + $0x10] sm:$0xff]
  %v1031 = vld [vmem:[%s8 + $0x18] sm:$0xff]
  %v1032 = vld [vmem:[%s8 + $0x20] sm:$0xff]
  %v1033 = vld [vmem:[%s8 + $0x28] sm:$0xff]
  %v1034 = vld [vmem:[%s8 + $0x30] sm:$0xff]
  %v1035 = vld [vmem:[%s8 + $0x38] sm:$0xff]
  %v1036 = vld [vmem:[%s8 + $0x40] sm:$0xff]
  %v1037 = vld [vmem:[%s8 + $0x48] sm:$0xff]
  %v1038 = vld [vmem:[%s8 + $0x50] sm:$0xff]
  %v1039 = vld [vmem:[%s8 + $0x58] sm:$0xff]
  %v1040 = vld [vmem:[%s8 + $0x60] sm:$0xff]
  %v1041 = vld [vmem:[%s8 + $0x68] sm:$0xff]
  %v1042 = vld [vmem:[%s8 + $0x70] sm:$0xff]
  %v1043 = vld [vmem:[%s8 + $0x78] sm:$0xff]
  %v1044 = vld [vmem:[%s8 + $0x80] sm:$0xff]
  %v1045 = vld [vmem:[%s8 + $0x88] sm:$0xff]
  %v1046 = vld [vmem:[%s8 + $0x90] sm:$0xff]
  %v1047 = vld [vmem:[%s8 + $0x98] sm:$0xff]
  %v1048 = vld [vmem:[%s8 + $0xa0] sm:$0xff]
  %v1049 = vld [vmem:[%s8 + $0xa8] sm:$0xff]
  %v1050 = vld [vmem:[%s8 + $0xb0] sm:$0xff]
  %v1051 = vld [vmem:[%s8 + $0xb8] sm:$0xff]
  %v1052 = vld [vmem:[%s8 + $0xc0] sm:$0xff]
  %v1053 = vld [vmem:[%s8 + $0xc8] sm:$0xff]
  %v1054 = vld [vmem:[%s8 + $0xd0] sm:$0xff]
  %v1055 = vld [vmem:[%s8 + $0xd8] sm:$0xff]
  %v1056 = vld [vmem:[%s8 + $0xe0] sm:$0xff]
  %v1057 = vld [vmem:[%s8 + $0xe8] sm:$0xff]
  %v1058 = vld [vmem:[%s8 + $0xf0] sm:$0xff]
  %v1059 = vld [vmem:[%s8 + $0xf8] sm:$0xff]
  %v1060 = vpack.c.bf16 %v1026, %v1026
  %v1061 = vld [vmem:[%s9] sm:$0xff]
  %v1062 = vld [vmem:[%s9 + $0x8] sm:$0xff]
  %v1063 = vld [vmem:[%s9 + $0x10] sm:$0xff]
  %v1064 = vld [vmem:[%s9 + $0x18] sm:$0xff]
  %v1065 = vld [vmem:[%s9 + $0x20] sm:$0xff]
  %v1066 = vld [vmem:[%s9 + $0x28] sm:$0xff]
  %v1067 = vld [vmem:[%s9 + $0x30] sm:$0xff]
  %v1068 = vld [vmem:[%s9 + $0x38] sm:$0xff]
  %v1069 = vld [vmem:[%s9 + $0x40] sm:$0xff]
  %v1070 = vld [vmem:[%s9 + $0x48] sm:$0xff]
  %v1071 = vld [vmem:[%s9 + $0x50] sm:$0xff]
  %v1072 = vld [vmem:[%s9 + $0x58] sm:$0xff]
  %v1073 = vld [vmem:[%s9 + $0x60] sm:$0xff]
  %v1074 = vld [vmem:[%s9 + $0x68] sm:$0xff]
  %v1075 = vld [vmem:[%s9 + $0x70] sm:$0xff]
  %v1076 = vld [vmem:[%s9 + $0x78] sm:$0xff]
  %v1077 = vld [vmem:[%s9 + $0x80] sm:$0xff]
  %v1078 = vld [vmem:[%s9 + $0x88] sm:$0xff]
  %v1079 = vld [vmem:[%s9 + $0x90] sm:$0xff]
  %v1080 = vld [vmem:[%s9 + $0x98] sm:$0xff]
  %v1081 = vld [vmem:[%s9 + $0xa0] sm:$0xff]
  %v1082 = vld [vmem:[%s9 + $0xa8] sm:$0xff]
  %v1083 = vld [vmem:[%s9 + $0xb0] sm:$0xff]
  %v1084 = vld [vmem:[%s9 + $0xb8] sm:$0xff]
  %v1085 = vld [vmem:[%s9 + $0xc0] sm:$0xff]
  %v1086 = vld [vmem:[%s9 + $0xc8] sm:$0xff]
  %v1087 = vld [vmem:[%s9 + $0xd0] sm:$0xff]
  %v1088 = vld [vmem:[%s9 + $0xd8] sm:$0xff]
  %v1089 = vld [vmem:[%s9 + $0xe0] sm:$0xff]
  %v1090 = vld [vmem:[%s9 + $0xe8] sm:$0xff]
  %v1091 = vld [vmem:[%s9 + $0xf0] sm:$0xff]
  %v1092 = vld [vmem:[%s9 + $0xf8] sm:$0xff]
  %v1125 = vunpack.c.l.b16 %v1061
  %v1126 = vunpack.c.h.b16 %v1061
  %v1127 = vunpack.c.l.b16 %v1062
  %v1128 = vunpack.c.h.b16 %v1062
  %v1129 = vunpack.c.l.b16 %v1063
  %v1130 = vunpack.c.h.b16 %v1063
  %v1131 = vunpack.c.l.b16 %v1064
  %v1132 = vunpack.c.h.b16 %v1064
  %v1133 = vunpack.c.l.b16 %v1065
  %v1134 = vunpack.c.h.b16 %v1065
  %v1135 = vunpack.c.l.b16 %v1066
  %v1136 = vunpack.c.h.b16 %v1066
  %v1137 = vunpack.c.l.b16 %v1067
  %v1138 = vunpack.c.h.b16 %v1067
  %v1139 = vunpack.c.l.b16 %v1068
  %v1140 = vunpack.c.h.b16 %v1068
  %v1141 = vunpack.c.l.b16 %v1069
  %v1142 = vunpack.c.h.b16 %v1069
  %v1143 = vunpack.c.l.b16 %v1070
  %v1144 = vunpack.c.h.b16 %v1070
  %v1145 = vunpack.c.l.b16 %v1071
  %v1146 = vunpack.c.h.b16 %v1071
  %v1147 = vunpack.c.l.b16 %v1072
  %v1148 = vunpack.c.h.b16 %v1072
  %v1149 = vunpack.c.l.b16 %v1073
  %v1150 = vunpack.c.h.b16 %v1073
  %v1151 = vunpack.c.l.b16 %v1074
  %v1152 = vunpack.c.h.b16 %v1074
  %v1153 = vunpack.c.l.b16 %v1075
  %v1154 = vunpack.c.h.b16 %v1075
  %v1155 = vunpack.c.l.b16 %v1076
  %v1156 = vunpack.c.h.b16 %v1076
  %v1157 = vunpack.c.l.b16 %v1077
  %v1158 = vunpack.c.h.b16 %v1077
  %v1159 = vunpack.c.l.b16 %v1078
  %v1160 = vunpack.c.h.b16 %v1078
  %v1161 = vunpack.c.l.b16 %v1079
  %v1162 = vunpack.c.h.b16 %v1079
  %v1163 = vunpack.c.l.b16 %v1080
  %v1164 = vunpack.c.h.b16 %v1080
  %v1165 = vunpack.c.l.b16 %v1081
  %v1166 = vunpack.c.h.b16 %v1081
  %v1167 = vunpack.c.l.b16 %v1082
  %v1168 = vunpack.c.h.b16 %v1082
  %v1169 = vunpack.c.l.b16 %v1083
  %v1170 = vunpack.c.h.b16 %v1083
  %v1171 = vunpack.c.l.b16 %v1084
  %v1172 = vunpack.c.h.b16 %v1084
  %v1173 = vunpack.c.l.b16 %v1085
  %v1174 = vunpack.c.h.b16 %v1085
  %v1175 = vunpack.c.l.b16 %v1086
  %v1176 = vunpack.c.h.b16 %v1086
  %v1177 = vunpack.c.l.b16 %v1087
  %v1178 = vunpack.c.h.b16 %v1087
  %v1179 = vunpack.c.l.b16 %v1088
  %v1180 = vunpack.c.h.b16 %v1088
  %v1181 = vunpack.c.l.b16 %v1089
  %v1182 = vunpack.c.h.b16 %v1089
  %v1183 = vunpack.c.l.b16 %v1090
  %v1184 = vunpack.c.h.b16 %v1090
  %v1185 = vunpack.c.l.b16 %v1091
  %v1186 = vunpack.c.h.b16 %v1091
  %v1187 = vunpack.c.l.b16 %v1092
  %v1188 = vunpack.c.h.b16 %v1092
  %v1189 = vpack.c.b16 %v1129, %v1125
  %v1190 = vpack.c.b16 %v1130, %v1126
  %v1191 = vpack.c.b16 %v1131, %v1127
  %v1192 = vpack.c.b16 %v1132, %v1128
  %v1193 = vpack.c.b16 %v1137, %v1133
  %v1194 = vpack.c.b16 %v1138, %v1134
  %v1195 = vpack.c.b16 %v1139, %v1135
  %v1196 = vpack.c.b16 %v1140, %v1136
  %v1197 = vpack.c.b16 %v1145, %v1141
  %v1198 = vpack.c.b16 %v1146, %v1142
  %v1199 = vpack.c.b16 %v1147, %v1143
  %v1200 = vpack.c.b16 %v1148, %v1144
  %v1201 = vpack.c.b16 %v1153, %v1149
  %v1202 = vpack.c.b16 %v1154, %v1150
  %v1203 = vpack.c.b16 %v1155, %v1151
  %v1204 = vpack.c.b16 %v1156, %v1152
  %v1205 = vpack.c.b16 %v1161, %v1157
  %v1206 = vpack.c.b16 %v1162, %v1158
  %v1207 = vpack.c.b16 %v1163, %v1159
  %v1208 = vpack.c.b16 %v1164, %v1160
  %v1209 = vpack.c.b16 %v1169, %v1165
  %v1210 = vpack.c.b16 %v1170, %v1166
  %v1211 = vpack.c.b16 %v1171, %v1167
  %v1212 = vpack.c.b16 %v1172, %v1168
  %v1213 = vpack.c.b16 %v1177, %v1173
  %v1214 = vpack.c.b16 %v1178, %v1174
  %v1215 = vpack.c.b16 %v1179, %v1175
  %v1216 = vpack.c.b16 %v1180, %v1176
  %v1217 = vpack.c.b16 %v1185, %v1181
  %v1218 = vpack.c.b16 %v1186, %v1182
  %v1219 = vpack.c.b16 %v1187, %v1183
  %v1220 = vpack.c.b16 %v1188, %v1184
  %1253 = vmatpush.bf16.msra.mxu0 %v1217
  %1254 = vmatpush.bf16.msra.mxu0 %v1213
  %1255 = vmatpush.bf16.msra.mxu0 %v1209
  %1256 = vmatpush.bf16.msra.mxu0 %v1205
  %1257 = vmatpush.bf16.msra.mxu0 %v1201
  %1258 = vmatpush.bf16.msra.mxu0 %v1197
  %1259 = vmatpush.bf16.msra.mxu0 %v1193
  %1260 = vmatpush.bf16.msra.mxu0 %v1189
  %1261 = vmatmul.bf16.gmra.mxu0 %v1060
  %v1262 = vpop.f32.mrf.mxu0
  %v1263 = vadd.f32 0.0, %v1262
  %v1264 = vpop.f32.mrf.mxu0
  %1265 = vdwg.mxu0
  %1266 = vmatpush.bf16.msra.mxu0 %v1218
  %1267 = vmatpush.bf16.msra.mxu0 %v1214
  %1268 = vmatpush.bf16.msra.mxu0 %v1210
  %1269 = vmatpush.bf16.msra.mxu0 %v1206
  %1270 = vmatpush.bf16.msra.mxu0 %v1202
  %1271 = vmatpush.bf16.msra.mxu0 %v1198
  %1272 = vmatpush.bf16.msra.mxu0 %v1194
  %1273 = vmatpush.bf16.msra.mxu0 %v1190
  %1274 = vmatmul.bf16.gmra.mxu0 %v1060
  %v1275 = vpop.f32.mrf.mxu0
  %v1276 = vadd.f32 0.0, %v1275
  %v1277 = vpop.f32.mrf.mxu0
  %1278 = vdwg.mxu0
  %1279 = vmatpush.bf16.msra.mxu0 %v1219
  %1280 = vmatpush.bf16.msra.mxu0 %v1215
  %1281 = vmatpush.bf16.msra.mxu0 %v1211
  %1282 = vmatpush.bf16.msra.mxu0 %v1207
  %1283 = vmatpush.bf16.msra.mxu0 %v1203
  %1284 = vmatpush.bf16.msra.mxu0 %v1199
  %1285 = vmatpush.bf16.msra.mxu0 %v1195
  %1286 = vmatpush.bf16.msra.mxu0 %v1191
  %1287 = vmatmul.bf16.gmra.mxu0 %v1060
  %v1288 = vpop.f32.mrf.mxu0
  %v1289 = vadd.f32 0.0, %v1288
  %v1290 = vpop.f32.mrf.mxu0
  %1291 = vdwg.mxu0
  %1292 = vmatpush.bf16.msra.mxu0 %v1220
  %1293 = vmatpush.bf16.msra.mxu0 %v1216
  %1294 = vmatpush.bf16.msra.mxu0 %v1212
  %1295 = vmatpush.bf16.msra.mxu0 %v1208
  %1296 = vmatpush.bf16.msra.mxu0 %v1204
  %1297 = vmatpush.bf16.msra.mxu0 %v1200
  %1298 = vmatpush.bf16.msra.mxu0 %v1196
  %1299 = vmatpush.bf16.msra.mxu0 %v1192
  %1300 = vmatmul.bf16.gmra.mxu0 %v1060
  %v1301 = vpop.f32.mrf.mxu0
  %v1302 = vadd.f32 0.0, %v1301
  %v1303 = vpop.f32.mrf.mxu0
  %1304 = vdwg.mxu0
  %v1337 = vunpack.c.l.b16 %v1028
  %v1338 = vunpack.c.h.b16 %v1028
  %v1339 = vunpack.c.l.b16 %v1029
  %v1340 = vunpack.c.h.b16 %v1029
  %v1341 = vunpack.c.l.b16 %v1030
  %v1342 = vunpack.c.h.b16 %v1030
  %v1343 = vunpack.c.l.b16 %v1031
  %v1344 = vunpack.c.h.b16 %v1031
  %v1345 = vunpack.c.l.b16 %v1032
  %v1346 = vunpack.c.h.b16 %v1032
  %v1347 = vunpack.c.l.b16 %v1033
  %v1348 = vunpack.c.h.b16 %v1033
  %v1349 = vunpack.c.l.b16 %v1034
  %v1350 = vunpack.c.h.b16 %v1034
  %v1351 = vunpack.c.l.b16 %v1035
  %v1352 = vunpack.c.h.b16 %v1035
  %v1353 = vunpack.c.l.b16 %v1036
  %v1354 = vunpack.c.h.b16 %v1036
  %v1355 = vunpack.c.l.b16 %v1037
  %v1356 = vunpack.c.h.b16 %v1037
  %v1357 = vunpack.c.l.b16 %v1038
  %v1358 = vunpack.c.h.b16 %v1038
  %v1359 = vunpack.c.l.b16 %v1039
  %v1360 = vunpack.c.h.b16 %v1039
  %v1361 = vunpack.c.l.b16 %v1040
  %v1362 = vunpack.c.h.b16 %v1040
  %v1363 = vunpack.c.l.b16 %v1041
  %v1364 = vunpack.c.h.b16 %v1041
  %v1365 = vunpack.c.l.b16 %v1042
  %v1366 = vunpack.c.h.b16 %v1042
  %v1367 = vunpack.c.l.b16 %v1043
  %v1368 = vunpack.c.h.b16 %v1043
  %v1369 = vunpack.c.l.b16 %v1044
  %v1370 = vunpack.c.h.b16 %v1044
  %v1371 = vunpack.c.l.b16 %v1045
  %v1372 = vunpack.c.h.b16 %v1045
  %v1373 = vunpack.c.l.b16 %v1046
  %v1374 = vunpack.c.h.b16 %v1046
  %v1375 = vunpack.c.l.b16 %v1047
  %v1376 = vunpack.c.h.b16 %v1047
  %v1377 = vunpack.c.l.b16 %v1048
  %v1378 = vunpack.c.h.b16 %v1048
  %v1379 = vunpack.c.l.b16 %v1049
  %v1380 = vunpack.c.h.b16 %v1049
  %v1381 = vunpack.c.l.b16 %v1050
  %v1382 = vunpack.c.h.b16 %v1050
  %v1383 = vunpack.c.l.b16 %v1051
  %v1384 = vunpack.c.h.b16 %v1051
  %v1385 = vunpack.c.l.b16 %v1052
  %v1386 = vunpack.c.h.b16 %v1052
  %v1387 = vunpack.c.l.b16 %v1053
  %v1388 = vunpack.c.h.b16 %v1053
  %v1389 = vunpack.c.l.b16 %v1054
  %v1390 = vunpack.c.h.b16 %v1054
  %v1391 = vunpack.c.l.b16 %v1055
  %v1392 = vunpack.c.h.b16 %v1055
  %v1393 = vunpack.c.l.b16 %v1056
  %v1394 = vunpack.c.h.b16 %v1056
  %v1395 = vunpack.c.l.b16 %v1057
  %v1396 = vunpack.c.h.b16 %v1057
  %v1397 = vunpack.c.l.b16 %v1058
  %v1398 = vunpack.c.h.b16 %v1058
  %v1399 = vunpack.c.l.b16 %v1059
  %v1400 = vunpack.c.h.b16 %v1059
  %v1401 = vpack.c.b16 %v1341, %v1337
  %v1402 = vpack.c.b16 %v1342, %v1338
  %v1403 = vpack.c.b16 %v1343, %v1339
  %v1404 = vpack.c.b16 %v1344, %v1340
  %v1405 = vpack.c.b16 %v1349, %v1345
  %v1406 = vpack.c.b16 %v1350, %v1346
  %v1407 = vpack.c.b16 %v1351, %v1347
  %v1408 = vpack.c.b16 %v1352, %v1348
  %v1409 = vpack.c.b16 %v1357, %v1353
  %v1410 = vpack.c.b16 %v1358, %v1354
  %v1411 = vpack.c.b16 %v1359, %v1355
  %v1412 = vpack.c.b16 %v1360, %v1356
  %v1413 = vpack.c.b16 %v1365, %v1361
  %v1414 = vpack.c.b16 %v1366, %v1362
  %v1415 = vpack.c.b16 %v1367, %v1363
  %v1416 = vpack.c.b16 %v1368, %v1364
  %v1417 = vpack.c.b16 %v1373, %v1369
  %v1418 = vpack.c.b16 %v1374, %v1370
  %v1419 = vpack.c.b16 %v1375, %v1371
  %v1420 = vpack.c.b16 %v1376, %v1372
  %v1421 = vpack.c.b16 %v1381, %v1377
  %v1422 = vpack.c.b16 %v1382, %v1378
  %v1423 = vpack.c.b16 %v1383, %v1379
  %v1424 = vpack.c.b16 %v1384, %v1380
  %v1425 = vpack.c.b16 %v1389, %v1385
  %v1426 = vpack.c.b16 %v1390, %v1386
  %v1427 = vpack.c.b16 %v1391, %v1387
  %v1428 = vpack.c.b16 %v1392, %v1388
  %v1429 = vpack.c.b16 %v1397, %v1393
  %v1430 = vpack.c.b16 %v1398, %v1394
  %v1431 = vpack.c.b16 %v1399, %v1395
  %v1432 = vpack.c.b16 %v1400, %v1396
  %1465 = vmatpush.bf16.msra.mxu0 %v1429
  %1466 = vmatpush.bf16.msra.mxu0 %v1425
  %1467 = vmatpush.bf16.msra.mxu0 %v1421
  %1468 = vmatpush.bf16.msra.mxu0 %v1417
  %1469 = vmatpush.bf16.msra.mxu0 %v1413
  %1470 = vmatpush.bf16.msra.mxu0 %v1409
  %1471 = vmatpush.bf16.msra.mxu0 %v1405
  %1472 = vmatpush.bf16.msra.mxu0 %v1401
  %1473 = vmatmul.bf16.gmra.mxu0 %v1027
  %v1474 = vpop.f32.mrf.mxu0
  %v1475 = vadd.f32 %v1263, %v1474
  %v1476 = vpop.f32.mrf.mxu0
  %1477 = vdwg.mxu0
  %1478 = vmatpush.bf16.msra.mxu0 %v1430
  %1479 = vmatpush.bf16.msra.mxu0 %v1426
  %1480 = vmatpush.bf16.msra.mxu0 %v1422
  %1481 = vmatpush.bf16.msra.mxu0 %v1418
  %1482 = vmatpush.bf16.msra.mxu0 %v1414
  %1483 = vmatpush.bf16.msra.mxu0 %v1410
  %1484 = vmatpush.bf16.msra.mxu0 %v1406
  %1485 = vmatpush.bf16.msra.mxu0 %v1402
  %1486 = vmatmul.bf16.gmra.mxu0 %v1027
  %v1487 = vpop.f32.mrf.mxu0
  %v1488 = vadd.f32 %v1276, %v1487
  %v1489 = vpop.f32.mrf.mxu0
  %1490 = vdwg.mxu0
  %1491 = vmatpush.bf16.msra.mxu0 %v1431
  %1492 = vmatpush.bf16.msra.mxu0 %v1427
  %1493 = vmatpush.bf16.msra.mxu0 %v1423
  %1494 = vmatpush.bf16.msra.mxu0 %v1419
  %1495 = vmatpush.bf16.msra.mxu0 %v1415
  %1496 = vmatpush.bf16.msra.mxu0 %v1411
  %1497 = vmatpush.bf16.msra.mxu0 %v1407
  %1498 = vmatpush.bf16.msra.mxu0 %v1403
  %1499 = vmatmul.bf16.gmra.mxu0 %v1027
  %v1500 = vpop.f32.mrf.mxu0
  %v1501 = vadd.f32 %v1289, %v1500
  %v1502 = vpop.f32.mrf.mxu0
  %1503 = vdwg.mxu0
  %1504 = vmatpush.bf16.msra.mxu0 %v1432
  %1505 = vmatpush.bf16.msra.mxu0 %v1428
  %1506 = vmatpush.bf16.msra.mxu0 %v1424
  %1507 = vmatpush.bf16.msra.mxu0 %v1420
  %1508 = vmatpush.bf16.msra.mxu0 %v1416
  %1509 = vmatpush.bf16.msra.mxu0 %v1412
  %1510 = vmatpush.bf16.msra.mxu0 %v1408
  %1511 = vmatpush.bf16.msra.mxu0 %v1404
  %1512 = vmatmul.bf16.gmra.mxu0 %v1027
  %v1513 = vpop.f32.mrf.mxu0
  %v1514 = vadd.f32 %v1302, %v1513
  %v1515 = vpop.f32.mrf.mxu0
  %1516 = vdwg.mxu0
  %v1517 = vld [vmem:[%s10] sm:$0xf]
  %v1519 = vperm.slane %v1517, 0
  %v1520 = vperm.slane %v1517, 1
  %v1521 = vperm.slane %v1517, 2
  %v1522 = vperm.slane %v1517, 3
  %v1527 = vadd.f32 %v1475, %v1519
  %v1528 = vadd.f32 %v1488, %v1520
  %v1529 = vadd.f32 %v1501, %v1521
  %v1530 = vadd.f32 %v1514, %v1522
  %v1531 = vmax.f32 %v1527, 0.0
  %v1532 = vmax.f32 %v1528, 0.0
  %v1533 = vmax.f32 %v1529, 0.0
  %v1534 = vmax.f32 %v1530, 0.0
  %v1535 = vpack.c.bf16 %v1531, %v1531
  %v1536 = vpack.c.bf16 %v1532, %v1532
  %v1537 = vpack.c.bf16 %v1533, %v1533
  %v1538 = vpack.c.bf16 %v1534, %v1534
  %v1539 = vld [vmem:[%s11] sm:$0xff]
  %v1540 = vld [vmem:[%s11 + $0x8] sm:$0xff]
  %v1541 = vld [vmem:[%s11 + $0x10] sm:$0xff]
  %v1542 = vld [vmem:[%s11 + $0x18] sm:$0xff]
  %v1543 = vld [vmem:[%s11 + $0x20] sm:$0xff]
  %v1544 = vld [vmem:[%s11 + $0x28] sm:$0xff]
  %v1545 = vld [vmem:[%s11 + $0x30] sm:$0xff]
  %v1546 = vld [vmem:[%s11 + $0x38] sm:$0xff]
  %v1547 = vld [vmem:[%s11 + $0x40] sm:$0xff]
  %v1548 = vld [vmem:[%s11 + $0x48] sm:$0xff]
  %v1549 = vld [vmem:[%s11 + $0x50] sm:$0xff]
  %v1550 = vld [vmem:[%s11 + $0x58] sm:$0xff]
  %v1551 = vld [vmem:[%s11 + $0x60] sm:$0xff]
  %v1552 = vld [vmem:[%s11 + $0x68] sm:$0xff]
  %v1553 = vld [vmem:[%s11 + $0x70] sm:$0xff]
  %v1554 = vld [vmem:[%s11 + $0x78] sm:$0xff]
  %v1555 = vld [vmem:[%s11 + $0x80] sm:$0xff]
  %v1556 = vld [vmem:[%s11 + $0x88] sm:$0xff]
  %v1557 = vld [vmem:[%s11 + $0x90] sm:$0xff]
  %v1558 = vld [vmem:[%s11 + $0x98] sm:$0xff]
  %v1559 = vld [vmem:[%s11 + $0xa0] sm:$0xff]
  %v1560 = vld [vmem:[%s11 + $0xa8] sm:$0xff]
  %v1561 = vld [vmem:[%s11 + $0xb0] sm:$0xff]
  %v1562 = vld [vmem:[%s11 + $0xb8] sm:$0xff]
  %v1563 = vld [vmem:[%s11 + $0xc0] sm:$0xff]
  %v1564 = vld [vmem:[%s11 + $0xc8] sm:$0xff]
  %v1565 = vld [vmem:[%s11 + $0xd0] sm:$0xff]
  %v1566 = vld [vmem:[%s11 + $0xd8] sm:$0xff]
  %v1567 = vld [vmem:[%s11 + $0xe0] sm:$0xff]
  %v1568 = vld [vmem:[%s11 + $0xe8] sm:$0xff]
  %v1569 = vld [vmem:[%s11 + $0xf0] sm:$0xff]
  %v1570 = vld [vmem:[%s11 + $0xf8] sm:$0xff]
  %v1571 = vld [vmem:[%s11 + $0x100] sm:$0xff]
  %v1572 = vld [vmem:[%s11 + $0x108] sm:$0xff]
  %v1573 = vld [vmem:[%s11 + $0x110] sm:$0xff]
  %v1574 = vld [vmem:[%s11 + $0x118] sm:$0xff]
  %v1575 = vld [vmem:[%s11 + $0x120] sm:$0xff]
  %v1576 = vld [vmem:[%s11 + $0x128] sm:$0xff]
  %v1577 = vld [vmem:[%s11 + $0x130] sm:$0xff]
  %v1578 = vld [vmem:[%s11 + $0x138] sm:$0xff]
  %v1579 = vld [vmem:[%s11 + $0x140] sm:$0xff]
  %v1580 = vld [vmem:[%s11 + $0x148] sm:$0xff]
  %v1581 = vld [vmem:[%s11 + $0x150] sm:$0xff]
  %v1582 = vld [vmem:[%s11 + $0x158] sm:$0xff]
  %v1583 = vld [vmem:[%s11 + $0x160] sm:$0xff]
  %v1584 = vld [vmem:[%s11 + $0x168] sm:$0xff]
  %v1585 = vld [vmem:[%s11 + $0x170] sm:$0xff]
  %v1586 = vld [vmem:[%s11 + $0x178] sm:$0xff]
  %v1587 = vld [vmem:[%s11 + $0x180] sm:$0xff]
  %v1588 = vld [vmem:[%s11 + $0x188] sm:$0xff]
  %v1589 = vld [vmem:[%s11 + $0x190] sm:$0xff]
  %v1590 = vld [vmem:[%s11 + $0x198] sm:$0xff]
  %v1591 = vld [vmem:[%s11 + $0x1a0] sm:$0xff]
  %v1592 = vld [vmem:[%s11 + $0x1a8] sm:$0xff]
  %v1593 = vld [vmem:[%s11 + $0x1b0] sm:$0xff]
  %v1594 = vld [vmem:[%s11 + $0x1b8] sm:$0xff]
  %v1595 = vld [vmem:[%s11 + $0x1c0] sm:$0xff]
  %v1596 = vld [vmem:[%s11 + $0x1c8] sm:$0xff]
  %v1597 = vld [vmem:[%s11 + $0x1d0] sm:$0xff]
  %v1598 = vld [vmem:[%s11 + $0x1d8] sm:$0xff]
  %v1599 = vld [vmem:[%s11 + $0x1e0] sm:$0xff]
  %v1600 = vld [vmem:[%s11 + $0x1e8] sm:$0xff]
  %v1601 = vld [vmem:[%s11 + $0x1f0] sm:$0xff]
  %v1602 = vld [vmem:[%s11 + $0x1f8] sm:$0xff]
  %v1603 = vld [vmem:[%s11 + $0x200] sm:$0xff]
  %v1604 = vld [vmem:[%s11 + $0x208] sm:$0xff]
  %v1605 = vld [vmem:[%s11 + $0x210] sm:$0xff]
  %v1606 = vld [vmem:[%s11 + $0x218] sm:$0xff]
  %v1607 = vld [vmem:[%s11 + $0x220] sm:$0xff]
  %v1608 = vld [vmem:[%s11 + $0x228] sm:$0xff]
  %v1609 = vld [vmem:[%s11 + $0x230] sm:$0xff]
  %v1610 = vld [vmem:[%s11 + $0x238] sm:$0xff]
  %v1611 = vld [vmem:[%s11 + $0x240] sm:$0xff]
  %v1612 = vld [vmem:[%s11 + $0x248] sm:$0xff]
  %v1613 = vld [vmem:[%s11 + $0x250] sm:$0xff]
  %v1614 = vld [vmem:[%s11 + $0x258] sm:$0xff]
  %v1615 = vld [vmem:[%s11 + $0x260] sm:$0xff]
  %v1616 = vld [vmem:[%s11 + $0x268] sm:$0xff]
  %v1617 = vld [vmem:[%s11 + $0x270] sm:$0xff]
  %v1618 = vld [vmem:[%s11 + $0x278] sm:$0xff]
  %v1619 = vld [vmem:[%s11 + $0x280] sm:$0xff]
  %v1620 = vld [vmem:[%s11 + $0x288] sm:$0xff]
  %v1621 = vld [vmem:[%s11 + $0x290] sm:$0xff]
  %v1622 = vld [vmem:[%s11 + $0x298] sm:$0xff]
  %v1623 = vld [vmem:[%s11 + $0x2a0] sm:$0xff]
  %v1624 = vld [vmem:[%s11 + $0x2a8] sm:$0xff]
  %v1625 = vld [vmem:[%s11 + $0x2b0] sm:$0xff]
  %v1626 = vld [vmem:[%s11 + $0x2b8] sm:$0xff]
  %v1627 = vld [vmem:[%s11 + $0x2c0] sm:$0xff]
  %v1628 = vld [vmem:[%s11 + $0x2c8] sm:$0xff]
  %v1629 = vld [vmem:[%s11 + $0x2d0] sm:$0xff]
  %v1630 = vld [vmem:[%s11 + $0x2d8] sm:$0xff]
  %v1631 = vld [vmem:[%s11 + $0x2e0] sm:$0xff]
  %v1632 = vld [vmem:[%s11 + $0x2e8] sm:$0xff]
  %v1633 = vld [vmem:[%s11 + $0x2f0] sm:$0xff]
  %v1634 = vld [vmem:[%s11 + $0x2f8] sm:$0xff]
  %v1635 = vld [vmem:[%s11 + $0x300] sm:$0xff]
  %v1636 = vld [vmem:[%s11 + $0x308] sm:$0xff]
  %v1637 = vld [vmem:[%s11 + $0x310] sm:$0xff]
  %v1638 = vld [vmem:[%s11 + $0x318] sm:$0xff]
  %v1639 = vld [vmem:[%s11 + $0x320] sm:$0xff]
  %v1640 = vld [vmem:[%s11 + $0x328] sm:$0xff]
  %v1641 = vld [vmem:[%s11 + $0x330] sm:$0xff]
  %v1642 = vld [vmem:[%s11 + $0x338] sm:$0xff]
  %v1643 = vld [vmem:[%s11 + $0x340] sm:$0xff]
  %v1644 = vld [vmem:[%s11 + $0x348] sm:$0xff]
  %v1645 = vld [vmem:[%s11 + $0x350] sm:$0xff]
  %v1646 = vld [vmem:[%s11 + $0x358] sm:$0xff]
  %v1647 = vld [vmem:[%s11 + $0x360] sm:$0xff]
  %v1648 = vld [vmem:[%s11 + $0x368] sm:$0xff]
  %v1649 = vld [vmem:[%s11 + $0x370] sm:$0xff]
  %v1650 = vld [vmem:[%s11 + $0x378] sm:$0xff]
  %v1651 = vld [vmem:[%s11 + $0x380] sm:$0xff]
  %v1652 = vld [vmem:[%s11 + $0x388] sm:$0xff]
  %v1653 = vld [vmem:[%s11 + $0x390] sm:$0xff]
  %v1654 = vld [vmem:[%s11 + $0x398] sm:$0xff]
  %v1655 = vld [vmem:[%s11 + $0x3a0] sm:$0xff]
  %v1656 = vld [vmem:[%s11 + $0x3a8] sm:$0xff]
  %v1657 = vld [vmem:[%s11 + $0x3b0] sm:$0xff]
  %v1658 = vld [vmem:[%s11 + $0x3b8] sm:$0xff]
  %v1659 = vld [vmem:[%s11 + $0x3c0] sm:$0xff]
  %v1660 = vld [vmem:[%s11 + $0x3c8] sm:$0xff]
  %v1661 = vld [vmem:[%s11 + $0x3d0] sm:$0xff]
  %v1662 = vld [vmem:[%s11 + $0x3d8] sm:$0xff]
  %v1663 = vld [vmem:[%s11 + $0x3e0] sm:$0xff]
  %v1664 = vld [vmem:[%s11 + $0x3e8] sm:$0xff]
  %v1665 = vld [vmem:[%s11 + $0x3f0] sm:$0xff]
  %v1666 = vld [vmem:[%s11 + $0x3f8] sm:$0xff]
  %v1667 = vld [vmem:[%s12] sm:$0xf]
  %v1669 = vperm.slane %v1667, 0
  %v1670 = vperm.slane %v1667, 1
  %v1671 = vperm.slane %v1667, 2
  %v1672 = vperm.slane %v1667, 3
  %v1805 = vunpack.c.l.b16 %v1539
  %v1806 = vunpack.c.h.b16 %v1539
  %v1807 = vunpack.c.l.b16 %v1540
  %v1808 = vunpack.c.h.b16 %v1540
  %v1809 = vunpack.c.l.b16 %v1541
  %v1810 = vunpack.c.h.b16 %v1541
  %v1811 = vunpack.c.l.b16 %v1542
  %v1812 = vunpack.c.h.b16 %v1542
  %v1813 = vunpack.c.l.b16 %v1543
  %v1814 = vunpack.c.h.b16 %v1543
  %v1815 = vunpack.c.l.b16 %v1544
  %v1816 = vunpack.c.h.b16 %v1544
  %v1817 = vunpack.c.l.b16 %v1545
  %v1818 = vunpack.c.h.b16 %v1545
  %v1819 = vunpack.c.l.b16 %v1546
  %v1820 = vunpack.c.h.b16 %v1546
  %v1821 = vunpack.c.l.b16 %v1547
  %v1822 = vunpack.c.h.b16 %v1547
  %v1823 = vunpack.c.l.b16 %v1548
  %v1824 = vunpack.c.h.b16 %v1548
  %v1825 = vunpack.c.l.b16 %v1549
  %v1826 = vunpack.c.h.b16 %v1549
  %v1827 = vunpack.c.l.b16 %v1550
  %v1828 = vunpack.c.h.b16 %v1550
  %v1829 = vunpack.c.l.b16 %v1551
  %v1830 = vunpack.c.h.b16 %v1551
  %v1831 = vunpack.c.l.b16 %v1552
  %v1832 = vunpack.c.h.b16 %v1552
  %v1833 = vunpack.c.l.b16 %v1553
  %v1834 = vunpack.c.h.b16 %v1553
  %v1835 = vunpack.c.l.b16 %v1554
  %v1836 = vunpack.c.h.b16 %v1554
  %v1837 = vunpack.c.l.b16 %v1555
  %v1838 = vunpack.c.h.b16 %v1555
  %v1839 = vunpack.c.l.b16 %v1556
  %v1840 = vunpack.c.h.b16 %v1556
  %v1841 = vunpack.c.l.b16 %v1557
  %v1842 = vunpack.c.h.b16 %v1557
  %v1843 = vunpack.c.l.b16 %v1558
  %v1844 = vunpack.c.h.b16 %v1558
  %v1845 = vunpack.c.l.b16 %v1559
  %v1846 = vunpack.c.h.b16 %v1559
  %v1847 = vunpack.c.l.b16 %v1560
  %v1848 = vunpack.c.h.b16 %v1560
  %v1849 = vunpack.c.l.b16 %v1561
  %v1850 = vunpack.c.h.b16 %v1561
  %v1851 = vunpack.c.l.b16 %v1562
  %v1852 = vunpack.c.h.b16 %v1562
  %v1853 = vunpack.c.l.b16 %v1563
  %v1854 = vunpack.c.h.b16 %v1563
  %v1855 = vunpack.c.l.b16 %v1564
  %v1856 = vunpack.c.h.b16 %v1564
  %v1857 = vunpack.c.l.b16 %v1565
  %v1858 = vunpack.c.h.b16 %v1565
  %v1859 = vunpack.c.l.b16 %v1566
  %v1860 = vunpack.c.h.b16 %v1566
  %v1861 = vunpack.c.l.b16 %v1567
  %v1862 = vunpack.c.h.b16 %v1567
  %v1863 = vunpack.c.l.b16 %v1568
  %v1864 = vunpack.c.h.b16 %v1568
  %v1865 = vunpack.c.l.b16 %v1569
  %v1866 = vunpack.c.h.b16 %v1569
  %v1867 = vunpack.c.l.b16 %v1570
  %v1868 = vunpack.c.h.b16 %v1570
  %v1869 = vunpack.c.l.b16 %v1571
  %v1870 = vunpack.c.h.b16 %v1571
  %v1871 = vunpack.c.l.b16 %v1572
  %v1872 = vunpack.c.h.b16 %v1572
  %v1873 = vunpack.c.l.b16 %v1573
  %v1874 = vunpack.c.h.b16 %v1573
  %v1875 = vunpack.c.l.b16 %v1574
  %v1876 = vunpack.c.h.b16 %v1574
  %v1877 = vunpack.c.l.b16 %v1575
  %v1878 = vunpack.c.h.b16 %v1575
  %v1879 = vunpack.c.l.b16 %v1576
  %v1880 = vunpack.c.h.b16 %v1576
  %v1881 = vunpack.c.l.b16 %v1577
  %v1882 = vunpack.c.h.b16 %v1577
  %v1883 = vunpack.c.l.b16 %v1578
  %v1884 = vunpack.c.h.b16 %v1578
  %v1885 = vunpack.c.l.b16 %v1579
  %v1886 = vunpack.c.h.b16 %v1579
  %v1887 = vunpack.c.l.b16 %v1580
  %v1888 = vunpack.c.h.b16 %v1580
  %v1889 = vunpack.c.l.b16 %v1581
  %v1890 = vunpack.c.h.b16 %v1581
  %v1891 = vunpack.c.l.b16 %v1582
  %v1892 = vunpack.c.h.b16 %v1582
  %v1893 = vunpack.c.l.b16 %v1583
  %v1894 = vunpack.c.h.b16 %v1583
  %v1895 = vunpack.c.l.b16 %v1584
  %v1896 = vunpack.c.h.b16 %v1584
  %v1897 = vunpack.c.l.b16 %v1585
  %v1898 = vunpack.c.h.b16 %v1585
  %v1899 = vunpack.c.l.b16 %v1586
  %v1900 = vunpack.c.h.b16 %v1586
  %v1901 = vunpack.c.l.b16 %v1587
  %v1902 = vunpack.c.h.b16 %v1587
  %v1903 = vunpack.c.l.b16 %v1588
  %v1904 = vunpack.c.h.b16 %v1588
  %v1905 = vunpack.c.l.b16 %v1589
  %v1906 = vunpack.c.h.b16 %v1589
  %v1907 = vunpack.c.l.b16 %v1590
  %v1908 = vunpack.c.h.b16 %v1590
  %v1909 = vunpack.c.l.b16 %v1591
  %v1910 = vunpack.c.h.b16 %v1591
  %v1911 = vunpack.c.l.b16 %v1592
  %v1912 = vunpack.c.h.b16 %v1592
  %v1913 = vunpack.c.l.b16 %v1593
  %v1914 = vunpack.c.h.b16 %v1593
  %v1915 = vunpack.c.l.b16 %v1594
  %v1916 = vunpack.c.h.b16 %v1594
  %v1917 = vunpack.c.l.b16 %v1595
  %v1918 = vunpack.c.h.b16 %v1595
  %v1919 = vunpack.c.l.b16 %v1596
  %v1920 = vunpack.c.h.b16 %v1596
  %v1921 = vunpack.c.l.b16 %v1597
  %v1922 = vunpack.c.h.b16 %v1597
  %v1923 = vunpack.c.l.b16 %v1598
  %v1924 = vunpack.c.h.b16 %v1598
  %v1925 = vunpack.c.l.b16 %v1599
  %v1926 = vunpack.c.h.b16 %v1599
  %v1927 = vunpack.c.l.b16 %v1600
  %v1928 = vunpack.c.h.b16 %v1600
  %v1929 = vunpack.c.l.b16 %v1601
  %v1930 = vunpack.c.h.b16 %v1601
  %v1931 = vunpack.c.l.b16 %v1602
  %v1932 = vunpack.c.h.b16 %v1602
  %v1933 = vunpack.c.l.b16 %v1603
  %v1934 = vunpack.c.h.b16 %v1603
  %v1935 = vunpack.c.l.b16 %v1604
  %v1936 = vunpack.c.h.b16 %v1604
  %v1937 = vunpack.c.l.b16 %v1605
  %v1938 = vunpack.c.h.b16 %v1605
  %v1939 = vunpack.c.l.b16 %v1606
  %v1940 = vunpack.c.h.b16 %v1606
  %v1941 = vunpack.c.l.b16 %v1607
  %v1942 = vunpack.c.h.b16 %v1607
  %v1943 = vunpack.c.l.b16 %v1608
  %v1944 = vunpack.c.h.b16 %v1608
  %v1945 = vunpack.c.l.b16 %v1609
  %v1946 = vunpack.c.h.b16 %v1609
  %v1947 = vunpack.c.l.b16 %v1610
  %v1948 = vunpack.c.h.b16 %v1610
  %v1949 = vunpack.c.l.b16 %v1611
  %v1950 = vunpack.c.h.b16 %v1611
  %v1951 = vunpack.c.l.b16 %v1612
  %v1952 = vunpack.c.h.b16 %v1612
  %v1953 = vunpack.c.l.b16 %v1613
  %v1954 = vunpack.c.h.b16 %v1613
  %v1955 = vunpack.c.l.b16 %v1614
  %v1956 = vunpack.c.h.b16 %v1614
  %v1957 = vunpack.c.l.b16 %v1615
  %v1958 = vunpack.c.h.b16 %v1615
  %v1959 = vunpack.c.l.b16 %v1616
  %v1960 = vunpack.c.h.b16 %v1616
  %v1961 = vunpack.c.l.b16 %v1617
  %v1962 = vunpack.c.h.b16 %v1617
  %v1963 = vunpack.c.l.b16 %v1618
  %v1964 = vunpack.c.h.b16 %v1618
  %v1965 = vunpack.c.l.b16 %v1619
  %v1966 = vunpack.c.h.b16 %v1619
  %v1967 = vunpack.c.l.b16 %v1620
  %v1968 = vunpack.c.h.b16 %v1620
  %v1969 = vunpack.c.l.b16 %v1621
  %v1970 = vunpack.c.h.b16 %v1621
  %v1971 = vunpack.c.l.b16 %v1622
  %v1972 = vunpack.c.h.b16 %v1622
  %v1973 = vunpack.c.l.b16 %v1623
  %v1974 = vunpack.c.h.b16 %v1623
  %v1975 = vunpack.c.l.b16 %v1624
  %v1976 = vunpack.c.h.b16 %v1624
  %v1977 = vunpack.c.l.b16 %v1625
  %v1978 = vunpack.c.h.b16 %v1625
  %v1979 = vunpack.c.l.b16 %v1626
  %v1980 = vunpack.c.h.b16 %v1626
  %v1981 = vunpack.c.l.b16 %v1627
  %v1982 = vunpack.c.h.b16 %v1627
  %v1983 = vunpack.c.l.b16 %v1628
  %v1984 = vunpack.c.h.b16 %v1628
  %v1985 = vunpack.c.l.b16 %v1629
  %v1986 = vunpack.c.h.b16 %v1629
  %v1987 = vunpack.c.l.b16 %v1630
  %v1988 = vunpack.c.h.b16 %v1630
  %v1989 = vunpack.c.l.b16 %v1631
  %v1990 = vunpack.c.h.b16 %v1631
  %v1991 = vunpack.c.l.b16 %v1632
  %v1992 = vunpack.c.h.b16 %v1632
  %v1993 = vunpack.c.l.b16 %v1633
  %v1994 = vunpack.c.h.b16 %v1633
  %v1995 = vunpack.c.l.b16 %v1634
  %v1996 = vunpack.c.h.b16 %v1634
  %v1997 = vunpack.c.l.b16 %v1635
  %v1998 = vunpack.c.h.b16 %v1635
  %v1999 = vunpack.c.l.b16 %v1636
  %v2000 = vunpack.c.h.b16 %v1636
  %v2001 = vunpack.c.l.b16 %v1637
  %v2002 = vunpack.c.h.b16 %v1637
  %v2003 = vunpack.c.l.b16 %v1638
  %v2004 = vunpack.c.h.b16 %v1638
  %v2005 = vunpack.c.l.b16 %v1639
  %v2006 = vunpack.c.h.b16 %v1639
  %v2007 = vunpack.c.l.b16 %v1640
  %v2008 = vunpack.c.h.b16 %v1640
  %v2009 = vunpack.c.l.b16 %v1641
  %v2010 = vunpack.c.h.b16 %v1641
  %v2011 = vunpack.c.l.b16 %v1642
  %v2012 = vunpack.c.h.b16 %v1642
  %v2013 = vunpack.c.l.b16 %v1643
  %v2014 = vunpack.c.h.b16 %v1643
  %v2015 = vunpack.c.l.b16 %v1644
  %v2016 = vunpack.c.h.b16 %v1644
  %v2017 = vunpack.c.l.b16 %v1645
  %v2018 = vunpack.c.h.b16 %v1645
  %v2019 = vunpack.c.l.b16 %v1646
  %v2020 = vunpack.c.h.b16 %v1646
  %v2021 = vunpack.c.l.b16 %v1647
  %v2022 = vunpack.c.h.b16 %v1647
  %v2023 = vunpack.c.l.b16 %v1648
  %v2024 = vunpack.c.h.b16 %v1648
  %v2025 = vunpack.c.l.b16 %v1649
  %v2026 = vunpack.c.h.b16 %v1649
  %v2027 = vunpack.c.l.b16 %v1650
  %v2028 = vunpack.c.h.b16 %v1650
  %v2029 = vunpack.c.l.b16 %v1651
  %v2030 = vunpack.c.h.b16 %v1651
  %v2031 = vunpack.c.l.b16 %v1652
  %v2032 = vunpack.c.h.b16 %v1652
  %v2033 = vunpack.c.l.b16 %v1653
  %v2034 = vunpack.c.h.b16 %v1653
  %v2035 = vunpack.c.l.b16 %v1654
  %v2036 = vunpack.c.h.b16 %v1654
  %v2037 = vunpack.c.l.b16 %v1655
  %v2038 = vunpack.c.h.b16 %v1655
  %v2039 = vunpack.c.l.b16 %v1656
  %v2040 = vunpack.c.h.b16 %v1656
  %v2041 = vunpack.c.l.b16 %v1657
  %v2042 = vunpack.c.h.b16 %v1657
  %v2043 = vunpack.c.l.b16 %v1658
  %v2044 = vunpack.c.h.b16 %v1658
  %v2045 = vunpack.c.l.b16 %v1659
  %v2046 = vunpack.c.h.b16 %v1659
  %v2047 = vunpack.c.l.b16 %v1660
  %v2048 = vunpack.c.h.b16 %v1660
  %v2049 = vunpack.c.l.b16 %v1661
  %v2050 = vunpack.c.h.b16 %v1661
  %v2051 = vunpack.c.l.b16 %v1662
  %v2052 = vunpack.c.h.b16 %v1662
  %v2053 = vunpack.c.l.b16 %v1663
  %v2054 = vunpack.c.h.b16 %v1663
  %v2055 = vunpack.c.l.b16 %v1664
  %v2056 = vunpack.c.h.b16 %v1664
  %v2057 = vunpack.c.l.b16 %v1665
  %v2058 = vunpack.c.h.b16 %v1665
  %v2059 = vunpack.c.l.b16 %v1666
  %v2060 = vunpack.c.h.b16 %v1666
  %v2061 = vpack.c.b16 %v1809, %v1805
  %v2062 = vpack.c.b16 %v1810, %v1806
  %v2063 = vpack.c.b16 %v1811, %v1807
  %v2064 = vpack.c.b16 %v1812, %v1808
  %v2065 = vpack.c.b16 %v1817, %v1813
  %v2066 = vpack.c.b16 %v1818, %v1814
  %v2067 = vpack.c.b16 %v1819, %v1815
  %v2068 = vpack.c.b16 %v1820, %v1816
  %v2069 = vpack.c.b16 %v1825, %v1821
  %v2070 = vpack.c.b16 %v1826, %v1822
  %v2071 = vpack.c.b16 %v1827, %v1823
  %v2072 = vpack.c.b16 %v1828, %v1824
  %v2073 = vpack.c.b16 %v1833, %v1829
  %v2074 = vpack.c.b16 %v1834, %v1830
  %v2075 = vpack.c.b16 %v1835, %v1831
  %v2076 = vpack.c.b16 %v1836, %v1832
  %v2077 = vpack.c.b16 %v1841, %v1837
  %v2078 = vpack.c.b16 %v1842, %v1838
  %v2079 = vpack.c.b16 %v1843, %v1839
  %v2080 = vpack.c.b16 %v1844, %v1840
  %v2081 = vpack.c.b16 %v1849, %v1845
  %v2082 = vpack.c.b16 %v1850, %v1846
  %v2083 = vpack.c.b16 %v1851, %v1847
  %v2084 = vpack.c.b16 %v1852, %v1848
  %v2085 = vpack.c.b16 %v1857, %v1853
  %v2086 = vpack.c.b16 %v1858, %v1854
  %v2087 = vpack.c.b16 %v1859, %v1855
  %v2088 = vpack.c.b16 %v1860, %v1856
  %v2089 = vpack.c.b16 %v1865, %v1861
  %v2090 = vpack.c.b16 %v1866, %v1862
  %v2091 = vpack.c.b16 %v1867, %v1863
  %v2092 = vpack.c.b16 %v1868, %v1864
  %v2093 = vpack.c.b16 %v1873, %v1869
  %v2094 = vpack.c.b16 %v1874, %v1870
  %v2095 = vpack.c.b16 %v1875, %v1871
  %v2096 = vpack.c.b16 %v1876, %v1872
  %v2097 = vpack.c.b16 %v1881, %v1877
  %v2098 = vpack.c.b16 %v1882, %v1878
  %v2099 = vpack.c.b16 %v1883, %v1879
  %v2100 = vpack.c.b16 %v1884, %v1880
  %v2101 = vpack.c.b16 %v1889, %v1885
  %v2102 = vpack.c.b16 %v1890, %v1886
  %v2103 = vpack.c.b16 %v1891, %v1887
  %v2104 = vpack.c.b16 %v1892, %v1888
  %v2105 = vpack.c.b16 %v1897, %v1893
  %v2106 = vpack.c.b16 %v1898, %v1894
  %v2107 = vpack.c.b16 %v1899, %v1895
  %v2108 = vpack.c.b16 %v1900, %v1896
  %v2109 = vpack.c.b16 %v1905, %v1901
  %v2110 = vpack.c.b16 %v1906, %v1902
  %v2111 = vpack.c.b16 %v1907, %v1903
  %v2112 = vpack.c.b16 %v1908, %v1904
  %v2113 = vpack.c.b16 %v1913, %v1909
  %v2114 = vpack.c.b16 %v1914, %v1910
  %v2115 = vpack.c.b16 %v1915, %v1911
  %v2116 = vpack.c.b16 %v1916, %v1912
  %v2117 = vpack.c.b16 %v1921, %v1917
  %v2118 = vpack.c.b16 %v1922, %v1918
  %v2119 = vpack.c.b16 %v1923, %v1919
  %v2120 = vpack.c.b16 %v1924, %v1920
  %v2121 = vpack.c.b16 %v1929, %v1925
  %v2122 = vpack.c.b16 %v1930, %v1926
  %v2123 = vpack.c.b16 %v1931, %v1927
  %v2124 = vpack.c.b16 %v1932, %v1928
  %v2125 = vpack.c.b16 %v1937, %v1933
  %v2126 = vpack.c.b16 %v1938, %v1934
  %v2127 = vpack.c.b16 %v1939, %v1935
  %v2128 = vpack.c.b16 %v1940, %v1936
  %v2129 = vpack.c.b16 %v1945, %v1941
  %v2130 = vpack.c.b16 %v1946, %v1942
  %v2131 = vpack.c.b16 %v1947, %v1943
  %v2132 = vpack.c.b16 %v1948, %v1944
  %v2133 = vpack.c.b16 %v1953, %v1949
  %v2134 = vpack.c.b16 %v1954, %v1950
  %v2135 = vpack.c.b16 %v1955, %v1951
  %v2136 = vpack.c.b16 %v1956, %v1952
  %v2137 = vpack.c.b16 %v1961, %v1957
  %v2138 = vpack.c.b16 %v1962, %v1958
  %v2139 = vpack.c.b16 %v1963, %v1959
  %v2140 = vpack.c.b16 %v1964, %v1960
  %v2141 = vpack.c.b16 %v1969, %v1965
  %v2142 = vpack.c.b16 %v1970, %v1966
  %v2143 = vpack.c.b16 %v1971, %v1967
  %v2144 = vpack.c.b16 %v1972, %v1968
  %v2145 = vpack.c.b16 %v1977, %v1973
  %v2146 = vpack.c.b16 %v1978, %v1974
  %v2147 = vpack.c.b16 %v1979, %v1975
  %v2148 = vpack.c.b16 %v1980, %v1976
  %v2149 = vpack.c.b16 %v1985, %v1981
  %v2150 = vpack.c.b16 %v1986, %v1982
  %v2151 = vpack.c.b16 %v1987, %v1983
  %v2152 = vpack.c.b16 %v1988, %v1984
  %v2153 = vpack.c.b16 %v1993, %v1989
  %v2154 = vpack.c.b16 %v1994, %v1990
  %v2155 = vpack.c.b16 %v1995, %v1991
  %v2156 = vpack.c.b16 %v1996, %v1992
  %v2157 = vpack.c.b16 %v2001, %v1997
  %v2158 = vpack.c.b16 %v2002, %v1998
  %v2159 = vpack.c.b16 %v2003, %v1999
  %v2160 = vpack.c.b16 %v2004, %v2000
  %v2161 = vpack.c.b16 %v2009, %v2005
  %v2162 = vpack.c.b16 %v2010, %v2006
  %v2163 = vpack.c.b16 %v2011, %v2007
  %v2164 = vpack.c.b16 %v2012, %v2008
  %v2165 = vpack.c.b16 %v2017, %v2013
  %v2166 = vpack.c.b16 %v2018, %v2014
  %v2167 = vpack.c.b16 %v2019, %v2015
  %v2168 = vpack.c.b16 %v2020, %v2016
  %v2169 = vpack.c.b16 %v2025, %v2021
  %v2170 = vpack.c.b16 %v2026, %v2022
  %v2171 = vpack.c.b16 %v2027, %v2023
  %v2172 = vpack.c.b16 %v2028, %v2024
  %v2173 = vpack.c.b16 %v2033, %v2029
  %v2174 = vpack.c.b16 %v2034, %v2030
  %v2175 = vpack.c.b16 %v2035, %v2031
  %v2176 = vpack.c.b16 %v2036, %v2032
  %v2177 = vpack.c.b16 %v2041, %v2037
  %v2178 = vpack.c.b16 %v2042, %v2038
  %v2179 = vpack.c.b16 %v2043, %v2039
  %v2180 = vpack.c.b16 %v2044, %v2040
  %v2181 = vpack.c.b16 %v2049, %v2045
  %v2182 = vpack.c.b16 %v2050, %v2046
  %v2183 = vpack.c.b16 %v2051, %v2047
  %v2184 = vpack.c.b16 %v2052, %v2048
  %v2185 = vpack.c.b16 %v2057, %v2053
  %v2186 = vpack.c.b16 %v2058, %v2054
  %v2187 = vpack.c.b16 %v2059, %v2055
  %v2188 = vpack.c.b16 %v2060, %v2056
  %2317 = vmatpush.bf16.msra.mxu0 %v2089
  %2318 = vmatpush.bf16.msra.mxu0 %v2085
  %2319 = vmatpush.bf16.msra.mxu0 %v2081
  %2320 = vmatpush.bf16.msra.mxu0 %v2077
  %2321 = vmatpush.bf16.msra.mxu0 %v2073
  %2322 = vmatpush.bf16.msra.mxu0 %v2069
  %2323 = vmatpush.bf16.msra.mxu0 %v2065
  %2324 = vmatpush.bf16.msra.mxu0 %v2061
  %2325 = vmatmul.bf16.gmra.mxu0 %v1535
  %v2326 = vpop.f32.mrf.mxu0
  %v2327 = vadd.f32 %v1669, %v2326
  %v2328 = vpop.f32.mrf.mxu0
  %2329 = vdwg.mxu0
  %2330 = vmatpush.bf16.msra.mxu0 %v2121
  %2331 = vmatpush.bf16.msra.mxu0 %v2117
  %2332 = vmatpush.bf16.msra.mxu0 %v2113
  %2333 = vmatpush.bf16.msra.mxu0 %v2109
  %2334 = vmatpush.bf16.msra.mxu0 %v2105
  %2335 = vmatpush.bf16.msra.mxu0 %v2101
  %2336 = vmatpush.bf16.msra.mxu0 %v2097
  %2337 = vmatpush.bf16.msra.mxu0 %v2093
  %2338 = vmatmul.bf16.gmra.mxu0 %v1536
  %v2339 = vpop.f32.mrf.mxu0
  %v2340 = vadd.f32 %v2327, %v2339
  %v2341 = vpop.f32.mrf.mxu0
  %2342 = vdwg.mxu0
  %2343 = vmatpush.bf16.msra.mxu0 %v2153
  %2344 = vmatpush.bf16.msra.mxu0 %v2149
  %2345 = vmatpush.bf16.msra.mxu0 %v2145
  %2346 = vmatpush.bf16.msra.mxu0 %v2141
  %2347 = vmatpush.bf16.msra.mxu0 %v2137
  %2348 = vmatpush.bf16.msra.mxu0 %v2133
  %2349 = vmatpush.bf16.msra.mxu0 %v2129
  %2350 = vmatpush.bf16.msra.mxu0 %v2125
  %2351 = vmatmul.bf16.gmra.mxu0 %v1537
  %v2352 = vpop.f32.mrf.mxu0
  %v2353 = vadd.f32 %v2340, %v2352
  %v2354 = vpop.f32.mrf.mxu0
  %2355 = vdwg.mxu0
  %2356 = vmatpush.bf16.msra.mxu0 %v2185
  %2357 = vmatpush.bf16.msra.mxu0 %v2181
  %2358 = vmatpush.bf16.msra.mxu0 %v2177
  %2359 = vmatpush.bf16.msra.mxu0 %v2173
  %2360 = vmatpush.bf16.msra.mxu0 %v2169
  %2361 = vmatpush.bf16.msra.mxu0 %v2165
  %2362 = vmatpush.bf16.msra.mxu0 %v2161
  %2363 = vmatpush.bf16.msra.mxu0 %v2157
  %2364 = vmatmul.bf16.gmra.mxu0 %v1538
  %v2365 = vpop.f32.mrf.mxu0
  %v2366 = vadd.f32 %v2353, %v2365
  %v2367 = vpop.f32.mrf.mxu0
  %2368 = vdwg.mxu0
  %2369 = vmatpush.bf16.msra.mxu0 %v2090
  %2370 = vmatpush.bf16.msra.mxu0 %v2086
  %2371 = vmatpush.bf16.msra.mxu0 %v2082
  %2372 = vmatpush.bf16.msra.mxu0 %v2078
  %2373 = vmatpush.bf16.msra.mxu0 %v2074
  %2374 = vmatpush.bf16.msra.mxu0 %v2070
  %2375 = vmatpush.bf16.msra.mxu0 %v2066
  %2376 = vmatpush.bf16.msra.mxu0 %v2062
  %2377 = vmatmul.bf16.gmra.mxu0 %v1535
  %v2378 = vpop.f32.mrf.mxu0
  %v2379 = vadd.f32 %v1670, %v2378
  %v2380 = vpop.f32.mrf.mxu0
  %2381 = vdwg.mxu0
  %2382 = vmatpush.bf16.msra.mxu0 %v2122
  %2383 = vmatpush.bf16.msra.mxu0 %v2118
  %2384 = vmatpush.bf16.msra.mxu0 %v2114
  %2385 = vmatpush.bf16.msra.mxu0 %v2110
  %2386 = vmatpush.bf16.msra.mxu0 %v2106
  %2387 = vmatpush.bf16.msra.mxu0 %v2102
  %2388 = vmatpush.bf16.msra.mxu0 %v2098
  %2389 = vmatpush.bf16.msra.mxu0 %v2094
  %2390 = vmatmul.bf16.gmra.mxu0 %v1536
  %v2391 = vpop.f32.mrf.mxu0
  %v2392 = vadd.f32 %v2379, %v2391
  %v2393 = vpop.f32.mrf.mxu0
  %2394 = vdwg.mxu0
  %2395 = vmatpush.bf16.msra.mxu0 %v2154
  %2396 = vmatpush.bf16.msra.mxu0 %v2150
  %2397 = vmatpush.bf16.msra.mxu0 %v2146
  %2398 = vmatpush.bf16.msra.mxu0 %v2142
  %2399 = vmatpush.bf16.msra.mxu0 %v2138
  %2400 = vmatpush.bf16.msra.mxu0 %v2134
  %2401 = vmatpush.bf16.msra.mxu0 %v2130
  %2402 = vmatpush.bf16.msra.mxu0 %v2126
  %2403 = vmatmul.bf16.gmra.mxu0 %v1537
  %v2404 = vpop.f32.mrf.mxu0
  %v2405 = vadd.f32 %v2392, %v2404
  %v2406 = vpop.f32.mrf.mxu0
  %2407 = vdwg.mxu0
  %2408 = vmatpush.bf16.msra.mxu0 %v2186
  %2409 = vmatpush.bf16.msra.mxu0 %v2182
  %2410 = vmatpush.bf16.msra.mxu0 %v2178
  %2411 = vmatpush.bf16.msra.mxu0 %v2174
  %2412 = vmatpush.bf16.msra.mxu0 %v2170
  %2413 = vmatpush.bf16.msra.mxu0 %v2166
  %2414 = vmatpush.bf16.msra.mxu0 %v2162
  %2415 = vmatpush.bf16.msra.mxu0 %v2158
  %2416 = vmatmul.bf16.gmra.mxu0 %v1538
  %v2417 = vpop.f32.mrf.mxu0
  %v2418 = vadd.f32 %v2405, %v2417
  %v2419 = vpop.f32.mrf.mxu0
  %2420 = vdwg.mxu0
  %2421 = vmatpush.bf16.msra.mxu0 %v2091
  %2422 = vmatpush.bf16.msra.mxu0 %v2087
  %2423 = vmatpush.bf16.msra.mxu0 %v2083
  %2424 = vmatpush.bf16.msra.mxu0 %v2079
  %2425 = vmatpush.bf16.msra.mxu0 %v2075
  %2426 = vmatpush.bf16.msra.mxu0 %v2071
  %2427 = vmatpush.bf16.msra.mxu0 %v2067
  %2428 = vmatpush.bf16.msra.mxu0 %v2063
  %2429 = vmatmul.bf16.gmra.mxu0 %v1535
  %v2430 = vpop.f32.mrf.mxu0
  %v2431 = vadd.f32 %v1671, %v2430
  %v2432 = vpop.f32.mrf.mxu0
  %2433 = vdwg.mxu0
  %2434 = vmatpush.bf16.msra.mxu0 %v2123
  %2435 = vmatpush.bf16.msra.mxu0 %v2119
  %2436 = vmatpush.bf16.msra.mxu0 %v2115
  %2437 = vmatpush.bf16.msra.mxu0 %v2111
  %2438 = vmatpush.bf16.msra.mxu0 %v2107
  %2439 = vmatpush.bf16.msra.mxu0 %v2103
  %2440 = vmatpush.bf16.msra.mxu0 %v2099
  %2441 = vmatpush.bf16.msra.mxu0 %v2095
  %2442 = vmatmul.bf16.gmra.mxu0 %v1536
  %v2443 = vpop.f32.mrf.mxu0
  %v2444 = vadd.f32 %v2431, %v2443
  %v2445 = vpop.f32.mrf.mxu0
  %2446 = vdwg.mxu0
  %2447 = vmatpush.bf16.msra.mxu0 %v2155
  %2448 = vmatpush.bf16.msra.mxu0 %v2151
  %2449 = vmatpush.bf16.msra.mxu0 %v2147
  %2450 = vmatpush.bf16.msra.mxu0 %v2143
  %2451 = vmatpush.bf16.msra.mxu0 %v2139
  %2452 = vmatpush.bf16.msra.mxu0 %v2135
  %2453 = vmatpush.bf16.msra.mxu0 %v2131
  %2454 = vmatpush.bf16.msra.mxu0 %v2127
  %2455 = vmatmul.bf16.gmra.mxu0 %v1537
  %v2456 = vpop.f32.mrf.mxu0
  %v2457 = vadd.f32 %v2444, %v2456
  %v2458 = vpop.f32.mrf.mxu0
  %2459 = vdwg.mxu0
  %2460 = vmatpush.bf16.msra.mxu0 %v2187
  %2461 = vmatpush.bf16.msra.mxu0 %v2183
  %2462 = vmatpush.bf16.msra.mxu0 %v2179
  %2463 = vmatpush.bf16.msra.mxu0 %v2175
  %2464 = vmatpush.bf16.msra.mxu0 %v2171
  %2465 = vmatpush.bf16.msra.mxu0 %v2167
  %2466 = vmatpush.bf16.msra.mxu0 %v2163
  %2467 = vmatpush.bf16.msra.mxu0 %v2159
  %2468 = vmatmul.bf16.gmra.mxu0 %v1538
  %v2469 = vpop.f32.mrf.mxu0
  %v2470 = vadd.f32 %v2457, %v2469
  %v2471 = vpop.f32.mrf.mxu0
  %2472 = vdwg.mxu0
  %2473 = vmatpush.bf16.msra.mxu0 %v2092
  %2474 = vmatpush.bf16.msra.mxu0 %v2088
  %2475 = vmatpush.bf16.msra.mxu0 %v2084
  %2476 = vmatpush.bf16.msra.mxu0 %v2080
  %2477 = vmatpush.bf16.msra.mxu0 %v2076
  %2478 = vmatpush.bf16.msra.mxu0 %v2072
  %2479 = vmatpush.bf16.msra.mxu0 %v2068
  %2480 = vmatpush.bf16.msra.mxu0 %v2064
  %2481 = vmatmul.bf16.gmra.mxu0 %v1535
  %v2482 = vpop.f32.mrf.mxu0
  %v2483 = vadd.f32 %v1672, %v2482
  %v2484 = vpop.f32.mrf.mxu0
  %2485 = vdwg.mxu0
  %2486 = vmatpush.bf16.msra.mxu0 %v2124
  %2487 = vmatpush.bf16.msra.mxu0 %v2120
  %2488 = vmatpush.bf16.msra.mxu0 %v2116
  %2489 = vmatpush.bf16.msra.mxu0 %v2112
  %2490 = vmatpush.bf16.msra.mxu0 %v2108
  %2491 = vmatpush.bf16.msra.mxu0 %v2104
  %2492 = vmatpush.bf16.msra.mxu0 %v2100
  %2493 = vmatpush.bf16.msra.mxu0 %v2096
  %2494 = vmatmul.bf16.gmra.mxu0 %v1536
  %v2495 = vpop.f32.mrf.mxu0
  %v2496 = vadd.f32 %v2483, %v2495
  %v2497 = vpop.f32.mrf.mxu0
  %2498 = vdwg.mxu0
  %2499 = vmatpush.bf16.msra.mxu0 %v2156
  %2500 = vmatpush.bf16.msra.mxu0 %v2152
  %2501 = vmatpush.bf16.msra.mxu0 %v2148
  %2502 = vmatpush.bf16.msra.mxu0 %v2144
  %2503 = vmatpush.bf16.msra.mxu0 %v2140
  %2504 = vmatpush.bf16.msra.mxu0 %v2136
  %2505 = vmatpush.bf16.msra.mxu0 %v2132
  %2506 = vmatpush.bf16.msra.mxu0 %v2128
  %2507 = vmatmul.bf16.gmra.mxu0 %v1537
  %v2508 = vpop.f32.mrf.mxu0
  %v2509 = vadd.f32 %v2496, %v2508
  %v2510 = vpop.f32.mrf.mxu0
  %2511 = vdwg.mxu0
  %2512 = vmatpush.bf16.msra.mxu0 %v2188
  %2513 = vmatpush.bf16.msra.mxu0 %v2184
  %2514 = vmatpush.bf16.msra.mxu0 %v2180
  %2515 = vmatpush.bf16.msra.mxu0 %v2176
  %2516 = vmatpush.bf16.msra.mxu0 %v2172
  %2517 = vmatpush.bf16.msra.mxu0 %v2168
  %2518 = vmatpush.bf16.msra.mxu0 %v2164
  %2519 = vmatpush.bf16.msra.mxu0 %v2160
  %2520 = vmatmul.bf16.gmra.mxu0 %v1538
  %v2521 = vpop.f32.mrf.mxu0
  %v2522 = vadd.f32 %v2509, %v2521
  %v2523 = vpop.f32.mrf.mxu0
  %2524 = vdwg.mxu0
  %v2525 = vmax.f32 %v2366, 0.0
  %v2526 = vmax.f32 %v2418, 0.0
  %v2527 = vmax.f32 %v2470, 0.0
  %v2528 = vmax.f32 %v2522, 0.0
  %v2529 = vpack.c.bf16 %v2525, %v2525
  %v2530 = vpack.c.bf16 %v2526, %v2526
  %v2531 = vpack.c.bf16 %v2527, %v2527
  %v2532 = vpack.c.bf16 %v2528, %v2528
  %v2533 = vld [vmem:[%s13] sm:$0xf]
  %v2534 = vld [vmem:[%s13 + $0x4] sm:$0xf]
  %v2535 = vld [vmem:[%s13 + $0x8] sm:$0xf]
  %v2536 = vld [vmem:[%s13 + $0xc] sm:$0xf]
  %v2537 = vld [vmem:[%s13 + $0x10] sm:$0xf]
  %v2538 = vld [vmem:[%s13 + $0x14] sm:$0xf]
  %v2539 = vld [vmem:[%s13 + $0x18] sm:$0xf]
  %v2540 = vld [vmem:[%s13 + $0x1c] sm:$0xf]
  %v2541 = vld [vmem:[%s13 + $0x20] sm:$0xf]
  %v2542 = vld [vmem:[%s13 + $0x24] sm:$0xf]
  %v2543 = vld [vmem:[%s13 + $0x28] sm:$0xf]
  %v2544 = vld [vmem:[%s13 + $0x2c] sm:$0xf]
  %v2545 = vld [vmem:[%s13 + $0x30] sm:$0xf]
  %v2546 = vld [vmem:[%s13 + $0x34] sm:$0xf]
  %v2547 = vld [vmem:[%s13 + $0x38] sm:$0xf]
  %v2548 = vld [vmem:[%s13 + $0x3c] sm:$0xf]
  %v2549 = vld [vmem:[%s13 + $0x40] sm:$0xf]
  %v2550 = vld [vmem:[%s13 + $0x44] sm:$0xf]
  %v2551 = vld [vmem:[%s13 + $0x48] sm:$0xf]
  %v2552 = vld [vmem:[%s13 + $0x4c] sm:$0xf]
  %v2553 = vld [vmem:[%s13 + $0x50] sm:$0xf]
  %v2554 = vld [vmem:[%s13 + $0x54] sm:$0xf]
  %v2555 = vld [vmem:[%s13 + $0x58] sm:$0xf]
  %v2556 = vld [vmem:[%s13 + $0x5c] sm:$0xf]
  %v2557 = vld [vmem:[%s13 + $0x60] sm:$0xf]
  %v2558 = vld [vmem:[%s13 + $0x64] sm:$0xf]
  %v2559 = vld [vmem:[%s13 + $0x68] sm:$0xf]
  %v2560 = vld [vmem:[%s13 + $0x6c] sm:$0xf]
  %v2561 = vld [vmem:[%s13 + $0x70] sm:$0xf]
  %v2562 = vld [vmem:[%s13 + $0x74] sm:$0xf]
  %v2563 = vld [vmem:[%s13 + $0x78] sm:$0xf]
  %v2564 = vld [vmem:[%s13 + $0x7c] sm:$0xf]
  %v2565 = vld [vmem:[%s13 + $0x80] sm:$0xf]
  %v2566 = vld [vmem:[%s13 + $0x84] sm:$0xf]
  %v2567 = vld [vmem:[%s13 + $0x88] sm:$0xf]
  %v2568 = vld [vmem:[%s13 + $0x8c] sm:$0xf]
  %v2569 = vld [vmem:[%s13 + $0x90] sm:$0xf]
  %v2570 = vld [vmem:[%s13 + $0x94] sm:$0xf]
  %v2571 = vld [vmem:[%s13 + $0x98] sm:$0xf]
  %v2572 = vld [vmem:[%s13 + $0x9c] sm:$0xf]
  %v2573 = vld [vmem:[%s13 + $0xa0] sm:$0xf]
  %v2574 = vld [vmem:[%s13 + $0xa4] sm:$0xf]
  %v2575 = vld [vmem:[%s13 + $0xa8] sm:$0xf]
  %v2576 = vld [vmem:[%s13 + $0xac] sm:$0xf]
  %v2577 = vld [vmem:[%s13 + $0xb0] sm:$0xf]
  %v2578 = vld [vmem:[%s13 + $0xb4] sm:$0xf]
  %v2579 = vld [vmem:[%s13 + $0xb8] sm:$0xf]
  %v2580 = vld [vmem:[%s13 + $0xbc] sm:$0xf]
  %v2581 = vld [vmem:[%s13 + $0xc0] sm:$0xf]
  %v2582 = vld [vmem:[%s13 + $0xc4] sm:$0xf]
  %v2583 = vld [vmem:[%s13 + $0xc8] sm:$0xf]
  %v2584 = vld [vmem:[%s13 + $0xcc] sm:$0xf]
  %v2585 = vld [vmem:[%s13 + $0xd0] sm:$0xf]
  %v2586 = vld [vmem:[%s13 + $0xd4] sm:$0xf]
  %v2587 = vld [vmem:[%s13 + $0xd8] sm:$0xf]
  %v2588 = vld [vmem:[%s13 + $0xdc] sm:$0xf]
  %v2589 = vld [vmem:[%s13 + $0xe0] sm:$0xf]
  %v2590 = vld [vmem:[%s13 + $0xe4] sm:$0xf]
  %v2591 = vld [vmem:[%s13 + $0xe8] sm:$0xf]
  %v2592 = vld [vmem:[%s13 + $0xec] sm:$0xf]
  %v2593 = vld [vmem:[%s13 + $0xf0] sm:$0xf]
  %v2594 = vld [vmem:[%s13 + $0xf4] sm:$0xf]
  %v2595 = vld [vmem:[%s13 + $0xf8] sm:$0xf]
  %v2596 = vld [vmem:[%s13 + $0xfc] sm:$0xf]
  %v2597 = vld [vmem:[%s14] sm:$0x1]
  %v2599 = vperm.slane %v2597, 0
  %v2665 = vunpack.c.l.b16 %v2533
  %v2666 = vunpack.c.l.b16 %v2534
  %v2667 = vunpack.c.l.b16 %v2535
  %v2668 = vunpack.c.l.b16 %v2536
  %v2669 = vunpack.c.l.b16 %v2537
  %v2670 = vunpack.c.l.b16 %v2538
  %v2671 = vunpack.c.l.b16 %v2539
  %v2672 = vunpack.c.l.b16 %v2540
  %v2673 = vunpack.c.l.b16 %v2541
  %v2674 = vunpack.c.l.b16 %v2542
  %v2675 = vunpack.c.l.b16 %v2543
  %v2676 = vunpack.c.l.b16 %v2544
  %v2677 = vunpack.c.l.b16 %v2545
  %v2678 = vunpack.c.l.b16 %v2546
  %v2679 = vunpack.c.l.b16 %v2547
  %v2680 = vunpack.c.l.b16 %v2548
  %v2681 = vunpack.c.l.b16 %v2549
  %v2682 = vunpack.c.l.b16 %v2550
  %v2683 = vunpack.c.l.b16 %v2551
  %v2684 = vunpack.c.l.b16 %v2552
  %v2685 = vunpack.c.l.b16 %v2553
  %v2686 = vunpack.c.l.b16 %v2554
  %v2687 = vunpack.c.l.b16 %v2555
  %v2688 = vunpack.c.l.b16 %v2556
  %v2689 = vunpack.c.l.b16 %v2557
  %v2690 = vunpack.c.l.b16 %v2558
  %v2691 = vunpack.c.l.b16 %v2559
  %v2692 = vunpack.c.l.b16 %v2560
  %v2693 = vunpack.c.l.b16 %v2561
  %v2694 = vunpack.c.l.b16 %v2562
  %v2695 = vunpack.c.l.b16 %v2563
  %v2696 = vunpack.c.l.b16 %v2564
  %v2697 = vunpack.c.l.b16 %v2565
  %v2698 = vunpack.c.l.b16 %v2566
  %v2699 = vunpack.c.l.b16 %v2567
  %v2700 = vunpack.c.l.b16 %v2568
  %v2701 = vunpack.c.l.b16 %v2569
  %v2702 = vunpack.c.l.b16 %v2570
  %v2703 = vunpack.c.l.b16 %v2571
  %v2704 = vunpack.c.l.b16 %v2572
  %v2705 = vunpack.c.l.b16 %v2573
  %v2706 = vunpack.c.l.b16 %v2574
  %v2707 = vunpack.c.l.b16 %v2575
  %v2708 = vunpack.c.l.b16 %v2576
  %v2709 = vunpack.c.l.b16 %v2577
  %v2710 = vunpack.c.l.b16 %v2578
  %v2711 = vunpack.c.l.b16 %v2579
  %v2712 = vunpack.c.l.b16 %v2580
  %v2713 = vunpack.c.l.b16 %v2581
  %v2714 = vunpack.c.l.b16 %v2582
  %v2715 = vunpack.c.l.b16 %v2583
  %v2716 = vunpack.c.l.b16 %v2584
  %v2717 = vunpack.c.l.b16 %v2585
  %v2718 = vunpack.c.l.b16 %v2586
  %v2719 = vunpack.c.l.b16 %v2587
  %v2720 = vunpack.c.l.b16 %v2588
  %v2721 = vunpack.c.l.b16 %v2589
  %v2722 = vunpack.c.l.b16 %v2590
  %v2723 = vunpack.c.l.b16 %v2591
  %v2724 = vunpack.c.l.b16 %v2592
  %v2725 = vunpack.c.l.b16 %v2593
  %v2726 = vunpack.c.l.b16 %v2594
  %v2727 = vunpack.c.l.b16 %v2595
  %v2728 = vunpack.c.l.b16 %v2596
  %v2729 = vpack.c.b16 %v2666, %v2665
  %v2730 = vpack.c.b16 %v2668, %v2667
  %v2731 = vpack.c.b16 %v2670, %v2669
  %v2732 = vpack.c.b16 %v2672, %v2671
  %v2733 = vpack.c.b16 %v2674, %v2673
  %v2734 = vpack.c.b16 %v2676, %v2675
  %v2735 = vpack.c.b16 %v2678, %v2677
  %v2736 = vpack.c.b16 %v2680, %v2679
  %v2737 = vpack.c.b16 %v2682, %v2681
  %v2738 = vpack.c.b16 %v2684, %v2683
  %v2739 = vpack.c.b16 %v2686, %v2685
  %v2740 = vpack.c.b16 %v2688, %v2687
  %v2741 = vpack.c.b16 %v2690, %v2689
  %v2742 = vpack.c.b16 %v2692, %v2691
  %v2743 = vpack.c.b16 %v2694, %v2693
  %v2744 = vpack.c.b16 %v2696, %v2695
  %v2745 = vpack.c.b16 %v2698, %v2697
  %v2746 = vpack.c.b16 %v2700, %v2699
  %v2747 = vpack.c.b16 %v2702, %v2701
  %v2748 = vpack.c.b16 %v2704, %v2703
  %v2749 = vpack.c.b16 %v2706, %v2705
  %v2750 = vpack.c.b16 %v2708, %v2707
  %v2751 = vpack.c.b16 %v2710, %v2709
  %v2752 = vpack.c.b16 %v2712, %v2711
  %v2753 = vpack.c.b16 %v2714, %v2713
  %v2754 = vpack.c.b16 %v2716, %v2715
  %v2755 = vpack.c.b16 %v2718, %v2717
  %v2756 = vpack.c.b16 %v2720, %v2719
  %v2757 = vpack.c.b16 %v2722, %v2721
  %v2758 = vpack.c.b16 %v2724, %v2723
  %v2759 = vpack.c.b16 %v2726, %v2725
  %v2760 = vpack.c.b16 %v2728, %v2727
  %2793 = vmatpush.bf16.msra.mxu0 %v2736
  %2794 = vmatpush.bf16.msra.mxu0 %v2735
  %2795 = vmatpush.bf16.msra.mxu0 %v2734
  %2796 = vmatpush.bf16.msra.mxu0 %v2733
  %2797 = vmatpush.bf16.msra.mxu0 %v2732
  %2798 = vmatpush.bf16.msra.mxu0 %v2731
  %2799 = vmatpush.bf16.msra.mxu0 %v2730
  %2800 = vmatpush.bf16.msra.mxu0 %v2729
  %2801 = vmatmul.bf16.gmra.mxu0 %v2529
  %v2802 = vpop.f32.mrf.mxu0
  %v2803 = vadd.f32 %v2599, %v2802
  %v2804 = vpop.f32.mrf.mxu0
  %2805 = vdwg.mxu0
  %2806 = vmatpush.bf16.msra.mxu0 %v2744
  %2807 = vmatpush.bf16.msra.mxu0 %v2743
  %2808 = vmatpush.bf16.msra.mxu0 %v2742
  %2809 = vmatpush.bf16.msra.mxu0 %v2741
  %2810 = vmatpush.bf16.msra.mxu0 %v2740
  %2811 = vmatpush.bf16.msra.mxu0 %v2739
  %2812 = vmatpush.bf16.msra.mxu0 %v2738
  %2813 = vmatpush.bf16.msra.mxu0 %v2737
  %2814 = vmatmul.bf16.gmra.mxu0 %v2530
  %v2815 = vpop.f32.mrf.mxu0
  %v2816 = vadd.f32 %v2803, %v2815
  %v2817 = vpop.f32.mrf.mxu0
  %2818 = vdwg.mxu0
  %2819 = vmatpush.bf16.msra.mxu0 %v2752
  %2820 = vmatpush.bf16.msra.mxu0 %v2751
  %2821 = vmatpush.bf16.msra.mxu0 %v2750
  %2822 = vmatpush.bf16.msra.mxu0 %v2749
  %2823 = vmatpush.bf16.msra.mxu0 %v2748
  %2824 = vmatpush.bf16.msra.mxu0 %v2747
  %2825 = vmatpush.bf16.msra.mxu0 %v2746
  %2826 = vmatpush.bf16.msra.mxu0 %v2745
  %2827 = vmatmul.bf16.gmra.mxu0 %v2531
  %v2828 = vpop.f32.mrf.mxu0
  %v2829 = vadd.f32 %v2816, %v2828
  %v2830 = vpop.f32.mrf.mxu0
  %2831 = vdwg.mxu0
  %2832 = vmatpush.bf16.msra.mxu0 %v2760
  %2833 = vmatpush.bf16.msra.mxu0 %v2759
  %2834 = vmatpush.bf16.msra.mxu0 %v2758
  %2835 = vmatpush.bf16.msra.mxu0 %v2757
  %2836 = vmatpush.bf16.msra.mxu0 %v2756
  %2837 = vmatpush.bf16.msra.mxu0 %v2755
  %2838 = vmatpush.bf16.msra.mxu0 %v2754
  %2839 = vmatpush.bf16.msra.mxu0 %v2753
  %2840 = vmatmul.bf16.gmra.mxu0 %v2532
  %v2841 = vpop.f32.mrf.mxu0
  %v2842 = vadd.f32 %v2829, %v2841
  %v2843 = vpop.f32.mrf.mxu0
  %2844 = vdwg.mxu0
  %2845 = vst [vmem:[%s15] sm:$0xff] %v2842
  // Predicated region
  $region62: #{_lambda_.5} parent=0 // pred_check
    _
  $region63: #{_lambda_.5} parent=0 // pred_check_branch
    %2847 = sbr.rel (0) target = $region65
  $region64: #{_lambda_.5} parent=0 // pred_region
    _
  $region65: #{_lambda_.5} parent=0 // pred_fallthru
    _
  // Predicated region
  $region66: #{_lambda_.5} parent=0 // pred_check
    _
  $region67: #{_lambda_.5} parent=0 // pred_check_branch
    %2849 = sbr.rel (0) target = $region69
  $region68: #{_lambda_.5} parent=0 // pred_region
    _
  $region69: #{_lambda_.5} parent=0 // pred_fallthru
    _

</llo_original>
